<compile_context>
chip_gen: v7x
topology: tpu7x:2x2x1
jax: 0.10.0
libtpu: 0.0.40
codegen_flags: <defaults>
</compile_context>

<pallas_src>
import functools

import jax
import jax.numpy as jnp
from jax.experimental import pallas as pl
from jax.experimental.pallas import tpu as pltpu


LPAD = 8  # left spatial pad inside the depthwise scratch (sublane aligned)


def _rup(x, m=128):
    return ((x + m - 1) // m) * m


def _pad_axis(a, axis, target):
    pad = target - a.shape[axis]
    if pad <= 0:
        return a
    widths = [(0, 0)] * a.ndim
    widths[axis] = (0, pad)
    return jnp.pad(a, widths)


# ---------------------------------------------------------------------------
# Fused inverted-residual block kernel
# ---------------------------------------------------------------------------

def _block_kernel(*refs, H, W, stride, res_mode, has_stem):
    it = iter(refs)
    x_ref = next(it)
    if has_stem:
        wc_ref, sc_ref, bc_ref = next(it), next(it), next(it)
    w1_ref, s1_ref, b1_ref = next(it), next(it), next(it)
    wd_ref, s2_ref, b2_ref = next(it), next(it), next(it)
    w3_ref, s3_ref, b3_ref = next(it), next(it), next(it)
    if res_mode == "conv":
        wsc_ref, ssc_ref, bsc_ref = next(it), next(it), next(it)
    o_ref = next(it)
    pad_ref = next(it)   # (H+2, W+2*LPAD, planes) f32 zero-padded spatial scratch
    dw_ref = next(it)    # (Ho*Wo, planes) f32 depthwise output (2D for the MXU)

    f32 = jnp.float32
    planes = w1_ref.shape[1]
    x_in = x_ref[0]                                    # (H*W, Cin_hbm) bf16

    if has_stem:                                       # fused conv1 + BN + ReLU
        xs = jnp.dot(x_in, wc_ref[...], preferred_element_type=f32)
        xs = jnp.maximum(xs * sc_ref[...] + bc_ref[...], 0.0)
        x_act = xs.astype(jnp.bfloat16)
    else:
        x_act = x_in

    # ---- 1x1 expand + BN + ReLU6 (MXU) ------------------------------------
    h = jnp.dot(x_act, w1_ref[...], preferred_element_type=f32)
    h = jnp.clip(h * s1_ref[...] + b1_ref[...], 0.0, 6.0)   # (H*W, planes) f32

    # ---- scatter rows into the zero-padded spatial scratch ------------------
    pad_ref[...] = jnp.zeros(pad_ref.shape, f32)
    for i in range(H):
        pad_ref[1 + i, LPAD:LPAD + W, :] = h[i * W:(i + 1) * W, :]

    # ---- 3x3 depthwise + BN + ReLU6 (VPU), stride applied directly ----------
    if stride == 1:
        acc = jnp.zeros((H, W, planes), f32)
        for dh in range(3):
            for dw in range(3):
                tap = pad_ref[dh:dh + H, LPAD - 1 + dw:LPAD - 1 + dw + W, :]
                acc = acc + tap * wd_ref[3 * dh + dw:3 * dh + dw + 1, :]
        y = jnp.clip(acc * s2_ref[...] + b2_ref[...], 0.0, 6.0)
        for i in range(H):
            dw_ref[i * W:(i + 1) * W, :] = y[i]
    else:
        Ho, Wo = H // 2, W // 2
        # 0/1 column-subsampling matrix (Wo, W): picks every even column.
        rows = jax.lax.broadcasted_iota(jnp.int32, (Wo, W), 0)
        cols = jax.lax.broadcasted_iota(jnp.int32, (Wo, W), 1)
        sel = (cols == 2 * rows).astype(f32)
        for i in range(Ho):
            acc = jnp.zeros((W, planes), f32)
            for dh in range(3):
                row = pad_ref[2 * i + dh]              # (W + 2*LPAD, planes)
                for dw in range(3):
                    acc = acc + (row[LPAD - 1 + dw:LPAD - 1 + dw + W, :]
                                 * wd_ref[3 * dh + dw:3 * dh + dw + 1, :])
            ysub = jnp.dot(sel, acc, preferred_element_type=f32)   # (Wo, planes)
            ysub = jnp.clip(ysub * s2_ref[...] + b2_ref[...], 0.0, 6.0)
            dw_ref[i * Wo:(i + 1) * Wo, :] = ysub

    # ---- 1x1 project + BN (+ residual / shortcut conv) (MXU) ----------------
    p = jnp.dot(dw_ref[...].astype(jnp.bfloat16), w3_ref[...],
                preferred_element_type=f32)
    out = p * s3_ref[...] + b3_ref[...]
    if res_mode == "identity":
        out = out + x_act.astype(f32)
    elif res_mode == "conv":
        r = jnp.dot(x_act, wsc_ref[...], preferred_element_type=f32)
        out = out + (r * ssc_ref[...] + bsc_ref[...])
    o_ref[0] = out.astype(o_ref.dtype)


def run_block(x, blk, *, H, W, N):
    """x: (N, H*W, Cp_in) bf16 -> (N, Ho*Wo, Cp_out) bf16."""
    stride, planes, cp_out = blk["stride"], blk["planes"], blk["cp_out"]
    Ho, Wo = (H // 2, W // 2) if stride == 2 else (H, W)
    M, Mo = H * W, Ho * Wo
    has_stem = "wc" in blk
    res_mode = blk["res_mode"]

    kernel = functools.partial(_block_kernel, H=H, W=W, stride=stride,
                               res_mode=res_mode, has_stem=has_stem)

    args = [x]
    in_specs = [pl.BlockSpec((1, M, x.shape[2]), lambda n: (n, 0, 0))]

    def add(*names):
        for name in names:
            w = blk[name]
            args.append(w)
            in_specs.append(pl.BlockSpec(w.shape, lambda n, nd=w.ndim: (0,) * nd))

    if has_stem:
        add("wc", "sc", "bc")
    add("w1", "s1", "b1", "wd", "s2", "b2", "w3", "s3", "b3")
    if res_mode == "conv":
        add("wsc", "ssc", "bsc")

    out = pl.pallas_call(
        kernel,
        grid=(N,),
        in_specs=in_specs,
        out_specs=pl.BlockSpec((1, Mo, cp_out), lambda n: (n, 0, 0)),
        out_shape=jax.ShapeDtypeStruct((N, Mo, cp_out), jnp.bfloat16),
        scratch_shapes=[pltpu.VMEM((H + 2, W + 2 * LPAD, planes), jnp.float32),
                        pltpu.VMEM((Mo, planes), jnp.float32)],
        compiler_params=pltpu.CompilerParams(dimension_semantics=("parallel",)),
    )(*args)
    return out, Ho, Wo


# ---------------------------------------------------------------------------
# Fused classifier tail: conv2 + BN + ReLU -> global avg pool -> conv3 + bias
# ---------------------------------------------------------------------------

def _tail_kernel(x_ref, w2_ref, s2_ref, b2_ref, w3_ref, b3_ref, o_ref):
    f32 = jnp.float32
    y = jnp.dot(x_ref[0], w2_ref[...], preferred_element_type=f32)
    y = jnp.maximum(y * s2_ref[...] + b2_ref[...], 0.0)         # (4, 1280)
    pooled = jnp.mean(y, axis=0, keepdims=True)                 # 2x2 avg pool
    logits = jnp.dot(pooled.astype(jnp.bfloat16), w3_ref[...],
                     preferred_element_type=f32) + b3_ref[...]
    o_ref[...] = logits


# ---------------------------------------------------------------------------
# Parameters (synthetic, deterministic) in kernel-ready (folded, padded) form
# ---------------------------------------------------------------------------

CFG = [(1, 16, 1, 1), (6, 24, 2, 1), (6, 32, 3, 2), (6, 64, 4, 2),
       (6, 96, 3, 1), (6, 160, 3, 2), (6, 320, 1, 1)]


def build_model(key, num_classes=10):
    keys = iter(jax.random.split(key, 1024))

    def nk():
        return next(keys)

    def conv_w(shape, fan_in):
        return jax.random.normal(nk(), shape, jnp.float32) / jnp.sqrt(jnp.float32(fan_in))

    def bn(c, cpad=None):
        gamma = 1.0 + 0.1 * jax.random.normal(nk(), (c,), jnp.float32)
        beta = 0.1 * jax.random.normal(nk(), (c,), jnp.float32)
        mean = 0.1 * jax.random.normal(nk(), (c,), jnp.float32)
        var = 1.0 + 0.1 * jax.random.uniform(nk(), (c,), jnp.float32)
        scale = gamma / jnp.sqrt(var + 1e-5)
        bias = beta - mean * scale
        if cpad is not None:                 # padded channels -> scale 0, bias 0
            scale = _pad_axis(scale, 0, cpad)
            bias = _pad_axis(bias, 0, cpad)
        return scale.reshape(1, -1), bias.reshape(1, -1)

    blocks = []
    in_planes = 32
    first = True
    for expansion, target, num_blocks, stride0 in CFG:
        for s in [stride0] + [1] * (num_blocks - 1):
            planes = in_planes * expansion
            cp_out = _rup(target)
            blk = {"stride": s, "planes": planes, "cp_out": cp_out}
            if first:
                cin_eff = in_planes          # stem output lives in VMEM, unpadded
                blk["wc"] = _pad_axis(conv_w((3, 3, 3, 32), 27).reshape(27, 32),
                                      0, 128).astype(jnp.bfloat16)
                blk["sc"], blk["bc"] = bn(32)
            else:
                cin_eff = _rup(in_planes)
            blk["w1"] = _pad_axis(conv_w((in_planes, planes), in_planes),
                                  0, cin_eff).astype(jnp.bfloat16)
            blk["s1"], blk["b1"] = bn(planes)
            blk["wd"] = conv_w((3, 3, planes), 9).reshape(9, planes)   # f32 taps
            blk["s2"], blk["b2"] = bn(planes)
            blk["w3"] = _pad_axis(conv_w((planes, target), planes),
                                  1, cp_out).astype(jnp.bfloat16)
            blk["s3"], blk["b3"] = bn(target, cp_out)
            if s == 1 and in_planes != target:
                blk["res_mode"] = "conv"
                wsc = conv_w((in_planes, target), in_planes)
                blk["wsc"] = _pad_axis(_pad_axis(wsc, 0, cin_eff),
                                       1, cp_out).astype(jnp.bfloat16)
                blk["ssc"], blk["bsc"] = bn(target, cp_out)
            elif s == 1:
                blk["res_mode"] = "identity"
            else:
                blk["res_mode"] = "none"
            blocks.append(blk)
            in_planes = target
            first = False

    params = {"blocks": blocks, "num_classes": num_classes}
    params["w2"] = _pad_axis(conv_w((320, 1280), 320), 0, _rup(320)).astype(jnp.bfloat16)
    params["s2"], params["b2"] = bn(1280)
    ncp = _rup(num_classes)
    params["w3"] = _pad_axis(conv_w((1280, num_classes), 1280), 1, ncp).astype(jnp.bfloat16)
    params["b3"] = _pad_axis(0.1 * jax.random.normal(nk(), (num_classes,), jnp.float32),
                             0, ncp).reshape(1, ncp)
    return params


# ---------------------------------------------------------------------------
# Forward pass
# ---------------------------------------------------------------------------

def _make_patches(x_nchw):
    """im2col for the 3x3/s2 stem (JAX glue); channels padded to 128, bf16."""
    x = jnp.transpose(x_nchw, (0, 2, 3, 1)).astype(jnp.float32)   # NHWC
    N, H, W, _ = x.shape
    Ho, Wo = H // 2, W // 2
    xp = jnp.pad(x, ((0, 0), (1, 1), (1, 1), (0, 0)))
    pats = [xp[:, dh:dh + 2 * Ho:2, dw:dw + 2 * Wo:2, :]
            for dh in range(3) for dw in range(3)]
    p = jnp.concatenate(pats, axis=-1).reshape(N, Ho * Wo, 27)
    return _pad_axis(p, 2, 128).astype(jnp.bfloat16), Ho, Wo


def mobilenet_v2_forward(params, x_nchw):
    N = x_nchw.shape[0]
    h, H, W = _make_patches(x_nchw)          # conv1 itself is fused into block 0
    for blk in params["blocks"]:
        h, H, W = run_block(h, blk, H=H, W=W, N=N)

    # F.avg_pool2d(out, 2) + view(N, -1, 1, 1) requires pooled spatial == 1x1,
    # i.e. 32x32 input, exactly as in the PyTorch reference model.
    assert H == 2 and W == 2, "model requires 32x32 input"
    ncp = params["b3"].shape[1]
    logits = pl.pallas_call(
        _tail_kernel,
        grid=(N,),
        in_specs=[pl.BlockSpec((1, H * W, h.shape[2]), lambda n: (n, 0, 0))] +
                 [pl.BlockSpec(params[k].shape, lambda n: (0, 0))
                  for k in ("w2", "s2", "b2", "w3", "b3")],
        out_specs=pl.BlockSpec((1, ncp), lambda n: (n, 0)),
        out_shape=jax.ShapeDtypeStruct((N, ncp), jnp.float32),
        compiler_params=pltpu.CompilerParams(dimension_semantics=("parallel",)),
    )(h, params["w2"], params["s2"], params["b2"], params["w3"], params["b3"])
    return logits[:, :params["num_classes"]]


# ---------------------------------------------------------------------------

if __name__ == "__main__":
    key = jax.random.PRNGKey(0)
    pkey, xkey = jax.random.split(key)
    params = build_model(pkey, num_classes=10)
    # Spatial size 32 is required by the final view + 1x1-conv classifier.
    x = jax.random.normal(xkey, (2, 3, 32, 32), jnp.float32)   # NCHW like PyTorch
    out = mobilenet_v2_forward(params, x)
    out = jax.block_until_ready(out)
    assert out.shape == (2, 10)
    print("KERNEL_OK")
</pallas_src>

<mosaic_0001>
module attributes {stable_mosaic.version = 11 : i64} {
  func.func @_block_kernel(%arg0: i32, %arg1: memref<1x256x128xbf16, #tpu.memory_space<vmem>>, %arg2: memref<128x32xbf16, #tpu.memory_space<vmem>>, %arg3: memref<1x32xf32, #tpu.memory_space<vmem>>, %arg4: memref<1x32xf32, #tpu.memory_space<vmem>>, %arg5: memref<32x32xbf16, #tpu.memory_space<vmem>>, %arg6: memref<1x32xf32, #tpu.memory_space<vmem>>, %arg7: memref<1x32xf32, #tpu.memory_space<vmem>>, %arg8: memref<9x32xf32, #tpu.memory_space<vmem>>, %arg9: memref<1x32xf32, #tpu.memory_space<vmem>>, %arg10: memref<1x32xf32, #tpu.memory_space<vmem>>, %arg11: memref<32x128xbf16, #tpu.memory_space<vmem>>, %arg12: memref<1x128xf32, #tpu.memory_space<vmem>>, %arg13: memref<1x128xf32, #tpu.memory_space<vmem>>, %arg14: memref<32x128xbf16, #tpu.memory_space<vmem>>, %arg15: memref<1x128xf32, #tpu.memory_space<vmem>>, %arg16: memref<1x128xf32, #tpu.memory_space<vmem>>, %arg17: memref<1x256x128xbf16, #tpu.memory_space<vmem>>, %arg18: memref<18x32x32xf32, #tpu.memory_space<vmem>>, %arg19: memref<256x32xf32, #tpu.memory_space<vmem>>) attributes {dimension_semantics = [#tpu.dimension_semantics<parallel>], iteration_bounds = array<i64: 2>, scalar_prefetch = 0 : i64, scratch_operands = 2 : i64, tpu.core_type = #tpu.core_type<tc>, window_params = [{transform_indices = @transform_0, window_bounds = array<i64: 1, 256, 128>}, {pipeline_mode = #tpu.pipeline_mode<synchronous>, transform_indices = @transform_1, window_bounds = array<i64: 128, 32>}, {pipeline_mode = #tpu.pipeline_mode<synchronous>, transform_indices = @transform_2, window_bounds = array<i64: 1, 32>}, {pipeline_mode = #tpu.pipeline_mode<synchronous>, transform_indices = @transform_3, window_bounds = array<i64: 1, 32>}, {pipeline_mode = #tpu.pipeline_mode<synchronous>, transform_indices = @transform_4, window_bounds = array<i64: 32, 32>}, {pipeline_mode = #tpu.pipeline_mode<synchronous>, transform_indices = @transform_5, window_bounds = array<i64: 1, 32>}, {pipeline_mode = #tpu.pipeline_mode<synchronous>, transform_indices = @transform_6, window_bounds = array<i64: 1, 32>}, {pipeline_mode = #tpu.pipeline_mode<synchronous>, transform_indices = @transform_7, window_bounds = array<i64: 9, 32>}, {pipeline_mode = #tpu.pipeline_mode<synchronous>, transform_indices = @transform_8, window_bounds = array<i64: 1, 32>}, {pipeline_mode = #tpu.pipeline_mode<synchronous>, transform_indices = @transform_9, window_bounds = array<i64: 1, 32>}, {pipeline_mode = #tpu.pipeline_mode<synchronous>, transform_indices = @transform_10, window_bounds = array<i64: 32, 128>}, {pipeline_mode = #tpu.pipeline_mode<synchronous>, transform_indices = @transform_11, window_bounds = array<i64: 1, 128>}, {pipeline_mode = #tpu.pipeline_mode<synchronous>, transform_indices = @transform_12, window_bounds = array<i64: 1, 128>}, {pipeline_mode = #tpu.pipeline_mode<synchronous>, transform_indices = @transform_13, window_bounds = array<i64: 32, 128>}, {pipeline_mode = #tpu.pipeline_mode<synchronous>, transform_indices = @transform_14, window_bounds = array<i64: 1, 128>}, {pipeline_mode = #tpu.pipeline_mode<synchronous>, transform_indices = @transform_15, window_bounds = array<i64: 1, 128>}, {transform_indices = @transform_16, window_bounds = array<i64: 1, 256, 128>}]} {
    %c0 = arith.constant 0 : index
    %c0_0 = arith.constant 0 : index
    %c0_1 = arith.constant 0 : index
    %0 = vector.load %arg1[%c0, %c0_0, %c0_1] : memref<1x256x128xbf16, #tpu.memory_space<vmem>>, vector<1x256x128xbf16>
    %1 = vector.shape_cast %0 : vector<1x256x128xbf16> to vector<256x128xbf16>
    %c0_2 = arith.constant 0 : index
    %c0_3 = arith.constant 0 : index
    %2 = vector.load %arg2[%c0_2, %c0_3] : memref<128x32xbf16, #tpu.memory_space<vmem>>, vector<128x32xbf16>
    %cst = arith.constant dense<0.000000e+00> : vector<256x32xf32>
    %3 = tpu.matmul %1, %2, %cst {dimension_numbers = #tpu.dot_dimension_numbers<[1], [0], [0], [1], [0, 0, 1, 1], [], []>} : vector<256x128xbf16>, vector<128x32xbf16>, vector<256x32xf32> -> vector<256x32xf32>
    %c0_4 = arith.constant 0 : index
    %c0_5 = arith.constant 0 : index
    %4 = vector.load %arg3[%c0_4, %c0_5] : memref<1x32xf32, #tpu.memory_space<vmem>>, vector<1x32xf32>
    %5 = vector.broadcast %4 : vector<1x32xf32> to vector<256x32xf32>
    %6 = arith.mulf %3, %5 : vector<256x32xf32>
    %c0_6 = arith.constant 0 : index
    %c0_7 = arith.constant 0 : index
    %7 = vector.load %arg4[%c0_6, %c0_7] : memref<1x32xf32, #tpu.memory_space<vmem>>, vector<1x32xf32>
    %8 = vector.broadcast %7 : vector<1x32xf32> to vector<256x32xf32>
    %9 = arith.addf %6, %8 : vector<256x32xf32>
    %cst_8 = arith.constant 0.000000e+00 : f32
    %10 = vector.broadcast %cst_8 : f32 to vector<256x32xf32>
    %11 = arith.maximumf %9, %10 : vector<256x32xf32>
    %12 = arith.truncf %11 : vector<256x32xf32> to vector<256x32xbf16>
    %c0_9 = arith.constant 0 : index
    %c0_10 = arith.constant 0 : index
    %13 = vector.load %arg5[%c0_9, %c0_10] : memref<32x32xbf16, #tpu.memory_space<vmem>>, vector<32x32xbf16>
    %cst_11 = arith.constant dense<0.000000e+00> : vector<256x32xf32>
    %14 = tpu.matmul %12, %13, %cst_11 {dimension_numbers = #tpu.dot_dimension_numbers<[1], [0], [0], [1], [0, 0, 1, 1], [], []>} : vector<256x32xbf16>, vector<32x32xbf16>, vector<256x32xf32> -> vector<256x32xf32>
    %c0_12 = arith.constant 0 : index
    %c0_13 = arith.constant 0 : index
    %15 = vector.load %arg6[%c0_12, %c0_13] : memref<1x32xf32, #tpu.memory_space<vmem>>, vector<1x32xf32>
    %16 = vector.broadcast %15 : vector<1x32xf32> to vector<256x32xf32>
    %17 = arith.mulf %14, %16 : vector<256x32xf32>
    %c0_14 = arith.constant 0 : index
    %c0_15 = arith.constant 0 : index
    %18 = vector.load %arg7[%c0_14, %c0_15] : memref<1x32xf32, #tpu.memory_space<vmem>>, vector<1x32xf32>
    %19 = vector.broadcast %18 : vector<1x32xf32> to vector<256x32xf32>
    %20 = arith.addf %17, %19 : vector<256x32xf32>
    %cst_16 = arith.constant 0.000000e+00 : f32
    %cst_17 = arith.constant 6.000000e+00 : f32
    %21 = vector.broadcast %cst_16 : f32 to vector<256x32xf32>
    %22 = arith.maximumf %21, %20 : vector<256x32xf32>
    %23 = vector.broadcast %cst_17 : f32 to vector<256x32xf32>
    %24 = arith.minimumf %23, %22 : vector<256x32xf32>
    %cst_18 = arith.constant 0.000000e+00 : f32
    %25 = vector.broadcast %cst_18 : f32 to vector<18x32x32xf32>
    %c0_19 = arith.constant 0 : index
    %c0_20 = arith.constant 0 : index
    %c0_21 = arith.constant 0 : index
    %26 = vector.load %arg18[%c0_19, %c0_20, %c0_21] : memref<18x32x32xf32, #tpu.memory_space<vmem>>, vector<18x32x32xf32>
    tpu.vector_store %arg18[%c0_19, %c0_20, %c0_21], %25 {strides = array<i32>} : memref<18x32x32xf32, #tpu.memory_space<vmem>>, vector<18x32x32xf32>,
    %27 = vector.extract_strided_slice %24 {offsets = [0, 0], sizes = [16, 32], strides = [1, 1]} : vector<256x32xf32> to vector<16x32xf32>
    %c1 = arith.constant 1 : index
    %c8 = arith.constant 8 : index
    %c0_22 = arith.constant 0 : index
    %28 = vector.load %arg18[%c1, %c8, %c0_22] : memref<18x32x32xf32, #tpu.memory_space<vmem>>, vector<1x16x32xf32>
    %29 = vector.shape_cast %28 : vector<1x16x32xf32> to vector<16x32xf32>
    %30 = vector.shape_cast %27 : vector<16x32xf32> to vector<1x16x32xf32>
    tpu.vector_store %arg18[%c1, %c8, %c0_22], %30 {strides = array<i32>} : memref<18x32x32xf32, #tpu.memory_space<vmem>>, vector<1x16x32xf32>,
    %31 = vector.extract_strided_slice %24 {offsets = [16, 0], sizes = [16, 32], strides = [1, 1]} : vector<256x32xf32> to vector<16x32xf32>
    %c2 = arith.constant 2 : index
    %c8_23 = arith.constant 8 : index
    %c0_24 = arith.constant 0 : index
    %32 = vector.load %arg18[%c2, %c8_23, %c0_24] : memref<18x32x32xf32, #tpu.memory_space<vmem>>, vector<1x16x32xf32>
    %33 = vector.shape_cast %32 : vector<1x16x32xf32> to vector<16x32xf32>
    %34 = vector.shape_cast %31 : vector<16x32xf32> to vector<1x16x32xf32>
    tpu.vector_store %arg18[%c2, %c8_23, %c0_24], %34 {strides = array<i32>} : memref<18x32x32xf32, #tpu.memory_space<vmem>>, vector<1x16x32xf32>,
    %35 = vector.extract_strided_slice %24 {offsets = [32, 0], sizes = [16, 32], strides = [1, 1]} : vector<256x32xf32> to vector<16x32xf32>
    %c3 = arith.constant 3 : index
    %c8_25 = arith.constant 8 : index
    %c0_26 = arith.constant 0 : index
    %36 = vector.load %arg18[%c3, %c8_25, %c0_26] : memref<18x32x32xf32, #tpu.memory_space<vmem>>, vector<1x16x32xf32>
    %37 = vector.shape_cast %36 : vector<1x16x32xf32> to vector<16x32xf32>
    %38 = vector.shape_cast %35 : vector<16x32xf32> to vector<1x16x32xf32>
    tpu.vector_store %arg18[%c3, %c8_25, %c0_26], %38 {strides = array<i32>} : memref<18x32x32xf32, #tpu.memory_space<vmem>>, vector<1x16x32xf32>,
    %39 = vector.extract_strided_slice %24 {offsets = [48, 0], sizes = [16, 32], strides = [1, 1]} : vector<256x32xf32> to vector<16x32xf32>
    %c4 = arith.constant 4 : index
    %c8_27 = arith.constant 8 : index
    %c0_28 = arith.constant 0 : index
    %40 = vector.load %arg18[%c4, %c8_27, %c0_28] : memref<18x32x32xf32, #tpu.memory_space<vmem>>, vector<1x16x32xf32>
    %41 = vector.shape_cast %40 : vector<1x16x32xf32> to vector<16x32xf32>
    %42 = vector.shape_cast %39 : vector<16x32xf32> to vector<1x16x32xf32>
    tpu.vector_store %arg18[%c4, %c8_27, %c0_28], %42 {strides = array<i32>} : memref<18x32x32xf32, #tpu.memory_space<vmem>>, vector<1x16x32xf32>,
    %43 = vector.extract_strided_slice %24 {offsets = [64, 0], sizes = [16, 32], strides = [1, 1]} : vector<256x32xf32> to vector<16x32xf32>
    %c5 = arith.constant 5 : index
    %c8_29 = arith.constant 8 : index
    %c0_30 = arith.constant 0 : index
    %44 = vector.load %arg18[%c5, %c8_29, %c0_30] : memref<18x32x32xf32, #tpu.memory_space<vmem>>, vector<1x16x32xf32>
    %45 = vector.shape_cast %44 : vector<1x16x32xf32> to vector<16x32xf32>
    %46 = vector.shape_cast %43 : vector<16x32xf32> to vector<1x16x32xf32>
    tpu.vector_store %arg18[%c5, %c8_29, %c0_30], %46 {strides = array<i32>} : memref<18x32x32xf32, #tpu.memory_space<vmem>>, vector<1x16x32xf32>,
    %47 = vector.extract_strided_slice %24 {offsets = [80, 0], sizes = [16, 32], strides = [1, 1]} : vector<256x32xf32> to vector<16x32xf32>
    %c6 = arith.constant 6 : index
    %c8_31 = arith.constant 8 : index
    %c0_32 = arith.constant 0 : index
    %48 = vector.load %arg18[%c6, %c8_31, %c0_32] : memref<18x32x32xf32, #tpu.memory_space<vmem>>, vector<1x16x32xf32>
    %49 = vector.shape_cast %48 : vector<1x16x32xf32> to vector<16x32xf32>
    %50 = vector.shape_cast %47 : vector<16x32xf32> to vector<1x16x32xf32>
    tpu.vector_store %arg18[%c6, %c8_31, %c0_32], %50 {strides = array<i32>} : memref<18x32x32xf32, #tpu.memory_space<vmem>>, vector<1x16x32xf32>,
    %51 = vector.extract_strided_slice %24 {offsets = [96, 0], sizes = [16, 32], strides = [1, 1]} : vector<256x32xf32> to vector<16x32xf32>
    %c7 = arith.constant 7 : index
    %c8_33 = arith.constant 8 : index
    %c0_34 = arith.constant 0 : index
    %52 = vector.load %arg18[%c7, %c8_33, %c0_34] : memref<18x32x32xf32, #tpu.memory_space<vmem>>, vector<1x16x32xf32>
    %53 = vector.shape_cast %52 : vector<1x16x32xf32> to vector<16x32xf32>
    %54 = vector.shape_cast %51 : vector<16x32xf32> to vector<1x16x32xf32>
    tpu.vector_store %arg18[%c7, %c8_33, %c0_34], %54 {strides = array<i32>} : memref<18x32x32xf32, #tpu.memory_space<vmem>>, vector<1x16x32xf32>,
    %55 = vector.extract_strided_slice %24 {offsets = [112, 0], sizes = [16, 32], strides = [1, 1]} : vector<256x32xf32> to vector<16x32xf32>
    %c8_35 = arith.constant 8 : index
    %c8_36 = arith.constant 8 : index
    %c0_37 = arith.constant 0 : index
    %56 = vector.load %arg18[%c8_35, %c8_36, %c0_37] : memref<18x32x32xf32, #tpu.memory_space<vmem>>, vector<1x16x32xf32>
    %57 = vector.shape_cast %56 : vector<1x16x32xf32> to vector<16x32xf32>
    %58 = vector.shape_cast %55 : vector<16x32xf32> to vector<1x16x32xf32>
    tpu.vector_store %arg18[%c8_35, %c8_36, %c0_37], %58 {strides = array<i32>} : memref<18x32x32xf32, #tpu.memory_space<vmem>>, vector<1x16x32xf32>,
    %59 = vector.extract_strided_slice %24 {offsets = [128, 0], sizes = [16, 32], strides = [1, 1]} : vector<256x32xf32> to vector<16x32xf32>
    %c9 = arith.constant 9 : index
    %c8_38 = arith.constant 8 : index
    %c0_39 = arith.constant 0 : index
    %60 = vector.load %arg18[%c9, %c8_38, %c0_39] : memref<18x32x32xf32, #tpu.memory_space<vmem>>, vector<1x16x32xf32>
    %61 = vector.shape_cast %60 : vector<1x16x32xf32> to vector<16x32xf32>
    %62 = vector.shape_cast %59 : vector<16x32xf32> to vector<1x16x32xf32>
    tpu.vector_store %arg18[%c9, %c8_38, %c0_39], %62 {strides = array<i32>} : memref<18x32x32xf32, #tpu.memory_space<vmem>>, vector<1x16x32xf32>,
    %63 = vector.extract_strided_slice %24 {offsets = [144, 0], sizes = [16, 32], strides = [1, 1]} : vector<256x32xf32> to vector<16x32xf32>
    %c10 = arith.constant 10 : index
    %c8_40 = arith.constant 8 : index
    %c0_41 = arith.constant 0 : index
    %64 = vector.load %arg18[%c10, %c8_40, %c0_41] : memref<18x32x32xf32, #tpu.memory_space<vmem>>, vector<1x16x32xf32>
    %65 = vector.shape_cast %64 : vector<1x16x32xf32> to vector<16x32xf32>
    %66 = vector.shape_cast %63 : vector<16x32xf32> to vector<1x16x32xf32>
    tpu.vector_store %arg18[%c10, %c8_40, %c0_41], %66 {strides = array<i32>} : memref<18x32x32xf32, #tpu.memory_space<vmem>>, vector<1x16x32xf32>,
    %67 = vector.extract_strided_slice %24 {offsets = [160, 0], sizes = [16, 32], strides = [1, 1]} : vector<256x32xf32> to vector<16x32xf32>
    %c11 = arith.constant 11 : index
    %c8_42 = arith.constant 8 : index
    %c0_43 = arith.constant 0 : index
    %68 = vector.load %arg18[%c11, %c8_42, %c0_43] : memref<18x32x32xf32, #tpu.memory_space<vmem>>, vector<1x16x32xf32>
    %69 = vector.shape_cast %68 : vector<1x16x32xf32> to vector<16x32xf32>
    %70 = vector.shape_cast %67 : vector<16x32xf32> to vector<1x16x32xf32>
    tpu.vector_store %arg18[%c11, %c8_42, %c0_43], %70 {strides = array<i32>} : memref<18x32x32xf32, #tpu.memory_space<vmem>>, vector<1x16x32xf32>,
    %71 = vector.extract_strided_slice %24 {offsets = [176, 0], sizes = [16, 32], strides = [1, 1]} : vector<256x32xf32> to vector<16x32xf32>
    %c12 = arith.constant 12 : index
    %c8_44 = arith.constant 8 : index
    %c0_45 = arith.constant 0 : index
    %72 = vector.load %arg18[%c12, %c8_44, %c0_45] : memref<18x32x32xf32, #tpu.memory_space<vmem>>, vector<1x16x32xf32>
    %73 = vector.shape_cast %72 : vector<1x16x32xf32> to vector<16x32xf32>
    %74 = vector.shape_cast %71 : vector<16x32xf32> to vector<1x16x32xf32>
    tpu.vector_store %arg18[%c12, %c8_44, %c0_45], %74 {strides = array<i32>} : memref<18x32x32xf32, #tpu.memory_space<vmem>>, vector<1x16x32xf32>,
    %75 = vector.extract_strided_slice %24 {offsets = [192, 0], sizes = [16, 32], strides = [1, 1]} : vector<256x32xf32> to vector<16x32xf32>
    %c13 = arith.constant 13 : index
    %c8_46 = arith.constant 8 : index
    %c0_47 = arith.constant 0 : index
    %76 = vector.load %arg18[%c13, %c8_46, %c0_47] : memref<18x32x32xf32, #tpu.memory_space<vmem>>, vector<1x16x32xf32>
    %77 = vector.shape_cast %76 : vector<1x16x32xf32> to vector<16x32xf32>
    %78 = vector.shape_cast %75 : vector<16x32xf32> to vector<1x16x32xf32>
    tpu.vector_store %arg18[%c13, %c8_46, %c0_47], %78 {strides = array<i32>} : memref<18x32x32xf32, #tpu.memory_space<vmem>>, vector<1x16x32xf32>,
    %79 = vector.extract_strided_slice %24 {offsets = [208, 0], sizes = [16, 32], strides = [1, 1]} : vector<256x32xf32> to vector<16x32xf32>
    %c14 = arith.constant 14 : index
    %c8_48 = arith.constant 8 : index
    %c0_49 = arith.constant 0 : index
    %80 = vector.load %arg18[%c14, %c8_48, %c0_49] : memref<18x32x32xf32, #tpu.memory_space<vmem>>, vector<1x16x32xf32>
    %81 = vector.shape_cast %80 : vector<1x16x32xf32> to vector<16x32xf32>
    %82 = vector.shape_cast %79 : vector<16x32xf32> to vector<1x16x32xf32>
    tpu.vector_store %arg18[%c14, %c8_48, %c0_49], %82 {strides = array<i32>} : memref<18x32x32xf32, #tpu.memory_space<vmem>>, vector<1x16x32xf32>,
    %83 = vector.extract_strided_slice %24 {offsets = [224, 0], sizes = [16, 32], strides = [1, 1]} : vector<256x32xf32> to vector<16x32xf32>
    %c15 = arith.constant 15 : index
    %c8_50 = arith.constant 8 : index
    %c0_51 = arith.constant 0 : index
    %84 = vector.load %arg18[%c15, %c8_50, %c0_51] : memref<18x32x32xf32, #tpu.memory_space<vmem>>, vector<1x16x32xf32>
    %85 = vector.shape_cast %84 : vector<1x16x32xf32> to vector<16x32xf32>
    %86 = vector.shape_cast %83 : vector<16x32xf32> to vector<1x16x32xf32>
    tpu.vector_store %arg18[%c15, %c8_50, %c0_51], %86 {strides = array<i32>} : memref<18x32x32xf32, #tpu.memory_space<vmem>>, vector<1x16x32xf32>,
    %87 = vector.extract_strided_slice %24 {offsets = [240, 0], sizes = [16, 32], strides = [1, 1]} : vector<256x32xf32> to vector<16x32xf32>
    %c16 = arith.constant 16 : index
    %c8_52 = arith.constant 8 : index
    %c0_53 = arith.constant 0 : index
    %88 = vector.load %arg18[%c16, %c8_52, %c0_53] : memref<18x32x32xf32, #tpu.memory_space<vmem>>, vector<1x16x32xf32>
    %89 = vector.shape_cast %88 : vector<1x16x32xf32> to vector<16x32xf32>
    %90 = vector.shape_cast %87 : vector<16x32xf32> to vector<1x16x32xf32>
    tpu.vector_store %arg18[%c16, %c8_52, %c0_53], %90 {strides = array<i32>} : memref<18x32x32xf32, #tpu.memory_space<vmem>>, vector<1x16x32xf32>,
    %cst_54 = arith.constant 0.000000e+00 : f32
    %91 = vector.broadcast %cst_54 : f32 to vector<16x16x32xf32>
    %c0_55 = arith.constant 0 : index
    %c7_56 = arith.constant 7 : index
    %c0_57 = arith.constant 0 : index
    %92 = vector.load %arg18[%c0_55, %c7_56, %c0_57] : memref<18x32x32xf32, #tpu.memory_space<vmem>>, vector<16x16x32xf32>
    %c0_58 = arith.constant 0 : index
    %c0_59 = arith.constant 0 : index
    %93 = vector.load %arg8[%c0_58, %c0_59] : memref<9x32xf32, #tpu.memory_space<vmem>>, vector<1x32xf32>
    %94 = vector.shape_cast %93 : vector<1x32xf32> to vector<1x1x32xf32>
    %95 = vector.broadcast %94 : vector<1x1x32xf32> to vector<16x16x32xf32>
    %96 = arith.mulf %92, %95 : vector<16x16x32xf32>
    %97 = arith.addf %91, %96 : vector<16x16x32xf32>
    %c0_60 = arith.constant 0 : index
    %c8_61 = arith.constant 8 : index
    %c0_62 = arith.constant 0 : index
    %98 = vector.load %arg18[%c0_60, %c8_61, %c0_62] : memref<18x32x32xf32, #tpu.memory_space<vmem>>, vector<16x16x32xf32>
    %c1_63 = arith.constant 1 : index
    %c0_64 = arith.constant 0 : index
    %99 = vector.load %arg8[%c1_63, %c0_64] : memref<9x32xf32, #tpu.memory_space<vmem>>, vector<1x32xf32>
    %100 = vector.shape_cast %99 : vector<1x32xf32> to vector<1x1x32xf32>
    %101 = vector.broadcast %100 : vector<1x1x32xf32> to vector<16x16x32xf32>
    %102 = arith.mulf %98, %101 : vector<16x16x32xf32>
    %103 = arith.addf %97, %102 : vector<16x16x32xf32>
    %c0_65 = arith.constant 0 : index
    %c9_66 = arith.constant 9 : index
    %c0_67 = arith.constant 0 : index
    %104 = vector.load %arg18[%c0_65, %c9_66, %c0_67] : memref<18x32x32xf32, #tpu.memory_space<vmem>>, vector<16x16x32xf32>
    %c2_68 = arith.constant 2 : index
    %c0_69 = arith.constant 0 : index
    %105 = vector.load %arg8[%c2_68, %c0_69] : memref<9x32xf32, #tpu.memory_space<vmem>>, vector<1x32xf32>
    %106 = vector.shape_cast %105 : vector<1x32xf32> to vector<1x1x32xf32>
    %107 = vector.broadcast %106 : vector<1x1x32xf32> to vector<16x16x32xf32>
    %108 = arith.mulf %104, %107 : vector<16x16x32xf32>
    %109 = arith.addf %103, %108 : vector<16x16x32xf32>
    %c1_70 = arith.constant 1 : index
    %c7_71 = arith.constant 7 : index
    %c0_72 = arith.constant 0 : index
    %110 = vector.load %arg18[%c1_70, %c7_71, %c0_72] : memref<18x32x32xf32, #tpu.memory_space<vmem>>, vector<16x16x32xf32>
    %c3_73 = arith.constant 3 : index
    %c0_74 = arith.constant 0 : index
    %111 = vector.load %arg8[%c3_73, %c0_74] : memref<9x32xf32, #tpu.memory_space<vmem>>, vector<1x32xf32>
    %112 = vector.shape_cast %111 : vector<1x32xf32> to vector<1x1x32xf32>
    %113 = vector.broadcast %112 : vector<1x1x32xf32> to vector<16x16x32xf32>
    %114 = arith.mulf %110, %113 : vector<16x16x32xf32>
    %115 = arith.addf %109, %114 : vector<16x16x32xf32>
    %c1_75 = arith.constant 1 : index
    %c8_76 = arith.constant 8 : index
    %c0_77 = arith.constant 0 : index
    %116 = vector.load %arg18[%c1_75, %c8_76, %c0_77] : memref<18x32x32xf32, #tpu.memory_space<vmem>>, vector<16x16x32xf32>
    %c4_78 = arith.constant 4 : index
    %c0_79 = arith.constant 0 : index
    %117 = vector.load %arg8[%c4_78, %c0_79] : memref<9x32xf32, #tpu.memory_space<vmem>>, vector<1x32xf32>
    %118 = vector.shape_cast %117 : vector<1x32xf32> to vector<1x1x32xf32>
    %119 = vector.broadcast %118 : vector<1x1x32xf32> to vector<16x16x32xf32>
    %120 = arith.mulf %116, %119 : vector<16x16x32xf32>
    %121 = arith.addf %115, %120 : vector<16x16x32xf32>
    %c1_80 = arith.constant 1 : index
    %c9_81 = arith.constant 9 : index
    %c0_82 = arith.constant 0 : index
    %122 = vector.load %arg18[%c1_80, %c9_81, %c0_82] : memref<18x32x32xf32, #tpu.memory_space<vmem>>, vector<16x16x32xf32>
    %c5_83 = arith.constant 5 : index
    %c0_84 = arith.constant 0 : index
    %123 = vector.load %arg8[%c5_83, %c0_84] : memref<9x32xf32, #tpu.memory_space<vmem>>, vector<1x32xf32>
    %124 = vector.shape_cast %123 : vector<1x32xf32> to vector<1x1x32xf32>
    %125 = vector.broadcast %124 : vector<1x1x32xf32> to vector<16x16x32xf32>
    %126 = arith.mulf %122, %125 : vector<16x16x32xf32>
    %127 = arith.addf %121, %126 : vector<16x16x32xf32>
    %c2_85 = arith.constant 2 : index
    %c7_86 = arith.constant 7 : index
    %c0_87 = arith.constant 0 : index
    %128 = vector.load %arg18[%c2_85, %c7_86, %c0_87] : memref<18x32x32xf32, #tpu.memory_space<vmem>>, vector<16x16x32xf32>
    %c6_88 = arith.constant 6 : index
    %c0_89 = arith.constant 0 : index
    %129 = vector.load %arg8[%c6_88, %c0_89] : memref<9x32xf32, #tpu.memory_space<vmem>>, vector<1x32xf32>
    %130 = vector.shape_cast %129 : vector<1x32xf32> to vector<1x1x32xf32>
    %131 = vector.broadcast %130 : vector<1x1x32xf32> to vector<16x16x32xf32>
    %132 = arith.mulf %128, %131 : vector<16x16x32xf32>
    %133 = arith.addf %127, %132 : vector<16x16x32xf32>
    %c2_90 = arith.constant 2 : index
    %c8_91 = arith.constant 8 : index
    %c0_92 = arith.constant 0 : index
    %134 = vector.load %arg18[%c2_90, %c8_91, %c0_92] : memref<18x32x32xf32, #tpu.memory_space<vmem>>, vector<16x16x32xf32>
    %c7_93 = arith.constant 7 : index
    %c0_94 = arith.constant 0 : index
    %135 = vector.load %arg8[%c7_93, %c0_94] : memref<9x32xf32, #tpu.memory_space<vmem>>, vector<1x32xf32>
    %136 = vector.shape_cast %135 : vector<1x32xf32> to vector<1x1x32xf32>
    %137 = vector.broadcast %136 : vector<1x1x32xf32> to vector<16x16x32xf32>
    %138 = arith.mulf %134, %137 : vector<16x16x32xf32>
    %139 = arith.addf %133, %138 : vector<16x16x32xf32>
    %c2_95 = arith.constant 2 : index
    %c9_96 = arith.constant 9 : index
    %c0_97 = arith.constant 0 : index
    %140 = vector.load %arg18[%c2_95, %c9_96, %c0_97] : memref<18x32x32xf32, #tpu.memory_space<vmem>>, vector<16x16x32xf32>
    %c8_98 = arith.constant 8 : index
    %c0_99 = arith.constant 0 : index
    %141 = vector.load %arg8[%c8_98, %c0_99] : memref<9x32xf32, #tpu.memory_space<vmem>>, vector<1x32xf32>
    %142 = vector.shape_cast %141 : vector<1x32xf32> to vector<1x1x32xf32>
    %143 = vector.broadcast %142 : vector<1x1x32xf32> to vector<16x16x32xf32>
    %144 = arith.mulf %140, %143 : vector<16x16x32xf32>
    %145 = arith.addf %139, %144 : vector<16x16x32xf32>
    %c0_100 = arith.constant 0 : index
    %c0_101 = arith.constant 0 : index
    %146 = vector.load %arg9[%c0_100, %c0_101] : memref<1x32xf32, #tpu.memory_space<vmem>>, vector<1x32xf32>
    %147 = vector.shape_cast %146 : vector<1x32xf32> to vector<1x1x32xf32>
    %148 = vector.broadcast %147 : vector<1x1x32xf32> to vector<16x16x32xf32>
    %149 = arith.mulf %145, %148 : vector<16x16x32xf32>
    %c0_102 = arith.constant 0 : index
    %c0_103 = arith.constant 0 : index
    %150 = vector.load %arg10[%c0_102, %c0_103] : memref<1x32xf32, #tpu.memory_space<vmem>>, vector<1x32xf32>
    %151 = vector.shape_cast %150 : vector<1x32xf32> to vector<1x1x32xf32>
    %152 = vector.broadcast %151 : vector<1x1x32xf32> to vector<16x16x32xf32>
    %153 = arith.addf %149, %152 : vector<16x16x32xf32>
    %cst_104 = arith.constant 0.000000e+00 : f32
    %cst_105 = arith.constant 6.000000e+00 : f32
    %154 = vector.broadcast %cst_104 : f32 to vector<16x16x32xf32>
    %155 = arith.maximumf %154, %153 : vector<16x16x32xf32>
    %156 = vector.broadcast %cst_105 : f32 to vector<16x16x32xf32>
    %157 = arith.minimumf %156, %155 : vector<16x16x32xf32>
    %158 = vector.extract_strided_slice %157 {offsets = [0, 0, 0], sizes = [1, 16, 32], strides = [1, 1, 1]} : vector<16x16x32xf32> to vector<1x16x32xf32>
    %159 = vector.shape_cast %158 : vector<1x16x32xf32> to vector<16x32xf32>
    %c0_106 = arith.constant 0 : index
    %c0_107 = arith.constant 0 : index
    %160 = vector.load %arg19[%c0_106, %c0_107] : memref<256x32xf32, #tpu.memory_space<vmem>>, vector<16x32xf32>
    tpu.vector_store %arg19[%c0_106, %c0_107], %159 {strides = array<i32>} : memref<256x32xf32, #tpu.memory_space<vmem>>, vector<16x32xf32>,
    %161 = vector.extract_strided_slice %157 {offsets = [1, 0, 0], sizes = [1, 16, 32], strides = [1, 1, 1]} : vector<16x16x32xf32> to vector<1x16x32xf32>
    %162 = vector.shape_cast %161 : vector<1x16x32xf32> to vector<16x32xf32>
    %c16_108 = arith.constant 16 : index
    %c0_109 = arith.constant 0 : index
    %163 = vector.load %arg19[%c16_108, %c0_109] : memref<256x32xf32, #tpu.memory_space<vmem>>, vector<16x32xf32>
    tpu.vector_store %arg19[%c16_108, %c0_109], %162 {strides = array<i32>} : memref<256x32xf32, #tpu.memory_space<vmem>>, vector<16x32xf32>,
    %164 = vector.extract_strided_slice %157 {offsets = [2, 0, 0], sizes = [1, 16, 32], strides = [1, 1, 1]} : vector<16x16x32xf32> to vector<1x16x32xf32>
    %165 = vector.shape_cast %164 : vector<1x16x32xf32> to vector<16x32xf32>
    %c32 = arith.constant 32 : index
    %c0_110 = arith.constant 0 : index
    %166 = vector.load %arg19[%c32, %c0_110] : memref<256x32xf32, #tpu.memory_space<vmem>>, vector<16x32xf32>
    tpu.vector_store %arg19[%c32, %c0_110], %165 {strides = array<i32>} : memref<256x32xf32, #tpu.memory_space<vmem>>, vector<16x32xf32>,
    %167 = vector.extract_strided_slice %157 {offsets = [3, 0, 0], sizes = [1, 16, 32], strides = [1, 1, 1]} : vector<16x16x32xf32> to vector<1x16x32xf32>
    %168 = vector.shape_cast %167 : vector<1x16x32xf32> to vector<16x32xf32>
    %c48 = arith.constant 48 : index
    %c0_111 = arith.constant 0 : index
    %169 = vector.load %arg19[%c48, %c0_111] : memref<256x32xf32, #tpu.memory_space<vmem>>, vector<16x32xf32>
    tpu.vector_store %arg19[%c48, %c0_111], %168 {strides = array<i32>} : memref<256x32xf32, #tpu.memory_space<vmem>>, vector<16x32xf32>,
    %170 = vector.extract_strided_slice %157 {offsets = [4, 0, 0], sizes = [1, 16, 32], strides = [1, 1, 1]} : vector<16x16x32xf32> to vector<1x16x32xf32>
    %171 = vector.shape_cast %170 : vector<1x16x32xf32> to vector<16x32xf32>
    %c64 = arith.constant 64 : index
    %c0_112 = arith.constant 0 : index
    %172 = vector.load %arg19[%c64, %c0_112] : memref<256x32xf32, #tpu.memory_space<vmem>>, vector<16x32xf32>
    tpu.vector_store %arg19[%c64, %c0_112], %171 {strides = array<i32>} : memref<256x32xf32, #tpu.memory_space<vmem>>, vector<16x32xf32>,
    %173 = vector.extract_strided_slice %157 {offsets = [5, 0, 0], sizes = [1, 16, 32], strides = [1, 1, 1]} : vector<16x16x32xf32> to vector<1x16x32xf32>
    %174 = vector.shape_cast %173 : vector<1x16x32xf32> to vector<16x32xf32>
    %c80 = arith.constant 80 : index
    %c0_113 = arith.constant 0 : index
    %175 = vector.load %arg19[%c80, %c0_113] : memref<256x32xf32, #tpu.memory_space<vmem>>, vector<16x32xf32>
    tpu.vector_store %arg19[%c80, %c0_113], %174 {strides = array<i32>} : memref<256x32xf32, #tpu.memory_space<vmem>>, vector<16x32xf32>,
    %176 = vector.extract_strided_slice %157 {offsets = [6, 0, 0], sizes = [1, 16, 32], strides = [1, 1, 1]} : vector<16x16x32xf32> to vector<1x16x32xf32>
    %177 = vector.shape_cast %176 : vector<1x16x32xf32> to vector<16x32xf32>
    %c96 = arith.constant 96 : index
    %c0_114 = arith.constant 0 : index
    %178 = vector.load %arg19[%c96, %c0_114] : memref<256x32xf32, #tpu.memory_space<vmem>>, vector<16x32xf32>
    tpu.vector_store %arg19[%c96, %c0_114], %177 {strides = array<i32>} : memref<256x32xf32, #tpu.memory_space<vmem>>, vector<16x32xf32>,
    %179 = vector.extract_strided_slice %157 {offsets = [7, 0, 0], sizes = [1, 16, 32], strides = [1, 1, 1]} : vector<16x16x32xf32> to vector<1x16x32xf32>
    %180 = vector.shape_cast %179 : vector<1x16x32xf32> to vector<16x32xf32>
    %c112 = arith.constant 112 : index
    %c0_115 = arith.constant 0 : index
    %181 = vector.load %arg19[%c112, %c0_115] : memref<256x32xf32, #tpu.memory_space<vmem>>, vector<16x32xf32>
    tpu.vector_store %arg19[%c112, %c0_115], %180 {strides = array<i32>} : memref<256x32xf32, #tpu.memory_space<vmem>>, vector<16x32xf32>,
    %182 = vector.extract_strided_slice %157 {offsets = [8, 0, 0], sizes = [1, 16, 32], strides = [1, 1, 1]} : vector<16x16x32xf32> to vector<1x16x32xf32>
    %183 = vector.shape_cast %182 : vector<1x16x32xf32> to vector<16x32xf32>
    %c128 = arith.constant 128 : index
    %c0_116 = arith.constant 0 : index
    %184 = vector.load %arg19[%c128, %c0_116] : memref<256x32xf32, #tpu.memory_space<vmem>>, vector<16x32xf32>
    tpu.vector_store %arg19[%c128, %c0_116], %183 {strides = array<i32>} : memref<256x32xf32, #tpu.memory_space<vmem>>, vector<16x32xf32>,
    %185 = vector.extract_strided_slice %157 {offsets = [9, 0, 0], sizes = [1, 16, 32], strides = [1, 1, 1]} : vector<16x16x32xf32> to vector<1x16x32xf32>
    %186 = vector.shape_cast %185 : vector<1x16x32xf32> to vector<16x32xf32>
    %c144 = arith.constant 144 : index
    %c0_117 = arith.constant 0 : index
    %187 = vector.load %arg19[%c144, %c0_117] : memref<256x32xf32, #tpu.memory_space<vmem>>, vector<16x32xf32>
    tpu.vector_store %arg19[%c144, %c0_117], %186 {strides = array<i32>} : memref<256x32xf32, #tpu.memory_space<vmem>>, vector<16x32xf32>,
    %188 = vector.extract_strided_slice %157 {offsets = [10, 0, 0], sizes = [1, 16, 32], strides = [1, 1, 1]} : vector<16x16x32xf32> to vector<1x16x32xf32>
    %189 = vector.shape_cast %188 : vector<1x16x32xf32> to vector<16x32xf32>
    %c160 = arith.constant 160 : index
    %c0_118 = arith.constant 0 : index
    %190 = vector.load %arg19[%c160, %c0_118] : memref<256x32xf32, #tpu.memory_space<vmem>>, vector<16x32xf32>
    tpu.vector_store %arg19[%c160, %c0_118], %189 {strides = array<i32>} : memref<256x32xf32, #tpu.memory_space<vmem>>, vector<16x32xf32>,
    %191 = vector.extract_strided_slice %157 {offsets = [11, 0, 0], sizes = [1, 16, 32], strides = [1, 1, 1]} : vector<16x16x32xf32> to vector<1x16x32xf32>
    %192 = vector.shape_cast %191 : vector<1x16x32xf32> to vector<16x32xf32>
    %c176 = arith.constant 176 : index
    %c0_119 = arith.constant 0 : index
    %193 = vector.load %arg19[%c176, %c0_119] : memref<256x32xf32, #tpu.memory_space<vmem>>, vector<16x32xf32>
    tpu.vector_store %arg19[%c176, %c0_119], %192 {strides = array<i32>} : memref<256x32xf32, #tpu.memory_space<vmem>>, vector<16x32xf32>,
    %194 = vector.extract_strided_slice %157 {offsets = [12, 0, 0], sizes = [1, 16, 32], strides = [1, 1, 1]} : vector<16x16x32xf32> to vector<1x16x32xf32>
    %195 = vector.shape_cast %194 : vector<1x16x32xf32> to vector<16x32xf32>
    %c192 = arith.constant 192 : index
    %c0_120 = arith.constant 0 : index
    %196 = vector.load %arg19[%c192, %c0_120] : memref<256x32xf32, #tpu.memory_space<vmem>>, vector<16x32xf32>
    tpu.vector_store %arg19[%c192, %c0_120], %195 {strides = array<i32>} : memref<256x32xf32, #tpu.memory_space<vmem>>, vector<16x32xf32>,
    %197 = vector.extract_strided_slice %157 {offsets = [13, 0, 0], sizes = [1, 16, 32], strides = [1, 1, 1]} : vector<16x16x32xf32> to vector<1x16x32xf32>
    %198 = vector.shape_cast %197 : vector<1x16x32xf32> to vector<16x32xf32>
    %c208 = arith.constant 208 : index
    %c0_121 = arith.constant 0 : index
    %199 = vector.load %arg19[%c208, %c0_121] : memref<256x32xf32, #tpu.memory_space<vmem>>, vector<16x32xf32>
    tpu.vector_store %arg19[%c208, %c0_121], %198 {strides = array<i32>} : memref<256x32xf32, #tpu.memory_space<vmem>>, vector<16x32xf32>,
    %200 = vector.extract_strided_slice %157 {offsets = [14, 0, 0], sizes = [1, 16, 32], strides = [1, 1, 1]} : vector<16x16x32xf32> to vector<1x16x32xf32>
    %201 = vector.shape_cast %200 : vector<1x16x32xf32> to vector<16x32xf32>
    %c224 = arith.constant 224 : index
    %c0_122 = arith.constant 0 : index
    %202 = vector.load %arg19[%c224, %c0_122] : memref<256x32xf32, #tpu.memory_space<vmem>>, vector<16x32xf32>
    tpu.vector_store %arg19[%c224, %c0_122], %201 {strides = array<i32>} : memref<256x32xf32, #tpu.memory_space<vmem>>, vector<16x32xf32>,
    %203 = vector.extract_strided_slice %157 {offsets = [15, 0, 0], sizes = [1, 16, 32], strides = [1, 1, 1]} : vector<16x16x32xf32> to vector<1x16x32xf32>
    %204 = vector.shape_cast %203 : vector<1x16x32xf32> to vector<16x32xf32>
    %c240 = arith.constant 240 : index
    %c0_123 = arith.constant 0 : index
    %205 = vector.load %arg19[%c240, %c0_123] : memref<256x32xf32, #tpu.memory_space<vmem>>, vector<16x32xf32>
    tpu.vector_store %arg19[%c240, %c0_123], %204 {strides = array<i32>} : memref<256x32xf32, #tpu.memory_space<vmem>>, vector<16x32xf32>,
    %c0_124 = arith.constant 0 : index
    %c0_125 = arith.constant 0 : index
    %206 = vector.load %arg19[%c0_124, %c0_125] : memref<256x32xf32, #tpu.memory_space<vmem>>, vector<256x32xf32>
    %207 = arith.truncf %206 : vector<256x32xf32> to vector<256x32xbf16>
    %c0_126 = arith.constant 0 : index
    %c0_127 = arith.constant 0 : index
    %208 = vector.load %arg11[%c0_126, %c0_127] : memref<32x128xbf16, #tpu.memory_space<vmem>>, vector<32x128xbf16>
    %cst_128 = arith.constant dense<0.000000e+00> : vector<256x128xf32>
    %209 = tpu.matmul %207, %208, %cst_128 {dimension_numbers = #tpu.dot_dimension_numbers<[1], [0], [0], [1], [0, 0, 1, 1], [], []>} : vector<256x32xbf16>, vector<32x128xbf16>, vector<256x128xf32> -> vector<256x128xf32>
    %c0_129 = arith.constant 0 : index
    %c0_130 = arith.constant 0 : index
    %210 = vector.load %arg12[%c0_129, %c0_130] : memref<1x128xf32, #tpu.memory_space<vmem>>, vector<1x128xf32>
    %211 = vector.broadcast %210 : vector<1x128xf32> to vector<256x128xf32>
    %212 = arith.mulf %209, %211 : vector<256x128xf32>
    %c0_131 = arith.constant 0 : index
    %c0_132 = arith.constant 0 : index
    %213 = vector.load %arg13[%c0_131, %c0_132] : memref<1x128xf32, #tpu.memory_space<vmem>>, vector<1x128xf32>
    %214 = vector.broadcast %213 : vector<1x128xf32> to vector<256x128xf32>
    %215 = arith.addf %212, %214 : vector<256x128xf32>
    %c0_133 = arith.constant 0 : index
    %c0_134 = arith.constant 0 : index
    %216 = vector.load %arg14[%c0_133, %c0_134] : memref<32x128xbf16, #tpu.memory_space<vmem>>, vector<32x128xbf16>
    %cst_135 = arith.constant dense<0.000000e+00> : vector<256x128xf32>
    %217 = tpu.matmul %12, %216, %cst_135 {dimension_numbers = #tpu.dot_dimension_numbers<[1], [0], [0], [1], [0, 0, 1, 1], [], []>} : vector<256x32xbf16>, vector<32x128xbf16>, vector<256x128xf32> -> vector<256x128xf32>
    %c0_136 = arith.constant 0 : index
    %c0_137 = arith.constant 0 : index
    %218 = vector.load %arg15[%c0_136, %c0_137] : memref<1x128xf32, #tpu.memory_space<vmem>>, vector<1x128xf32>
    %219 = vector.broadcast %218 : vector<1x128xf32> to vector<256x128xf32>
    %220 = arith.mulf %217, %219 : vector<256x128xf32>
    %c0_138 = arith.constant 0 : index
    %c0_139 = arith.constant 0 : index
    %221 = vector.load %arg16[%c0_138, %c0_139] : memref<1x128xf32, #tpu.memory_space<vmem>>, vector<1x128xf32>
    %222 = vector.broadcast %221 : vector<1x128xf32> to vector<256x128xf32>
    %223 = arith.addf %220, %222 : vector<256x128xf32>
    %224 = arith.addf %215, %223 : vector<256x128xf32>
    %225 = arith.truncf %224 : vector<256x128xf32> to vector<256x128xbf16>
    %c0_140 = arith.constant 0 : index
    %c0_141 = arith.constant 0 : index
    %c0_142 = arith.constant 0 : index
    %226 = vector.load %arg17[%c0_140, %c0_141, %c0_142] : memref<1x256x128xbf16, #tpu.memory_space<vmem>>, vector<1x256x128xbf16>
    %227 = vector.shape_cast %226 : vector<1x256x128xbf16> to vector<256x128xbf16>
    %228 = vector.shape_cast %225 : vector<256x128xbf16> to vector<1x256x128xbf16>
    tpu.vector_store %arg17[%c0_140, %c0_141, %c0_142], %228 {strides = array<i32>} : memref<1x256x128xbf16, #tpu.memory_space<vmem>>, vector<1x256x128xbf16>,
    return
  }
  func.func @transform_0(%arg0: i32) -> (i32, i32, i32) {
    %c0_i32 = arith.constant 0 : i32
    %c0_i32_0 = arith.constant 0 : i32
    %c0_i32_1 = arith.constant 0 : i32
    return %arg0, %c0_i32, %c0_i32_0 : i32, i32, i32
  }
  func.func @transform_1(%arg0: i32) -> (i32, i32) {
    %c0_i32 = arith.constant 0 : i32
    %c0_i32_0 = arith.constant 0 : i32
    %c0_i32_1 = arith.constant 0 : i32
    return %c0_i32, %c0_i32_0 : i32, i32
  }
  func.func @transform_2(%arg0: i32) -> (i32, i32) {
    %c0_i32 = arith.constant 0 : i32
    %c0_i32_0 = arith.constant 0 : i32
    %c0_i32_1 = arith.constant 0 : i32
    return %c0_i32, %c0_i32_0 : i32, i32
  }
  func.func @transform_3(%arg0: i32) -> (i32, i32) {
    %c0_i32 = arith.constant 0 : i32
    %c0_i32_0 = arith.constant 0 : i32
    %c0_i32_1 = arith.constant 0 : i32
    return %c0_i32, %c0_i32_0 : i32, i32
  }
  func.func @transform_4(%arg0: i32) -> (i32, i32) {
    %c0_i32 = arith.constant 0 : i32
    %c0_i32_0 = arith.constant 0 : i32
    %c0_i32_1 = arith.constant 0 : i32
    return %c0_i32, %c0_i32_0 : i32, i32
  }
  func.func @transform_5(%arg0: i32) -> (i32, i32) {
    %c0_i32 = arith.constant 0 : i32
    %c0_i32_0 = arith.constant 0 : i32
    %c0_i32_1 = arith.constant 0 : i32
    return %c0_i32, %c0_i32_0 : i32, i32
  }
  func.func @transform_6(%arg0: i32) -> (i32, i32) {
    %c0_i32 = arith.constant 0 : i32
    %c0_i32_0 = arith.constant 0 : i32
    %c0_i32_1 = arith.constant 0 : i32
    return %c0_i32, %c0_i32_0 : i32, i32
  }
  func.func @transform_7(%arg0: i32) -> (i32, i32) {
    %c0_i32 = arith.constant 0 : i32
    %c0_i32_0 = arith.constant 0 : i32
    %c0_i32_1 = arith.constant 0 : i32
    return %c0_i32, %c0_i32_0 : i32, i32
  }
  func.func @transform_8(%arg0: i32) -> (i32, i32) {
    %c0_i32 = arith.constant 0 : i32
    %c0_i32_0 = arith.constant 0 : i32
    %c0_i32_1 = arith.constant 0 : i32
    return %c0_i32, %c0_i32_0 : i32, i32
  }
  func.func @transform_9(%arg0: i32) -> (i32, i32) {
    %c0_i32 = arith.constant 0 : i32
    %c0_i32_0 = arith.constant 0 : i32
    %c0_i32_1 = arith.constant 0 : i32
    return %c0_i32, %c0_i32_0 : i32, i32
  }
  func.func @transform_10(%arg0: i32) -> (i32, i32) {
    %c0_i32 = arith.constant 0 : i32
    %c0_i32_0 = arith.constant 0 : i32
    %c0_i32_1 = arith.constant 0 : i32
    return %c0_i32, %c0_i32_0 : i32, i32
  }
  func.func @transform_11(%arg0: i32) -> (i32, i32) {
    %c0_i32 = arith.constant 0 : i32
    %c0_i32_0 = arith.constant 0 : i32
    %c0_i32_1 = arith.constant 0 : i32
    return %c0_i32, %c0_i32_0 : i32, i32
  }
  func.func @transform_12(%arg0: i32) -> (i32, i32) {
    %c0_i32 = arith.constant 0 : i32
    %c0_i32_0 = arith.constant 0 : i32
    %c0_i32_1 = arith.constant 0 : i32
    return %c0_i32, %c0_i32_0 : i32, i32
  }
  func.func @transform_13(%arg0: i32) -> (i32, i32) {
    %c0_i32 = arith.constant 0 : i32
    %c0_i32_0 = arith.constant 0 : i32
    %c0_i32_1 = arith.constant 0 : i32
    return %c0_i32, %c0_i32_0 : i32, i32
  }
  func.func @transform_14(%arg0: i32) -> (i32, i32) {
    %c0_i32 = arith.constant 0 : i32
    %c0_i32_0 = arith.constant 0 : i32
    %c0_i32_1 = arith.constant 0 : i32
    return %c0_i32, %c0_i32_0 : i32, i32
  }
  func.func @transform_15(%arg0: i32) -> (i32, i32) {
    %c0_i32 = arith.constant 0 : i32
    %c0_i32_0 = arith.constant 0 : i32
    %c0_i32_1 = arith.constant 0 : i32
    return %c0_i32, %c0_i32_0 : i32, i32
  }
  func.func @transform_16(%arg0: i32) -> (i32, i32, i32) {
    %c0_i32 = arith.constant 0 : i32
    %c0_i32_0 = arith.constant 0 : i32
    %c0_i32_1 = arith.constant 0 : i32
    return %arg0, %c0_i32, %c0_i32_0 : i32, i32, i32
  }
}

</mosaic_0001>

<llo_original>
// kernel: tpu_custom_call.1
$region0: #{tpu_custom_call.1}
  #allocation0 [shape = 'u32[]', space=smem, size = 0x4, offset = 0x4, fixed_abs, tag = 'smem constant byte address 0x4 - core index']
  #allocation1 [shape = 'u32[144,128]{1,0:T(1,128)}', space=vmem, size = 0x12000, scoped, tag = 'internal scratch']
  #allocation2 [shape = 'f32[18,32,32]{2,1,0:T(8,128)}', space=vmem, size = 0x48000, scoped, tag = 'scratch operand']
  #allocation3 [shape = 'f32[256,32]{1,0:T(8,128)}', space=vmem, size = 0x20000, scoped, tag = 'scratch operand']
  %s0 = inlined_call_operand.hbm [shape: bf16[2,256,128], index: 0, kind: input, shape index: {}]
  %s1 = inlined_call_operand.vmem [shape: bf16[128,32], index: 1, kind: input, shape index: {}]
  %s2 = inlined_call_operand.vmem [shape: f32[1,32], index: 2, kind: input, shape index: {}]
  %s3 = inlined_call_operand.vmem [shape: f32[1,32], index: 3, kind: input, shape index: {}]
  %s4 = inlined_call_operand.vmem [shape: bf16[32,32], index: 4, kind: input, shape index: {}]
  %s5 = inlined_call_operand.vmem [shape: f32[1,32], index: 5, kind: input, shape index: {}]
  %s6 = inlined_call_operand.vmem [shape: f32[1,32], index: 6, kind: input, shape index: {}]
  %s7 = inlined_call_operand.vmem [shape: f32[9,32], index: 7, kind: input, shape index: {}]
  %s8 = inlined_call_operand.vmem [shape: f32[1,32], index: 8, kind: input, shape index: {}]
  %s9 = inlined_call_operand.vmem [shape: f32[1,32], index: 9, kind: input, shape index: {}]
  %s10 = inlined_call_operand.vmem [shape: bf16[32,128], index: 10, kind: input, shape index: {}]
  %s11 = inlined_call_operand.vmem [shape: f32[1,128], index: 11, kind: input, shape index: {}]
  %s12 = inlined_call_operand.vmem [shape: f32[1,128], index: 12, kind: input, shape index: {}]
  %s13 = inlined_call_operand.vmem [shape: bf16[32,128], index: 13, kind: input, shape index: {}]
  %s14 = inlined_call_operand.vmem [shape: f32[1,128], index: 14, kind: input, shape index: {}]
  %s15 = inlined_call_operand.vmem [shape: f32[1,128], index: 15, kind: input, shape index: {}]
  %s16 = inlined_call_operand.hbm [shape: bf16[2,256,128], index: 16, kind: output, shape index: {}]
  %s17 = sld [smem:[#allocation0]]
  $region101: #{tpu_custom_call.1} parent=0
    _
  %s19 = ssub.s32 1, %s17
  %s20 = scalar_select 0, %s19, %s17
  $region1: #{tpu_custom_call.1} parent=0
    #allocation4 [shape = 'u8[131072]{0}', space=vmem, size = 0x20000, scoped, tag = 'input window, operand 0']
    #allocation5 [shape = 's32[2]{0}', space=sflag, size = 0x8, scoped, tag = 'scoped memory for tpu_custom_call.1']
    #allocation6 [shape = 's32[2]{0}', space=sflag, size = 0x8, scoped, tag = 'scoped memory for tpu_custom_call.1']
    #allocation7 [shape = 'u8[131072]{0}', space=vmem, size = 0x20000, scoped, tag = 'output window, operand 0']
    %21 = vsyncpa [#allocation5], 0
    %s22 = scalar_lea.sflag [#allocation5], 1
    %23 = vsyncpa %s22, 0
    %24 = vsyncpa [#allocation6], 0
    %s25 = scalar_lea.sflag [#allocation6], 1
    %26 = vsyncpa %s25, 0
    loop: start=0, step=1, limit=4
    $region2: #{tpu_custom_call.1} parent=1 // loop_pre_header
      _
    $region3: #{tpu_custom_call.1} parent=1 // loop_header
      %s28 = sphi 0, %s32
      %p29 = scmp.ge.s32.totalorder %s28, 4
      %s38 = sphi 0, %s40
      %s41 = sphi 0, %s38
      %s42 = sphi 0, %s41
      %s58 = sphi 0, %s42
      %s62 = sphi 0, %s62
      %s64 = sphi 0, %s62
      %s65 = sphi 0, %s64
      %s79 = sphi 0, %s65
      %s83 = sphi 0, %s83
      %s85 = sphi 0, %s83
      %s86 = sphi 0, %s85
      %s100 = sphi 0, %s86
      %s104 = sphi 0, %s104
      %s106 = sphi 0, %s104
      %s107 = sphi 0, %s106
      %s121 = sphi 0, %s107
      %s125 = sphi 0, %s125
      %s127 = sphi 0, %s125
      %s128 = sphi 0, %s127
      %s142 = sphi 0, %s128
      %s146 = sphi 0, %s146
      %s148 = sphi 0, %s146
      %s149 = sphi 0, %s148
      %s163 = sphi 0, %s149
      %s167 = sphi 0, %s167
      %s169 = sphi 0, %s167
      %s170 = sphi 0, %s169
      %s184 = sphi 0, %s170
      %s188 = sphi 0, %s188
      %s190 = sphi 0, %s188
      %s191 = sphi 0, %s190
      %s205 = sphi 0, %s191
      %s209 = sphi 0, %s209
      %s211 = sphi 0, %s209
      %s212 = sphi 0, %s211
      %s226 = sphi 0, %s212
      %s230 = sphi 0, %s230
      %s232 = sphi 0, %s230
      %s233 = sphi 0, %s232
      %s247 = sphi 0, %s233
      %s251 = sphi 0, %s251
      %s253 = sphi 0, %s251
      %s254 = sphi 0, %s253
      %s268 = sphi 0, %s254
      %s272 = sphi 0, %s272
      %s274 = sphi 0, %s272
      %s275 = sphi 0, %s274
      %s289 = sphi 0, %s275
      %s293 = sphi 0, %s293
      %s295 = sphi 0, %s293
      %s296 = sphi 0, %s295
      %s310 = sphi 0, %s296
      %s314 = sphi 0, %s314
      %s316 = sphi 0, %s314
      %s317 = sphi 0, %s316
      %s331 = sphi 0, %s317
      %s335 = sphi 0, %s335
      %s337 = sphi 0, %s335
      %s338 = sphi 0, %s337
      %s352 = sphi 0, %s338
      %s356 = sphi 0, %s356
      %s358 = sphi 0, %s356
      %s359 = sphi 0, %s358
      %s373 = sphi 0, %s359
      %s379 = sphi 0, %s381
      %s382 = sphi 0, %s379
      %s383 = sphi 0, %s382
      %s399 = sphi 0, %s383
    $region4: #{tpu_custom_call.1} parent=1 // loop_header_branch
      %31 = sbr.rel (%p29) target = $region8
    $region5: #{tpu_custom_call.1} parent=1 // loop_body
      %s33 = ssub.s32 %s28, 1
      %s34 = ssub.s32 %s28, 2
      %s35 = sadd.s32 %s28, 1
      %s36 = ssub.s32 %s28, %s35
      %p37 = scmp.eq.s32.totalorder %s36, 0
      %s39 = sadd.s32 %s38, 1
      %s40 = scalar_select %p37, %s38, %s39
      %p43 = pneg %p37
      %p44 = scmp.eq.s32.totalorder %s28, 1
      %p45 = por %p43, %p44
      %p46 = scmp.ne.s32.totalorder %s38, %s41
      %p47 = scmp.eq.s32.totalorder %s28, 0
      %p48 = por %p46, %p47
      %p49 = scmp.ne.s32.totalorder %s38, %s41
      %p50 = scmp.eq.s32.totalorder %s33, 1
      %p51 = por %p49, %p50
      %p52 = scmp.ne.s32.totalorder %s41, %s42
      %p53 = scmp.eq.s32.totalorder %s33, 0
      %p54 = por %p52, %p53
      %p55 = scmp.ne.s32.totalorder %s41, %s42
      %p56 = scmp.eq.s32.totalorder %s34, 1
      %p57 = por %p55, %p56
      %p59 = scmp.ne.s32.totalorder %s42, %s58
      %p60 = scmp.eq.s32.totalorder %s34, 0
      %p61 = por %p59, %p60
      %s63 = sadd.s32 %s62, 1
      %p66 = scmp.eq.s32.totalorder %s28, 1
      %p67 = scmp.ne.s32.totalorder %s62, %s64
      %p68 = scmp.eq.s32.totalorder %s28, 0
      %p69 = por %p67, %p68
      %p70 = scmp.ne.s32.totalorder %s62, %s64
      %p71 = scmp.eq.s32.totalorder %s33, 1
      %p72 = por %p70, %p71
      %p73 = scmp.ne.s32.totalorder %s64, %s65
      %p74 = scmp.eq.s32.totalorder %s33, 0
      %p75 = por %p73, %p74
      %p76 = scmp.ne.s32.totalorder %s64, %s65
      %p77 = scmp.eq.s32.totalorder %s34, 1
      %p78 = por %p76, %p77
      %p80 = scmp.ne.s32.totalorder %s65, %s79
      %p81 = scmp.eq.s32.totalorder %s34, 0
      %p82 = por %p80, %p81
      %s84 = sadd.s32 %s83, 1
      %p87 = scmp.eq.s32.totalorder %s28, 1
      %p88 = scmp.ne.s32.totalorder %s83, %s85
      %p89 = scmp.eq.s32.totalorder %s28, 0
      %p90 = por %p88, %p89
      %p91 = scmp.ne.s32.totalorder %s83, %s85
      %p92 = scmp.eq.s32.totalorder %s33, 1
      %p93 = por %p91, %p92
      %p94 = scmp.ne.s32.totalorder %s85, %s86
      %p95 = scmp.eq.s32.totalorder %s33, 0
      %p96 = por %p94, %p95
      %p97 = scmp.ne.s32.totalorder %s85, %s86
      %p98 = scmp.eq.s32.totalorder %s34, 1
      %p99 = por %p97, %p98
      %p101 = scmp.ne.s32.totalorder %s86, %s100
      %p102 = scmp.eq.s32.totalorder %s34, 0
      %p103 = por %p101, %p102
      %s105 = sadd.s32 %s104, 1
      %p108 = scmp.eq.s32.totalorder %s28, 1
      %p109 = scmp.ne.s32.totalorder %s104, %s106
      %p110 = scmp.eq.s32.totalorder %s28, 0
      %p111 = por %p109, %p110
      %p112 = scmp.ne.s32.totalorder %s104, %s106
      %p113 = scmp.eq.s32.totalorder %s33, 1
      %p114 = por %p112, %p113
      %p115 = scmp.ne.s32.totalorder %s106, %s107
      %p116 = scmp.eq.s32.totalorder %s33, 0
      %p117 = por %p115, %p116
      %p118 = scmp.ne.s32.totalorder %s106, %s107
      %p119 = scmp.eq.s32.totalorder %s34, 1
      %p120 = por %p118, %p119
      %p122 = scmp.ne.s32.totalorder %s107, %s121
      %p123 = scmp.eq.s32.totalorder %s34, 0
      %p124 = por %p122, %p123
      %s126 = sadd.s32 %s125, 1
      %p129 = scmp.eq.s32.totalorder %s28, 1
      %p130 = scmp.ne.s32.totalorder %s125, %s127
      %p131 = scmp.eq.s32.totalorder %s28, 0
      %p132 = por %p130, %p131
      %p133 = scmp.ne.s32.totalorder %s125, %s127
      %p134 = scmp.eq.s32.totalorder %s33, 1
      %p135 = por %p133, %p134
      %p136 = scmp.ne.s32.totalorder %s127, %s128
      %p137 = scmp.eq.s32.totalorder %s33, 0
      %p138 = por %p136, %p137
      %p139 = scmp.ne.s32.totalorder %s127, %s128
      %p140 = scmp.eq.s32.totalorder %s34, 1
      %p141 = por %p139, %p140
      %p143 = scmp.ne.s32.totalorder %s128, %s142
      %p144 = scmp.eq.s32.totalorder %s34, 0
      %p145 = por %p143, %p144
      %s147 = sadd.s32 %s146, 1
      %p150 = scmp.eq.s32.totalorder %s28, 1
      %p151 = scmp.ne.s32.totalorder %s146, %s148
      %p152 = scmp.eq.s32.totalorder %s28, 0
      %p153 = por %p151, %p152
      %p154 = scmp.ne.s32.totalorder %s146, %s148
      %p155 = scmp.eq.s32.totalorder %s33, 1
      %p156 = por %p154, %p155
      %p157 = scmp.ne.s32.totalorder %s148, %s149
      %p158 = scmp.eq.s32.totalorder %s33, 0
      %p159 = por %p157, %p158
      %p160 = scmp.ne.s32.totalorder %s148, %s149
      %p161 = scmp.eq.s32.totalorder %s34, 1
      %p162 = por %p160, %p161
      %p164 = scmp.ne.s32.totalorder %s149, %s163
      %p165 = scmp.eq.s32.totalorder %s34, 0
      %p166 = por %p164, %p165
      %s168 = sadd.s32 %s167, 1
      %p171 = scmp.eq.s32.totalorder %s28, 1
      %p172 = scmp.ne.s32.totalorder %s167, %s169
      %p173 = scmp.eq.s32.totalorder %s28, 0
      %p174 = por %p172, %p173
      %p175 = scmp.ne.s32.totalorder %s167, %s169
      %p176 = scmp.eq.s32.totalorder %s33, 1
      %p177 = por %p175, %p176
      %p178 = scmp.ne.s32.totalorder %s169, %s170
      %p179 = scmp.eq.s32.totalorder %s33, 0
      %p180 = por %p178, %p179
      %p181 = scmp.ne.s32.totalorder %s169, %s170
      %p182 = scmp.eq.s32.totalorder %s34, 1
      %p183 = por %p181, %p182
      %p185 = scmp.ne.s32.totalorder %s170, %s184
      %p186 = scmp.eq.s32.totalorder %s34, 0
      %p187 = por %p185, %p186
      %s189 = sadd.s32 %s188, 1
      %p192 = scmp.eq.s32.totalorder %s28, 1
      %p193 = scmp.ne.s32.totalorder %s188, %s190
      %p194 = scmp.eq.s32.totalorder %s28, 0
      %p195 = por %p193, %p194
      %p196 = scmp.ne.s32.totalorder %s188, %s190
      %p197 = scmp.eq.s32.totalorder %s33, 1
      %p198 = por %p196, %p197
      %p199 = scmp.ne.s32.totalorder %s190, %s191
      %p200 = scmp.eq.s32.totalorder %s33, 0
      %p201 = por %p199, %p200
      %p202 = scmp.ne.s32.totalorder %s190, %s191
      %p203 = scmp.eq.s32.totalorder %s34, 1
      %p204 = por %p202, %p203
      %p206 = scmp.ne.s32.totalorder %s191, %s205
      %p207 = scmp.eq.s32.totalorder %s34, 0
      %p208 = por %p206, %p207
      %s210 = sadd.s32 %s209, 1
      %p213 = scmp.eq.s32.totalorder %s28, 1
      %p214 = scmp.ne.s32.totalorder %s209, %s211
      %p215 = scmp.eq.s32.totalorder %s28, 0
      %p216 = por %p214, %p215
      %p217 = scmp.ne.s32.totalorder %s209, %s211
      %p218 = scmp.eq.s32.totalorder %s33, 1
      %p219 = por %p217, %p218
      %p220 = scmp.ne.s32.totalorder %s211, %s212
      %p221 = scmp.eq.s32.totalorder %s33, 0
      %p222 = por %p220, %p221
      %p223 = scmp.ne.s32.totalorder %s211, %s212
      %p224 = scmp.eq.s32.totalorder %s34, 1
      %p225 = por %p223, %p224
      %p227 = scmp.ne.s32.totalorder %s212, %s226
      %p228 = scmp.eq.s32.totalorder %s34, 0
      %p229 = por %p227, %p228
      %s231 = sadd.s32 %s230, 1
      %p234 = scmp.eq.s32.totalorder %s28, 1
      %p235 = scmp.ne.s32.totalorder %s230, %s232
      %p236 = scmp.eq.s32.totalorder %s28, 0
      %p237 = por %p235, %p236
      %p238 = scmp.ne.s32.totalorder %s230, %s232
      %p239 = scmp.eq.s32.totalorder %s33, 1
      %p240 = por %p238, %p239
      %p241 = scmp.ne.s32.totalorder %s232, %s233
      %p242 = scmp.eq.s32.totalorder %s33, 0
      %p243 = por %p241, %p242
      %p244 = scmp.ne.s32.totalorder %s232, %s233
      %p245 = scmp.eq.s32.totalorder %s34, 1
      %p246 = por %p244, %p245
      %p248 = scmp.ne.s32.totalorder %s233, %s247
      %p249 = scmp.eq.s32.totalorder %s34, 0
      %p250 = por %p248, %p249
      %s252 = sadd.s32 %s251, 1
      %p255 = scmp.eq.s32.totalorder %s28, 1
      %p256 = scmp.ne.s32.totalorder %s251, %s253
      %p257 = scmp.eq.s32.totalorder %s28, 0
      %p258 = por %p256, %p257
      %p259 = scmp.ne.s32.totalorder %s251, %s253
      %p260 = scmp.eq.s32.totalorder %s33, 1
      %p261 = por %p259, %p260
      %p262 = scmp.ne.s32.totalorder %s253, %s254
      %p263 = scmp.eq.s32.totalorder %s33, 0
      %p264 = por %p262, %p263
      %p265 = scmp.ne.s32.totalorder %s253, %s254
      %p266 = scmp.eq.s32.totalorder %s34, 1
      %p267 = por %p265, %p266
      %p269 = scmp.ne.s32.totalorder %s254, %s268
      %p270 = scmp.eq.s32.totalorder %s34, 0
      %p271 = por %p269, %p270
      %s273 = sadd.s32 %s272, 1
      %p276 = scmp.eq.s32.totalorder %s28, 1
      %p277 = scmp.ne.s32.totalorder %s272, %s274
      %p278 = scmp.eq.s32.totalorder %s28, 0
      %p279 = por %p277, %p278
      %p280 = scmp.ne.s32.totalorder %s272, %s274
      %p281 = scmp.eq.s32.totalorder %s33, 1
      %p282 = por %p280, %p281
      %p283 = scmp.ne.s32.totalorder %s274, %s275
      %p284 = scmp.eq.s32.totalorder %s33, 0
      %p285 = por %p283, %p284
      %p286 = scmp.ne.s32.totalorder %s274, %s275
      %p287 = scmp.eq.s32.totalorder %s34, 1
      %p288 = por %p286, %p287
      %p290 = scmp.ne.s32.totalorder %s275, %s289
      %p291 = scmp.eq.s32.totalorder %s34, 0
      %p292 = por %p290, %p291
      %s294 = sadd.s32 %s293, 1
      %p297 = scmp.eq.s32.totalorder %s28, 1
      %p298 = scmp.ne.s32.totalorder %s293, %s295
      %p299 = scmp.eq.s32.totalorder %s28, 0
      %p300 = por %p298, %p299
      %p301 = scmp.ne.s32.totalorder %s293, %s295
      %p302 = scmp.eq.s32.totalorder %s33, 1
      %p303 = por %p301, %p302
      %p304 = scmp.ne.s32.totalorder %s295, %s296
      %p305 = scmp.eq.s32.totalorder %s33, 0
      %p306 = por %p304, %p305
      %p307 = scmp.ne.s32.totalorder %s295, %s296
      %p308 = scmp.eq.s32.totalorder %s34, 1
      %p309 = por %p307, %p308
      %p311 = scmp.ne.s32.totalorder %s296, %s310
      %p312 = scmp.eq.s32.totalorder %s34, 0
      %p313 = por %p311, %p312
      %s315 = sadd.s32 %s314, 1
      %p318 = scmp.eq.s32.totalorder %s28, 1
      %p319 = scmp.ne.s32.totalorder %s314, %s316
      %p320 = scmp.eq.s32.totalorder %s28, 0
      %p321 = por %p319, %p320
      %p322 = scmp.ne.s32.totalorder %s314, %s316
      %p323 = scmp.eq.s32.totalorder %s33, 1
      %p324 = por %p322, %p323
      %p325 = scmp.ne.s32.totalorder %s316, %s317
      %p326 = scmp.eq.s32.totalorder %s33, 0
      %p327 = por %p325, %p326
      %p328 = scmp.ne.s32.totalorder %s316, %s317
      %p329 = scmp.eq.s32.totalorder %s34, 1
      %p330 = por %p328, %p329
      %p332 = scmp.ne.s32.totalorder %s317, %s331
      %p333 = scmp.eq.s32.totalorder %s34, 0
      %p334 = por %p332, %p333
      %s336 = sadd.s32 %s335, 1
      %p339 = scmp.eq.s32.totalorder %s28, 1
      %p340 = scmp.ne.s32.totalorder %s335, %s337
      %p341 = scmp.eq.s32.totalorder %s28, 0
      %p342 = por %p340, %p341
      %p343 = scmp.ne.s32.totalorder %s335, %s337
      %p344 = scmp.eq.s32.totalorder %s33, 1
      %p345 = por %p343, %p344
      %p346 = scmp.ne.s32.totalorder %s337, %s338
      %p347 = scmp.eq.s32.totalorder %s33, 0
      %p348 = por %p346, %p347
      %p349 = scmp.ne.s32.totalorder %s337, %s338
      %p350 = scmp.eq.s32.totalorder %s34, 1
      %p351 = por %p349, %p350
      %p353 = scmp.ne.s32.totalorder %s338, %s352
      %p354 = scmp.eq.s32.totalorder %s34, 0
      %p355 = por %p353, %p354
      %s357 = sadd.s32 %s356, 1
      %p360 = scmp.eq.s32.totalorder %s28, 1
      %p361 = scmp.ne.s32.totalorder %s356, %s358
      %p362 = scmp.eq.s32.totalorder %s28, 0
      %p363 = por %p361, %p362
      %p364 = scmp.ne.s32.totalorder %s356, %s358
      %p365 = scmp.eq.s32.totalorder %s33, 1
      %p366 = por %p364, %p365
      %p367 = scmp.ne.s32.totalorder %s358, %s359
      %p368 = scmp.eq.s32.totalorder %s33, 0
      %p369 = por %p367, %p368
      %p370 = scmp.ne.s32.totalorder %s358, %s359
      %p371 = scmp.eq.s32.totalorder %s34, 1
      %p372 = por %p370, %p371
      %p374 = scmp.ne.s32.totalorder %s359, %s373
      %p375 = scmp.eq.s32.totalorder %s34, 0
      %p376 = por %p374, %p375
      %s377 = ssub.s32 %s28, %s35
      %p378 = scmp.eq.s32.totalorder %s377, 0
      %s380 = sadd.s32 %s379, 1
      %s381 = scalar_select %p378, %s379, %s380
      %p384 = pneg %p378
      %p385 = scmp.eq.s32.totalorder %s28, 1
      %p386 = por %p384, %p385
      %p387 = scmp.ne.s32.totalorder %s379, %s382
      %p388 = scmp.eq.s32.totalorder %s28, 0
      %p389 = por %p387, %p388
      %p390 = scmp.ne.s32.totalorder %s379, %s382
      %p391 = scmp.eq.s32.totalorder %s33, 1
      %p392 = por %p390, %p391
      %p393 = scmp.ne.s32.totalorder %s382, %s383
      %p394 = scmp.eq.s32.totalorder %s33, 0
      %p395 = por %p393, %p394
      %p396 = scmp.ne.s32.totalorder %s382, %s383
      %p397 = scmp.eq.s32.totalorder %s34, 1
      %p398 = por %p396, %p397
      %p400 = scmp.ne.s32.totalorder %s383, %s399
      %p401 = scmp.eq.s32.totalorder %s34, 0
      %p402 = por %p400, %p401
      %p403 = scmp.le.s32.totalorder 1, %s28
      %p404 = scmp.lt.s32.totalorder %s28, 3
      %p405 = pnand %p403, %p404
      %p406 = pneg %p405
      // Predicated region
      $region9: #{tpu_custom_call.1} parent=5 // pred_check
        _
      $region10: #{tpu_custom_call.1} parent=5 // pred_check_branch
        %408 = sbr.rel (%p405) target = $region12
      $region11: #{tpu_custom_call.1} parent=5 // pred_region
        %s409 = ssub.s32 %s28, 1
        // Predicated region
        $region13: #{tpu_custom_call.1} parent=11 // pred_check
          %p410 = pneg %p75
        $region14: #{tpu_custom_call.1} parent=11 // pred_check_branch
          %412 = sbr.rel (%p410) target = $region16
        $region15: #{tpu_custom_call.1} parent=11 // pred_region
          _
        $region16: #{tpu_custom_call.1} parent=11 // pred_fallthru
          _
        // Predicated region
        $region17: #{tpu_custom_call.1} parent=11 // pred_check
          %p413 = pneg %p96
        $region18: #{tpu_custom_call.1} parent=11 // pred_check_branch
          %415 = sbr.rel (%p413) target = $region20
        $region19: #{tpu_custom_call.1} parent=11 // pred_region
          _
        $region20: #{tpu_custom_call.1} parent=11 // pred_fallthru
          _
        // Predicated region
        $region21: #{tpu_custom_call.1} parent=11 // pred_check
          %p416 = pneg %p117
        $region22: #{tpu_custom_call.1} parent=11 // pred_check_branch
          %418 = sbr.rel (%p416) target = $region24
        $region23: #{tpu_custom_call.1} parent=11 // pred_region
          _
        $region24: #{tpu_custom_call.1} parent=11 // pred_fallthru
          _
        // Predicated region
        $region25: #{tpu_custom_call.1} parent=11 // pred_check
          %p419 = pneg %p138
        $region26: #{tpu_custom_call.1} parent=11 // pred_check_branch
          %421 = sbr.rel (%p419) target = $region28
        $region27: #{tpu_custom_call.1} parent=11 // pred_region
          _
        $region28: #{tpu_custom_call.1} parent=11 // pred_fallthru
          _
        // Predicated region
        $region29: #{tpu_custom_call.1} parent=11 // pred_check
          %p422 = pneg %p159
        $region30: #{tpu_custom_call.1} parent=11 // pred_check_branch
          %424 = sbr.rel (%p422) target = $region32
        $region31: #{tpu_custom_call.1} parent=11 // pred_region
          _
        $region32: #{tpu_custom_call.1} parent=11 // pred_fallthru
          _
        // Predicated region
        $region33: #{tpu_custom_call.1} parent=11 // pred_check
          %p425 = pneg %p180
        $region34: #{tpu_custom_call.1} parent=11 // pred_check_branch
          %427 = sbr.rel (%p425) target = $region36
        $region35: #{tpu_custom_call.1} parent=11 // pred_region
          _
        $region36: #{tpu_custom_call.1} parent=11 // pred_fallthru
          _
        // Predicated region
        $region37: #{tpu_custom_call.1} parent=11 // pred_check
          %p428 = pneg %p201
        $region38: #{tpu_custom_call.1} parent=11 // pred_check_branch
          %430 = sbr.rel (%p428) target = $region40
        $region39: #{tpu_custom_call.1} parent=11 // pred_region
          _
        $region40: #{tpu_custom_call.1} parent=11 // pred_fallthru
          _
        // Predicated region
        $region41: #{tpu_custom_call.1} parent=11 // pred_check
          %p431 = pneg %p222
        $region42: #{tpu_custom_call.1} parent=11 // pred_check_branch
          %433 = sbr.rel (%p431) target = $region44
        $region43: #{tpu_custom_call.1} parent=11 // pred_region
          _
        $region44: #{tpu_custom_call.1} parent=11 // pred_fallthru
          _
        // Predicated region
        $region45: #{tpu_custom_call.1} parent=11 // pred_check
          %p434 = pneg %p243
        $region46: #{tpu_custom_call.1} parent=11 // pred_check_branch
          %436 = sbr.rel (%p434) target = $region48
        $region47: #{tpu_custom_call.1} parent=11 // pred_region
          _
        $region48: #{tpu_custom_call.1} parent=11 // pred_fallthru
          _
        // Predicated region
        $region49: #{tpu_custom_call.1} parent=11 // pred_check
          %p437 = pneg %p264
        $region50: #{tpu_custom_call.1} parent=11 // pred_check_branch
          %439 = sbr.rel (%p437) target = $region52
        $region51: #{tpu_custom_call.1} parent=11 // pred_region
          _
        $region52: #{tpu_custom_call.1} parent=11 // pred_fallthru
          _
        // Predicated region
        $region53: #{tpu_custom_call.1} parent=11 // pred_check
          %p440 = pneg %p285
        $region54: #{tpu_custom_call.1} parent=11 // pred_check_branch
          %442 = sbr.rel (%p440) target = $region56
        $region55: #{tpu_custom_call.1} parent=11 // pred_region
          _
        $region56: #{tpu_custom_call.1} parent=11 // pred_fallthru
          _
        // Predicated region
        $region57: #{tpu_custom_call.1} parent=11 // pred_check
          %p443 = pneg %p306
        $region58: #{tpu_custom_call.1} parent=11 // pred_check_branch
          %445 = sbr.rel (%p443) target = $region60
        $region59: #{tpu_custom_call.1} parent=11 // pred_region
          _
        $region60: #{tpu_custom_call.1} parent=11 // pred_fallthru
          _
        // Predicated region
        $region61: #{tpu_custom_call.1} parent=11 // pred_check
          %p446 = pneg %p327
        $region62: #{tpu_custom_call.1} parent=11 // pred_check_branch
          %448 = sbr.rel (%p446) target = $region64
        $region63: #{tpu_custom_call.1} parent=11 // pred_region
          _
        $region64: #{tpu_custom_call.1} parent=11 // pred_fallthru
          _
        // Predicated region
        $region65: #{tpu_custom_call.1} parent=11 // pred_check
          %p449 = pneg %p348
        $region66: #{tpu_custom_call.1} parent=11 // pred_check_branch
          %451 = sbr.rel (%p449) target = $region68
        $region67: #{tpu_custom_call.1} parent=11 // pred_region
          _
        $region68: #{tpu_custom_call.1} parent=11 // pred_fallthru
          _
        // Predicated region
        $region69: #{tpu_custom_call.1} parent=11 // pred_check
          %p452 = pneg %p369
        $region70: #{tpu_custom_call.1} parent=11 // pred_check_branch
          %454 = sbr.rel (%p452) target = $region72
        $region71: #{tpu_custom_call.1} parent=11 // pred_region
          _
        $region72: #{tpu_custom_call.1} parent=11 // pred_fallthru
          _
      $region12: #{tpu_custom_call.1} parent=5 // pred_fallthru
        _
      %p455 = scmp.lt.s32.totalorder %s28, 2
      // Predicated region
      $region73: #{tpu_custom_call.1} parent=5 // pred_check
        %p456 = pneg %p455
      $region74: #{tpu_custom_call.1} parent=5 // pred_check_branch
        %458 = sbr.rel (%p456) target = $region76
      $region75: #{tpu_custom_call.1} parent=5 // pred_region
        // Predicated region
        $region77: #{tpu_custom_call.1} parent=75 // pred_check
          %p459 = pneg %p48
        $region78: #{tpu_custom_call.1} parent=75 // pred_check_branch
          %461 = sbr.rel (%p459) target = $region80
        $region79: #{tpu_custom_call.1} parent=75 // pred_region
          %s462 = sand.u32 %s38, 1
          %s463 = scalar_lea.sflag [#allocation5], %s462
          %s464 = sand.u32 %s38, 1
          %s465 = smul.addr %s464, 128
          %s466 = scalar_lea.vmem [#allocation4], %s465
          %s468 = ssub.s32 2048, 2048
          %469 = vsyncadd %s463, %s468
          %s470 = smul.addr %s28, 32
          %s471 = smul.addr %s470, 64
          %s472 = scalar_lea.hbm %s0, %s471
          %s473 = sshll.u32 %s466, 4
          %s474 = int_to_ptr.vmem [resolvable:$true] %s473
          %479 = dma.hbm_to_vmem [thread:$0]  %s472, 2048, %s474, %s463, 64, 64, 4
        $region80: #{tpu_custom_call.1} parent=75 // pred_fallthru
          _
      $region76: #{tpu_custom_call.1} parent=5 // pred_fallthru
        _
      %p480 = scmp.le.s32.totalorder 1, %s28
      %p481 = scmp.lt.s32.totalorder %s28, 3
      %p482 = pnand %p480, %p481
      %p483 = pneg %p482
      // Predicated region
      $region81: #{tpu_custom_call.1} parent=5 // pred_check
        _
      $region82: #{tpu_custom_call.1} parent=5 // pred_check_branch
        %485 = sbr.rel (%p482) target = $region84
      $region83: #{tpu_custom_call.1} parent=5 // pred_region
        %s486 = ssub.s32 %s28, 1
        %s487 = sand.u32 %s41, 1
        %s488 = scalar_lea.sflag [#allocation5], %s487
        %s489 = sand.u32 %s41, 1
        %s490 = smul.addr %s489, 128
        %s491 = scalar_lea.vmem [#allocation4], %s490
        // Predicated region
        $region85: #{tpu_custom_call.1} parent=83 // pred_check
          %p492 = pneg %p54
        $region86: #{tpu_custom_call.1} parent=83 // pred_check_branch
          %494 = sbr.rel (%p492) target = $region88
        $region87: #{tpu_custom_call.1} parent=83 // pred_region
          %495 = dma.done %s488, 2048
        $region88: #{tpu_custom_call.1} parent=83 // pred_fallthru
          _
        %s496 = sand.u32 %s41, 1
        %s497 = scalar_lea.sflag [#allocation5], %s496
        %s498 = sand.u32 %s41, 1
        %s499 = smul.addr %s498, 128
        %s500 = scalar_lea.vmem [#allocation4], %s499
        %p501 = pneg %p54
        %p502 = pneg %p51
        %p503 = pneg %p75
        %p504 = pneg %p72
        %p505 = pneg %p96
        %p506 = pneg %p93
        %p507 = pneg %p117
        %p508 = pneg %p114
        %p509 = pneg %p138
        %p510 = pneg %p135
        %p511 = pneg %p159
        %p512 = pneg %p156
        %p513 = pneg %p180
        %p514 = pneg %p177
        %p515 = pneg %p201
        %p516 = pneg %p198
        %p517 = pneg %p222
        %p518 = pneg %p219
        %p519 = pneg %p243
        %p520 = pneg %p240
        %p521 = pneg %p264
        %p522 = pneg %p261
        %p523 = pneg %p285
        %p524 = pneg %p282
        %p525 = pneg %p306
        %p526 = pneg %p303
        %p527 = pneg %p327
        %p528 = pneg %p324
        %p529 = pneg %p348
        %p530 = pneg %p345
        %p531 = pneg %p369
        %p532 = pneg %p366
        %p533 = pneg %p395
        %p534 = pneg %p392
        %s535 = sand.u32 %s382, 1
        %s536 = scalar_lea.sflag [#allocation6], %s535
        %s537 = sand.u32 %s382, 1
        %s538 = smul.addr %s537, 128
        %s539 = scalar_lea.vmem [#allocation7], %s538
        %v541 = vld [vmem:[%s491] sm:$0xf]
        %v542 = vld [vmem:[%s491 + $0x4] sm:$0xf]
        %v543 = vld [vmem:[%s491 + $0x8] sm:$0xf]
        %v544 = vld [vmem:[%s491 + $0xc] sm:$0xf]
        %v545 = vld [vmem:[%s491 + $0x10] sm:$0xf]
        %v546 = vld [vmem:[%s491 + $0x14] sm:$0xf]
        %v547 = vld [vmem:[%s491 + $0x18] sm:$0xf]
        %v548 = vld [vmem:[%s491 + $0x1c] sm:$0xf]
        %v549 = vld [vmem:[%s491 + $0x20] sm:$0xf]
        %v550 = vld [vmem:[%s491 + $0x24] sm:$0xf]
        %v551 = vld [vmem:[%s491 + $0x28] sm:$0xf]
        %v552 = vld [vmem:[%s491 + $0x2c] sm:$0xf]
        %v553 = vld [vmem:[%s491 + $0x30] sm:$0xf]
        %v554 = vld [vmem:[%s491 + $0x34] sm:$0xf]
        %v555 = vld [vmem:[%s491 + $0x38] sm:$0xf]
        %v556 = vld [vmem:[%s491 + $0x3c] sm:$0xf]
        %v557 = vld [vmem:[%s491 + $0x40] sm:$0xf]
        %v558 = vld [vmem:[%s491 + $0x44] sm:$0xf]
        %v559 = vld [vmem:[%s491 + $0x48] sm:$0xf]
        %v560 = vld [vmem:[%s491 + $0x4c] sm:$0xf]
        %v561 = vld [vmem:[%s491 + $0x50] sm:$0xf]
        %v562 = vld [vmem:[%s491 + $0x54] sm:$0xf]
        %v563 = vld [vmem:[%s491 + $0x58] sm:$0xf]
        %v564 = vld [vmem:[%s491 + $0x5c] sm:$0xf]
        %v565 = vld [vmem:[%s491 + $0x60] sm:$0xf]
        %v566 = vld [vmem:[%s491 + $0x64] sm:$0xf]
        %v567 = vld [vmem:[%s491 + $0x68] sm:$0xf]
        %v568 = vld [vmem:[%s491 + $0x6c] sm:$0xf]
        %v569 = vld [vmem:[%s491 + $0x70] sm:$0xf]
        %v570 = vld [vmem:[%s491 + $0x74] sm:$0xf]
        %v571 = vld [vmem:[%s491 + $0x78] sm:$0xf]
        %v572 = vld [vmem:[%s491 + $0x7c] sm:$0xf]
        %v573 = vld [vmem:[%s1] sm:$0xf]
        %v574 = vld [vmem:[%s1 + $0x4] sm:$0xf]
        %v575 = vld [vmem:[%s1 + $0x8] sm:$0xf]
        %v576 = vld [vmem:[%s1 + $0xc] sm:$0xf]
        %v577 = vld [vmem:[%s1 + $0x10] sm:$0xf]
        %v578 = vld [vmem:[%s1 + $0x14] sm:$0xf]
        %v579 = vld [vmem:[%s1 + $0x18] sm:$0xf]
        %v580 = vld [vmem:[%s1 + $0x1c] sm:$0xf]
        %v581 = vld [vmem:[%s1 + $0x20] sm:$0xf]
        %v582 = vld [vmem:[%s1 + $0x24] sm:$0xf]
        %v583 = vld [vmem:[%s1 + $0x28] sm:$0xf]
        %v584 = vld [vmem:[%s1 + $0x2c] sm:$0xf]
        %v585 = vld [vmem:[%s1 + $0x30] sm:$0xf]
        %v586 = vld [vmem:[%s1 + $0x34] sm:$0xf]
        %v587 = vld [vmem:[%s1 + $0x38] sm:$0xf]
        %v588 = vld [vmem:[%s1 + $0x3c] sm:$0xf]
        %v621 = vunpack.c.l.b16 %v541
        %v622 = vunpack.c.l.b16 %v542
        %v623 = vunpack.c.l.b16 %v543
        %v624 = vunpack.c.l.b16 %v544
        %v625 = vunpack.c.l.b16 %v545
        %v626 = vunpack.c.l.b16 %v546
        %v627 = vunpack.c.l.b16 %v547
        %v628 = vunpack.c.l.b16 %v548
        %v629 = vunpack.c.l.b16 %v549
        %v630 = vunpack.c.l.b16 %v550
        %v631 = vunpack.c.l.b16 %v551
        %v632 = vunpack.c.l.b16 %v552
        %v633 = vunpack.c.l.b16 %v553
        %v634 = vunpack.c.l.b16 %v554
        %v635 = vunpack.c.l.b16 %v555
        %v636 = vunpack.c.l.b16 %v556
        %v637 = vunpack.c.l.b16 %v557
        %v638 = vunpack.c.l.b16 %v558
        %v639 = vunpack.c.l.b16 %v559
        %v640 = vunpack.c.l.b16 %v560
        %v641 = vunpack.c.l.b16 %v561
        %v642 = vunpack.c.l.b16 %v562
        %v643 = vunpack.c.l.b16 %v563
        %v644 = vunpack.c.l.b16 %v564
        %v645 = vunpack.c.l.b16 %v565
        %v646 = vunpack.c.l.b16 %v566
        %v647 = vunpack.c.l.b16 %v567
        %v648 = vunpack.c.l.b16 %v568
        %v649 = vunpack.c.l.b16 %v569
        %v650 = vunpack.c.l.b16 %v570
        %v651 = vunpack.c.l.b16 %v571
        %v652 = vunpack.c.l.b16 %v572
        %v653 = vpack.c.b16 %v622, %v621
        %v654 = vpack.c.b16 %v624, %v623
        %v655 = vpack.c.b16 %v626, %v625
        %v656 = vpack.c.b16 %v628, %v627
        %v657 = vpack.c.b16 %v630, %v629
        %v658 = vpack.c.b16 %v632, %v631
        %v659 = vpack.c.b16 %v634, %v633
        %v660 = vpack.c.b16 %v636, %v635
        %v661 = vpack.c.b16 %v638, %v637
        %v662 = vpack.c.b16 %v640, %v639
        %v663 = vpack.c.b16 %v642, %v641
        %v664 = vpack.c.b16 %v644, %v643
        %v665 = vpack.c.b16 %v646, %v645
        %v666 = vpack.c.b16 %v648, %v647
        %v667 = vpack.c.b16 %v650, %v649
        %v668 = vpack.c.b16 %v652, %v651
        %v701 = vunpack.c.l.b16 %v573
        %v702 = vunpack.c.l.b16 %v574
        %v703 = vunpack.c.l.b16 %v575
        %v704 = vunpack.c.l.b16 %v576
        %v705 = vunpack.c.l.b16 %v577
        %v706 = vunpack.c.l.b16 %v578
        %v707 = vunpack.c.l.b16 %v579
        %v708 = vunpack.c.l.b16 %v580
        %v709 = vunpack.c.l.b16 %v581
        %v710 = vunpack.c.l.b16 %v582
        %v711 = vunpack.c.l.b16 %v583
        %v712 = vunpack.c.l.b16 %v584
        %v713 = vunpack.c.l.b16 %v585
        %v714 = vunpack.c.l.b16 %v586
        %v715 = vunpack.c.l.b16 %v587
        %v716 = vunpack.c.l.b16 %v588
        %v717 = vpack.c.b16 %v702, %v701
        %v718 = vpack.c.b16 %v704, %v703
        %v719 = vpack.c.b16 %v706, %v705
        %v720 = vpack.c.b16 %v708, %v707
        %v721 = vpack.c.b16 %v710, %v709
        %v722 = vpack.c.b16 %v712, %v711
        %v723 = vpack.c.b16 %v714, %v713
        %v724 = vpack.c.b16 %v716, %v715
        %733 = vmatprep.subr.bf16.mxu0 0
        %734 = vmatpush1.bf16.msra.mxu0 %v717
        %735 = vmatprep.subr.bf16.mxu0 0
        %736 = vmatpush1.bf16.msra.mxu0 %v718
        %737 = vmatprep.subr.bf16.mxu0 0
        %738 = vmatpush1.bf16.msra.mxu0 %v719
        %739 = vmatprep.subr.bf16.mxu0 0
        %740 = vmatpush1.bf16.msra.mxu0 %v720
        %741 = vmatprep.subr.bf16.mxu0 0
        %742 = vmatpush1.bf16.msra.mxu0 %v721
        %743 = vmatprep.subr.bf16.mxu0 0
        %744 = vmatpush1.bf16.msra.mxu0 %v722
        %745 = vmatprep.subr.bf16.mxu0 0
        %746 = vmatpush1.bf16.msra.mxu0 %v723
        %747 = vmatprep.subr.bf16.mxu0 0
        %748 = vmatpush1.bf16.msra.mxu0 %v724
        %749 = vmatprep.subr.bf16.mxu0 0
        %750 = vmatpush1.bf16.msra.mxu0 0
        %751 = vmatprep.subr.bf16.mxu0 0
        %752 = vmatpush1.bf16.msra.mxu0 0
        %753 = vmatprep.subr.bf16.mxu0 0
        %754 = vmatpush1.bf16.msra.mxu0 0
        %755 = vmatprep.subr.bf16.mxu0 0
        %756 = vmatpush1.bf16.msra.mxu0 0
        %757 = vmatprep.subr.bf16.mxu0 0
        %758 = vmatpush1.bf16.msra.mxu0 0
        %759 = vmatprep.subr.bf16.mxu0 0
        %760 = vmatpush1.bf16.msra.mxu0 0
        %761 = vmatprep.subr.bf16.mxu0 0
        %762 = vmatpush1.bf16.msra.mxu0 0
        %763 = vmatprep.subr.bf16.mxu0 0
        %764 = vmatpush1.bf16.msra.mxu0 0
        %765 = vmatprep.mubr.bf16.mxu0 0
        %766 = vmatmul.mubr.bf16.gmra.mrb[0].mxu0 %v653
        %v767 = vpop.f32.mrb[0].mxu0
        %v768 = vadd.f32 0.0, %v767
        %v769 = vpop.f32.mrb[0].mxu0
        %v770 = vpop.f32.mrb[0].mxu0
        %v771 = vadd.f32 0.0, %v770
        %v772 = vpop.f32.mrb[0].mxu0
        %773 = vmatprep.mubr.bf16.mxu0 0
        %774 = vmatmul.mubr.bf16.gmra.mrb[0].mxu0 %v654
        %v775 = vpop.f32.mrb[0].mxu0
        %v776 = vadd.f32 0.0, %v775
        %v777 = vpop.f32.mrb[0].mxu0
        %v778 = vpop.f32.mrb[0].mxu0
        %v779 = vadd.f32 0.0, %v778
        %v780 = vpop.f32.mrb[0].mxu0
        %781 = vmatprep.mubr.bf16.mxu0 0
        %782 = vmatmul.mubr.bf16.gmra.mrb[0].mxu0 %v655
        %v783 = vpop.f32.mrb[0].mxu0
        %v784 = vadd.f32 0.0, %v783
        %v785 = vpop.f32.mrb[0].mxu0
        %v786 = vpop.f32.mrb[0].mxu0
        %v787 = vadd.f32 0.0, %v786
        %v788 = vpop.f32.mrb[0].mxu0
        %789 = vmatprep.mubr.bf16.mxu0 0
        %790 = vmatmul.mubr.bf16.gmra.mrb[0].mxu0 %v656
        %v791 = vpop.f32.mrb[0].mxu0
        %v792 = vadd.f32 0.0, %v791
        %v793 = vpop.f32.mrb[0].mxu0
        %v794 = vpop.f32.mrb[0].mxu0
        %v795 = vadd.f32 0.0, %v794
        %v796 = vpop.f32.mrb[0].mxu0
        %797 = vmatprep.mubr.bf16.mxu0 0
        %798 = vmatmul.mubr.bf16.gmra.mrb[0].mxu0 %v657
        %v799 = vpop.f32.mrb[0].mxu0
        %v800 = vadd.f32 0.0, %v799
        %v801 = vpop.f32.mrb[0].mxu0
        %v802 = vpop.f32.mrb[0].mxu0
        %v803 = vadd.f32 0.0, %v802
        %v804 = vpop.f32.mrb[0].mxu0
        %805 = vmatprep.mubr.bf16.mxu0 0
        %806 = vmatmul.mubr.bf16.gmra.mrb[0].mxu0 %v658
        %v807 = vpop.f32.mrb[0].mxu0
        %v808 = vadd.f32 0.0, %v807
        %v809 = vpop.f32.mrb[0].mxu0
        %v810 = vpop.f32.mrb[0].mxu0
        %v811 = vadd.f32 0.0, %v810
        %v812 = vpop.f32.mrb[0].mxu0
        %813 = vmatprep.mubr.bf16.mxu0 0
        %814 = vmatmul.mubr.bf16.gmra.mrb[0].mxu0 %v659
        %v815 = vpop.f32.mrb[0].mxu0
        %v816 = vadd.f32 0.0, %v815
        %v817 = vpop.f32.mrb[0].mxu0
        %v818 = vpop.f32.mrb[0].mxu0
        %v819 = vadd.f32 0.0, %v818
        %v820 = vpop.f32.mrb[0].mxu0
        %821 = vmatprep.mubr.bf16.mxu0 0
        %822 = vmatmul.mubr.bf16.gmra.mrb[0].mxu0 %v660
        %v823 = vpop.f32.mrb[0].mxu0
        %v824 = vadd.f32 0.0, %v823
        %v825 = vpop.f32.mrb[0].mxu0
        %v826 = vpop.f32.mrb[0].mxu0
        %v827 = vadd.f32 0.0, %v826
        %v828 = vpop.f32.mrb[0].mxu0
        %829 = vmatprep.mubr.bf16.mxu0 0
        %830 = vmatmul.mubr.bf16.gmra.mrb[0].mxu0 %v661
        %v831 = vpop.f32.mrb[0].mxu0
        %v832 = vadd.f32 0.0, %v831
        %v833 = vpop.f32.mrb[0].mxu0
        %v834 = vpop.f32.mrb[0].mxu0
        %v835 = vadd.f32 0.0, %v834
        %v836 = vpop.f32.mrb[0].mxu0
        %837 = vmatprep.mubr.bf16.mxu0 0
        %838 = vmatmul.mubr.bf16.gmra.mrb[0].mxu0 %v662
        %v839 = vpop.f32.mrb[0].mxu0
        %v840 = vadd.f32 0.0, %v839
        %v841 = vpop.f32.mrb[0].mxu0
        %v842 = vpop.f32.mrb[0].mxu0
        %v843 = vadd.f32 0.0, %v842
        %v844 = vpop.f32.mrb[0].mxu0
        %845 = vmatprep.mubr.bf16.mxu0 0
        %846 = vmatmul.mubr.bf16.gmra.mrb[0].mxu0 %v663
        %v847 = vpop.f32.mrb[0].mxu0
        %v848 = vadd.f32 0.0, %v847
        %v849 = vpop.f32.mrb[0].mxu0
        %v850 = vpop.f32.mrb[0].mxu0
        %v851 = vadd.f32 0.0, %v850
        %v852 = vpop.f32.mrb[0].mxu0
        %853 = vmatprep.mubr.bf16.mxu0 0
        %854 = vmatmul.mubr.bf16.gmra.mrb[0].mxu0 %v664
        %v855 = vpop.f32.mrb[0].mxu0
        %v856 = vadd.f32 0.0, %v855
        %v857 = vpop.f32.mrb[0].mxu0
        %v858 = vpop.f32.mrb[0].mxu0
        %v859 = vadd.f32 0.0, %v858
        %v860 = vpop.f32.mrb[0].mxu0
        %861 = vmatprep.mubr.bf16.mxu0 0
        %862 = vmatmul.mubr.bf16.gmra.mrb[0].mxu0 %v665
        %v863 = vpop.f32.mrb[0].mxu0
        %v864 = vadd.f32 0.0, %v863
        %v865 = vpop.f32.mrb[0].mxu0
        %v866 = vpop.f32.mrb[0].mxu0
        %v867 = vadd.f32 0.0, %v866
        %v868 = vpop.f32.mrb[0].mxu0
        %869 = vmatprep.mubr.bf16.mxu0 0
        %870 = vmatmul.mubr.bf16.gmra.mrb[0].mxu0 %v666
        %v871 = vpop.f32.mrb[0].mxu0
        %v872 = vadd.f32 0.0, %v871
        %v873 = vpop.f32.mrb[0].mxu0
        %v874 = vpop.f32.mrb[0].mxu0
        %v875 = vadd.f32 0.0, %v874
        %v876 = vpop.f32.mrb[0].mxu0
        %877 = vmatprep.mubr.bf16.mxu0 0
        %878 = vmatmul.mubr.bf16.gmra.mrb[0].mxu0 %v667
        %v879 = vpop.f32.mrb[0].mxu0
        %v880 = vadd.f32 0.0, %v879
        %v881 = vpop.f32.mrb[0].mxu0
        %v882 = vpop.f32.mrb[0].mxu0
        %v883 = vadd.f32 0.0, %v882
        %v884 = vpop.f32.mrb[0].mxu0
        %885 = vmatprep.mubr.bf16.mxu0 0
        %886 = vmatmul.mubr.bf16.gmra.mrb[0].mxu0 %v668
        %v887 = vpop.f32.mrb[0].mxu0
        %v888 = vadd.f32 0.0, %v887
        %v889 = vpop.f32.mrb[0].mxu0
        %v890 = vpop.f32.mrb[0].mxu0
        %v891 = vadd.f32 0.0, %v890
        %v892 = vpop.f32.mrb[0].mxu0
        %893 = vdwg.mxu0
        %v894 = vld [vmem:[%s2] sm:$0x1]
        %v896 = vlaneseq
        %v897 = vshrl.u32 %v896, 7
        %v898 = vsub.s32 0, %v897
        %v899 = vrot.slane %v894, %v898
        %v901 = vmul.f32 %v768, %v899
        %v902 = vmul.f32 %v771, %v899
        %v903 = vmul.f32 %v776, %v899
        %v904 = vmul.f32 %v779, %v899
        %v905 = vmul.f32 %v784, %v899
        %v906 = vmul.f32 %v787, %v899
        %v907 = vmul.f32 %v792, %v899
        %v908 = vmul.f32 %v795, %v899
        %v909 = vmul.f32 %v800, %v899
        %v910 = vmul.f32 %v803, %v899
        %v911 = vmul.f32 %v808, %v899
        %v912 = vmul.f32 %v811, %v899
        %v913 = vmul.f32 %v816, %v899
        %v914 = vmul.f32 %v819, %v899
        %v915 = vmul.f32 %v824, %v899
        %v916 = vmul.f32 %v827, %v899
        %v917 = vmul.f32 %v832, %v899
        %v918 = vmul.f32 %v835, %v899
        %v919 = vmul.f32 %v840, %v899
        %v920 = vmul.f32 %v843, %v899
        %v921 = vmul.f32 %v848, %v899
        %v922 = vmul.f32 %v851, %v899
        %v923 = vmul.f32 %v856, %v899
        %v924 = vmul.f32 %v859, %v899
        %v925 = vmul.f32 %v864, %v899
        %v926 = vmul.f32 %v867, %v899
        %v927 = vmul.f32 %v872, %v899
        %v928 = vmul.f32 %v875, %v899
        %v929 = vmul.f32 %v880, %v899
        %v930 = vmul.f32 %v883, %v899
        %v931 = vmul.f32 %v888, %v899
        %v932 = vmul.f32 %v891, %v899
        %v933 = vld [vmem:[%s3] sm:$0x1]
        %v935 = vlaneseq
        %v936 = vshrl.u32 %v935, 7
        %v937 = vsub.s32 0, %v936
        %v938 = vrot.slane %v933, %v937
        %v940 = vadd.f32 %v901, %v938
        %v941 = vadd.f32 %v902, %v938
        %v942 = vadd.f32 %v903, %v938
        %v943 = vadd.f32 %v904, %v938
        %v944 = vadd.f32 %v905, %v938
        %v945 = vadd.f32 %v906, %v938
        %v946 = vadd.f32 %v907, %v938
        %v947 = vadd.f32 %v908, %v938
        %v948 = vadd.f32 %v909, %v938
        %v949 = vadd.f32 %v910, %v938
        %v950 = vadd.f32 %v911, %v938
        %v951 = vadd.f32 %v912, %v938
        %v952 = vadd.f32 %v913, %v938
        %v953 = vadd.f32 %v914, %v938
        %v954 = vadd.f32 %v915, %v938
        %v955 = vadd.f32 %v916, %v938
        %v956 = vadd.f32 %v917, %v938
        %v957 = vadd.f32 %v918, %v938
        %v958 = vadd.f32 %v919, %v938
        %v959 = vadd.f32 %v920, %v938
        %v960 = vadd.f32 %v921, %v938
        %v961 = vadd.f32 %v922, %v938
        %v962 = vadd.f32 %v923, %v938
        %v963 = vadd.f32 %v924, %v938
        %v964 = vadd.f32 %v925, %v938
        %v965 = vadd.f32 %v926, %v938
        %v966 = vadd.f32 %v927, %v938
        %v967 = vadd.f32 %v928, %v938
        %v968 = vadd.f32 %v929, %v938
        %v969 = vadd.f32 %v930, %v938
        %v970 = vadd.f32 %v931, %v938
        %v971 = vadd.f32 %v932, %v938
        %v972 = vmax.f32 %v940, 0.0
        %v973 = vmax.f32 %v941, 0.0
        %v974 = vmax.f32 %v942, 0.0
        %v975 = vmax.f32 %v943, 0.0
        %v976 = vmax.f32 %v944, 0.0
        %v977 = vmax.f32 %v945, 0.0
        %v978 = vmax.f32 %v946, 0.0
        %v979 = vmax.f32 %v947, 0.0
        %v980 = vmax.f32 %v948, 0.0
        %v981 = vmax.f32 %v949, 0.0
        %v982 = vmax.f32 %v950, 0.0
        %v983 = vmax.f32 %v951, 0.0
        %v984 = vmax.f32 %v952, 0.0
        %v985 = vmax.f32 %v953, 0.0
        %v986 = vmax.f32 %v954, 0.0
        %v987 = vmax.f32 %v955, 0.0
        %v988 = vmax.f32 %v956, 0.0
        %v989 = vmax.f32 %v957, 0.0
        %v990 = vmax.f32 %v958, 0.0
        %v991 = vmax.f32 %v959, 0.0
        %v992 = vmax.f32 %v960, 0.0
        %v993 = vmax.f32 %v961, 0.0
        %v994 = vmax.f32 %v962, 0.0
        %v995 = vmax.f32 %v963, 0.0
        %v996 = vmax.f32 %v964, 0.0
        %v997 = vmax.f32 %v965, 0.0
        %v998 = vmax.f32 %v966, 0.0
        %v999 = vmax.f32 %v967, 0.0
        %v1000 = vmax.f32 %v968, 0.0
        %v1001 = vmax.f32 %v969, 0.0
        %v1002 = vmax.f32 %v970, 0.0
        %v1003 = vmax.f32 %v971, 0.0
        %v1004 = vpack.c.bf16 %v973, %v972
        %v1005 = vpack.c.bf16 %v975, %v974
        %v1006 = vpack.c.bf16 %v977, %v976
        %v1007 = vpack.c.bf16 %v979, %v978
        %v1008 = vpack.c.bf16 %v981, %v980
        %v1009 = vpack.c.bf16 %v983, %v982
        %v1010 = vpack.c.bf16 %v985, %v984
        %v1011 = vpack.c.bf16 %v987, %v986
        %v1012 = vpack.c.bf16 %v989, %v988
        %v1013 = vpack.c.bf16 %v991, %v990
        %v1014 = vpack.c.bf16 %v993, %v992
        %v1015 = vpack.c.bf16 %v995, %v994
        %v1016 = vpack.c.bf16 %v997, %v996
        %v1017 = vpack.c.bf16 %v999, %v998
        %v1018 = vpack.c.bf16 %v1001, %v1000
        %v1019 = vpack.c.bf16 %v1003, %v1002
        %v1020 = vld [vmem:[%s4] sm:$0xf]
        %v1021 = vld [vmem:[%s4 + $0x4] sm:$0xf]
        %v1022 = vld [vmem:[%s4 + $0x8] sm:$0xf]
        %v1023 = vld [vmem:[%s4 + $0xc] sm:$0xf]
        %v1028 = vunpack.c.l.b16 %v1020
        %v1029 = vunpack.c.l.b16 %v1021
        %v1030 = vunpack.c.l.b16 %v1022
        %v1031 = vunpack.c.l.b16 %v1023
        %v1032 = vpack.c.b16 %v1029, %v1028
        %v1033 = vpack.c.b16 %v1031, %v1030
        %vm1036 = vcmask 261120
        %v1038 = vsel %vm1036, %v1004, 0
        %v1041 = vsel %vm1036, %v1005, 0
        %v1044 = vsel %vm1036, %v1006, 0
        %v1047 = vsel %vm1036, %v1007, 0
        %v1050 = vsel %vm1036, %v1008, 0
        %v1053 = vsel %vm1036, %v1009, 0
        %v1056 = vsel %vm1036, %v1010, 0
        %v1059 = vsel %vm1036, %v1011, 0
        %v1062 = vsel %vm1036, %v1012, 0
        %v1065 = vsel %vm1036, %v1013, 0
        %v1068 = vsel %vm1036, %v1014, 0
        %v1071 = vsel %vm1036, %v1015, 0
        %v1074 = vsel %vm1036, %v1016, 0
        %v1077 = vsel %vm1036, %v1017, 0
        %v1080 = vsel %vm1036, %v1018, 0
        %v1083 = vsel %vm1036, %v1019, 0
        %1085 = vmatprep.subr.bf16.mxu0 0
        %1086 = vmatpush1.bf16.msra.mxu0 %v1032
        %1087 = vmatprep.subr.bf16.mxu0 0
        %1088 = vmatpush1.bf16.msra.mxu0 %v1033
        %1089 = vmatprep.subr.bf16.mxu0 0
        %1090 = vmatpush1.bf16.msra.mxu0 0
        %1091 = vmatprep.subr.bf16.mxu0 0
        %1092 = vmatpush1.bf16.msra.mxu0 0
        %1093 = vmatprep.subr.bf16.mxu0 0
        %1094 = vmatpush1.bf16.msra.mxu0 0
        %1095 = vmatprep.subr.bf16.mxu0 0
        %1096 = vmatpush1.bf16.msra.mxu0 0
        %1097 = vmatprep.subr.bf16.mxu0 0
        %1098 = vmatpush1.bf16.msra.mxu0 0
        %1099 = vmatprep.subr.bf16.mxu0 0
        %1100 = vmatpush1.bf16.msra.mxu0 0
        %1101 = vmatprep.subr.bf16.mxu0 0
        %1102 = vmatpush1.bf16.msra.mxu0 0
        %1103 = vmatprep.subr.bf16.mxu0 0
        %1104 = vmatpush1.bf16.msra.mxu0 0
        %1105 = vmatprep.subr.bf16.mxu0 0
        %1106 = vmatpush1.bf16.msra.mxu0 0
        %1107 = vmatprep.subr.bf16.mxu0 0
        %1108 = vmatpush1.bf16.msra.mxu0 0
        %1109 = vmatprep.subr.bf16.mxu0 0
        %1110 = vmatpush1.bf16.msra.mxu0 0
        %1111 = vmatprep.subr.bf16.mxu0 0
        %1112 = vmatpush1.bf16.msra.mxu0 0
        %1113 = vmatprep.subr.bf16.mxu0 0
        %1114 = vmatpush1.bf16.msra.mxu0 0
        %1115 = vmatprep.subr.bf16.mxu0 0
        %1116 = vmatpush1.bf16.msra.mxu0 0
        %1117 = vmatprep.mubr.bf16.mxu0 0
        %1118 = vmatmul.mubr.bf16.gmra.mrb[0].mxu0 %v1038
        %v1119 = vpop.f32.mrb[0].mxu0
        %v1120 = vadd.f32 0.0, %v1119
        %v1121 = vpop.f32.mrb[0].mxu0
        %v1122 = vpop.f32.mrb[0].mxu0
        %v1123 = vadd.f32 0.0, %v1122
        %v1124 = vpop.f32.mrb[0].mxu0
        %1125 = vmatprep.mubr.bf16.mxu0 0
        %1126 = vmatmul.mubr.bf16.gmra.mrb[0].mxu0 %v1041
        %v1127 = vpop.f32.mrb[0].mxu0
        %v1128 = vadd.f32 0.0, %v1127
        %v1129 = vpop.f32.mrb[0].mxu0
        %v1130 = vpop.f32.mrb[0].mxu0
        %v1131 = vadd.f32 0.0, %v1130
        %v1132 = vpop.f32.mrb[0].mxu0
        %1133 = vmatprep.mubr.bf16.mxu0 0
        %1134 = vmatmul.mubr.bf16.gmra.mrb[0].mxu0 %v1044
        %v1135 = vpop.f32.mrb[0].mxu0
        %v1136 = vadd.f32 0.0, %v1135
        %v1137 = vpop.f32.mrb[0].mxu0
        %v1138 = vpop.f32.mrb[0].mxu0
        %v1139 = vadd.f32 0.0, %v1138
        %v1140 = vpop.f32.mrb[0].mxu0
        %1141 = vmatprep.mubr.bf16.mxu0 0
        %1142 = vmatmul.mubr.bf16.gmra.mrb[0].mxu0 %v1047
        %v1143 = vpop.f32.mrb[0].mxu0
        %v1144 = vadd.f32 0.0, %v1143
        %v1145 = vpop.f32.mrb[0].mxu0
        %v1146 = vpop.f32.mrb[0].mxu0
        %v1147 = vadd.f32 0.0, %v1146
        %v1148 = vpop.f32.mrb[0].mxu0
        %1149 = vmatprep.mubr.bf16.mxu0 0
        %1150 = vmatmul.mubr.bf16.gmra.mrb[0].mxu0 %v1050
        %v1151 = vpop.f32.mrb[0].mxu0
        %v1152 = vadd.f32 0.0, %v1151
        %v1153 = vpop.f32.mrb[0].mxu0
        %v1154 = vpop.f32.mrb[0].mxu0
        %v1155 = vadd.f32 0.0, %v1154
        %v1156 = vpop.f32.mrb[0].mxu0
        %1157 = vmatprep.mubr.bf16.mxu0 0
        %1158 = vmatmul.mubr.bf16.gmra.mrb[0].mxu0 %v1053
        %v1159 = vpop.f32.mrb[0].mxu0
        %v1160 = vadd.f32 0.0, %v1159
        %v1161 = vpop.f32.mrb[0].mxu0
        %v1162 = vpop.f32.mrb[0].mxu0
        %v1163 = vadd.f32 0.0, %v1162
        %v1164 = vpop.f32.mrb[0].mxu0
        %1165 = vmatprep.mubr.bf16.mxu0 0
        %1166 = vmatmul.mubr.bf16.gmra.mrb[0].mxu0 %v1056
        %v1167 = vpop.f32.mrb[0].mxu0
        %v1168 = vadd.f32 0.0, %v1167
        %v1169 = vpop.f32.mrb[0].mxu0
        %v1170 = vpop.f32.mrb[0].mxu0
        %v1171 = vadd.f32 0.0, %v1170
        %v1172 = vpop.f32.mrb[0].mxu0
        %1173 = vmatprep.mubr.bf16.mxu0 0
        %1174 = vmatmul.mubr.bf16.gmra.mrb[0].mxu0 %v1059
        %v1175 = vpop.f32.mrb[0].mxu0
        %v1176 = vadd.f32 0.0, %v1175
        %v1177 = vpop.f32.mrb[0].mxu0
        %v1178 = vpop.f32.mrb[0].mxu0
        %v1179 = vadd.f32 0.0, %v1178
        %v1180 = vpop.f32.mrb[0].mxu0
        %1181 = vmatprep.mubr.bf16.mxu0 0
        %1182 = vmatmul.mubr.bf16.gmra.mrb[0].mxu0 %v1062
        %v1183 = vpop.f32.mrb[0].mxu0
        %v1184 = vadd.f32 0.0, %v1183
        %v1185 = vpop.f32.mrb[0].mxu0
        %v1186 = vpop.f32.mrb[0].mxu0
        %v1187 = vadd.f32 0.0, %v1186
        %v1188 = vpop.f32.mrb[0].mxu0
        %1189 = vmatprep.mubr.bf16.mxu0 0
        %1190 = vmatmul.mubr.bf16.gmra.mrb[0].mxu0 %v1065
        %v1191 = vpop.f32.mrb[0].mxu0
        %v1192 = vadd.f32 0.0, %v1191
        %v1193 = vpop.f32.mrb[0].mxu0
        %v1194 = vpop.f32.mrb[0].mxu0
        %v1195 = vadd.f32 0.0, %v1194
        %v1196 = vpop.f32.mrb[0].mxu0
        %1197 = vmatprep.mubr.bf16.mxu0 0
        %1198 = vmatmul.mubr.bf16.gmra.mrb[0].mxu0 %v1068
        %v1199 = vpop.f32.mrb[0].mxu0
        %v1200 = vadd.f32 0.0, %v1199
        %v1201 = vpop.f32.mrb[0].mxu0
        %v1202 = vpop.f32.mrb[0].mxu0
        %v1203 = vadd.f32 0.0, %v1202
        %v1204 = vpop.f32.mrb[0].mxu0
        %1205 = vmatprep.mubr.bf16.mxu0 0
        %1206 = vmatmul.mubr.bf16.gmra.mrb[0].mxu0 %v1071
        %v1207 = vpop.f32.mrb[0].mxu0
        %v1208 = vadd.f32 0.0, %v1207
        %v1209 = vpop.f32.mrb[0].mxu0
        %v1210 = vpop.f32.mrb[0].mxu0
        %v1211 = vadd.f32 0.0, %v1210
        %v1212 = vpop.f32.mrb[0].mxu0
        %1213 = vmatprep.mubr.bf16.mxu0 0
        %1214 = vmatmul.mubr.bf16.gmra.mrb[0].mxu0 %v1074
        %v1215 = vpop.f32.mrb[0].mxu0
        %v1216 = vadd.f32 0.0, %v1215
        %v1217 = vpop.f32.mrb[0].mxu0
        %v1218 = vpop.f32.mrb[0].mxu0
        %v1219 = vadd.f32 0.0, %v1218
        %v1220 = vpop.f32.mrb[0].mxu0
        %1221 = vmatprep.mubr.bf16.mxu0 0
        %1222 = vmatmul.mubr.bf16.gmra.mrb[0].mxu0 %v1077
        %v1223 = vpop.f32.mrb[0].mxu0
        %v1224 = vadd.f32 0.0, %v1223
        %v1225 = vpop.f32.mrb[0].mxu0
        %v1226 = vpop.f32.mrb[0].mxu0
        %v1227 = vadd.f32 0.0, %v1226
        %v1228 = vpop.f32.mrb[0].mxu0
        %1229 = vmatprep.mubr.bf16.mxu0 0
        %1230 = vmatmul.mubr.bf16.gmra.mrb[0].mxu0 %v1080
        %v1231 = vpop.f32.mrb[0].mxu0
        %v1232 = vadd.f32 0.0, %v1231
        %v1233 = vpop.f32.mrb[0].mxu0
        %v1234 = vpop.f32.mrb[0].mxu0
        %v1235 = vadd.f32 0.0, %v1234
        %v1236 = vpop.f32.mrb[0].mxu0
        %1237 = vmatprep.mubr.bf16.mxu0 0
        %1238 = vmatmul.mubr.bf16.gmra.mrb[0].mxu0 %v1083
        %v1239 = vpop.f32.mrb[0].mxu0
        %v1240 = vadd.f32 0.0, %v1239
        %v1241 = vpop.f32.mrb[0].mxu0
        %v1242 = vpop.f32.mrb[0].mxu0
        %v1243 = vadd.f32 0.0, %v1242
        %v1244 = vpop.f32.mrb[0].mxu0
        %1245 = vdwg.mxu0
        %v1246 = vld [vmem:[%s5] sm:$0x1]
        %v1248 = vlaneseq
        %v1249 = vshrl.u32 %v1248, 7
        %v1250 = vsub.s32 0, %v1249
        %v1251 = vrot.slane %v1246, %v1250
        %v1253 = vmul.f32 %v1120, %v1251
        %v1254 = vmul.f32 %v1123, %v1251
        %v1255 = vmul.f32 %v1128, %v1251
        %v1256 = vmul.f32 %v1131, %v1251
        %v1257 = vmul.f32 %v1136, %v1251
        %v1258 = vmul.f32 %v1139, %v1251
        %v1259 = vmul.f32 %v1144, %v1251
        %v1260 = vmul.f32 %v1147, %v1251
        %v1261 = vmul.f32 %v1152, %v1251
        %v1262 = vmul.f32 %v1155, %v1251
        %v1263 = vmul.f32 %v1160, %v1251
        %v1264 = vmul.f32 %v1163, %v1251
        %v1265 = vmul.f32 %v1168, %v1251
        %v1266 = vmul.f32 %v1171, %v1251
        %v1267 = vmul.f32 %v1176, %v1251
        %v1268 = vmul.f32 %v1179, %v1251
        %v1269 = vmul.f32 %v1184, %v1251
        %v1270 = vmul.f32 %v1187, %v1251
        %v1271 = vmul.f32 %v1192, %v1251
        %v1272 = vmul.f32 %v1195, %v1251
        %v1273 = vmul.f32 %v1200, %v1251
        %v1274 = vmul.f32 %v1203, %v1251
        %v1275 = vmul.f32 %v1208, %v1251
        %v1276 = vmul.f32 %v1211, %v1251
        %v1277 = vmul.f32 %v1216, %v1251
        %v1278 = vmul.f32 %v1219, %v1251
        %v1279 = vmul.f32 %v1224, %v1251
        %v1280 = vmul.f32 %v1227, %v1251
        %v1281 = vmul.f32 %v1232, %v1251
        %v1282 = vmul.f32 %v1235, %v1251
        %v1283 = vmul.f32 %v1240, %v1251
        %v1284 = vmul.f32 %v1243, %v1251
        %v1285 = vld [vmem:[%s6] sm:$0x1]
        %v1287 = vlaneseq
        %v1288 = vshrl.u32 %v1287, 7
        %v1289 = vsub.s32 0, %v1288
        %v1290 = vrot.slane %v1285, %v1289
        %v1292 = vadd.f32 %v1253, %v1290
        %v1293 = vadd.f32 %v1254, %v1290
        %v1294 = vadd.f32 %v1255, %v1290
        %v1295 = vadd.f32 %v1256, %v1290
        %v1296 = vadd.f32 %v1257, %v1290
        %v1297 = vadd.f32 %v1258, %v1290
        %v1298 = vadd.f32 %v1259, %v1290
        %v1299 = vadd.f32 %v1260, %v1290
        %v1300 = vadd.f32 %v1261, %v1290
        %v1301 = vadd.f32 %v1262, %v1290
        %v1302 = vadd.f32 %v1263, %v1290
        %v1303 = vadd.f32 %v1264, %v1290
        %v1304 = vadd.f32 %v1265, %v1290
        %v1305 = vadd.f32 %v1266, %v1290
        %v1306 = vadd.f32 %v1267, %v1290
        %v1307 = vadd.f32 %v1268, %v1290
        %v1308 = vadd.f32 %v1269, %v1290
        %v1309 = vadd.f32 %v1270, %v1290
        %v1310 = vadd.f32 %v1271, %v1290
        %v1311 = vadd.f32 %v1272, %v1290
        %v1312 = vadd.f32 %v1273, %v1290
        %v1313 = vadd.f32 %v1274, %v1290
        %v1314 = vadd.f32 %v1275, %v1290
        %v1315 = vadd.f32 %v1276, %v1290
        %v1316 = vadd.f32 %v1277, %v1290
        %v1317 = vadd.f32 %v1278, %v1290
        %v1318 = vadd.f32 %v1279, %v1290
        %v1319 = vadd.f32 %v1280, %v1290
        %v1320 = vadd.f32 %v1281, %v1290
        %v1321 = vadd.f32 %v1282, %v1290
        %v1322 = vadd.f32 %v1283, %v1290
        %v1323 = vadd.f32 %v1284, %v1290
        %v1324 = vmax.f32 %v1292, 0.0
        %v1325 = vmax.f32 %v1293, 0.0
        %v1326 = vmax.f32 %v1294, 0.0
        %v1327 = vmax.f32 %v1295, 0.0
        %v1328 = vmax.f32 %v1296, 0.0
        %v1329 = vmax.f32 %v1297, 0.0
        %v1330 = vmax.f32 %v1298, 0.0
        %v1331 = vmax.f32 %v1299, 0.0
        %v1332 = vmax.f32 %v1300, 0.0
        %v1333 = vmax.f32 %v1301, 0.0
        %v1334 = vmax.f32 %v1302, 0.0
        %v1335 = vmax.f32 %v1303, 0.0
        %v1336 = vmax.f32 %v1304, 0.0
        %v1337 = vmax.f32 %v1305, 0.0
        %v1338 = vmax.f32 %v1306, 0.0
        %v1339 = vmax.f32 %v1307, 0.0
        %v1340 = vmax.f32 %v1308, 0.0
        %v1341 = vmax.f32 %v1309, 0.0
        %v1342 = vmax.f32 %v1310, 0.0
        %v1343 = vmax.f32 %v1311, 0.0
        %v1344 = vmax.f32 %v1312, 0.0
        %v1345 = vmax.f32 %v1313, 0.0
        %v1346 = vmax.f32 %v1314, 0.0
        %v1347 = vmax.f32 %v1315, 0.0
        %v1348 = vmax.f32 %v1316, 0.0
        %v1349 = vmax.f32 %v1317, 0.0
        %v1350 = vmax.f32 %v1318, 0.0
        %v1351 = vmax.f32 %v1319, 0.0
        %v1352 = vmax.f32 %v1320, 0.0
        %v1353 = vmax.f32 %v1321, 0.0
        %v1354 = vmax.f32 %v1322, 0.0
        %v1355 = vmax.f32 %v1323, 0.0
        %v1356 = vmin.f32 %v1324, 6.0
        %v1357 = vmin.f32 %v1325, 6.0
        %v1358 = vmin.f32 %v1326, 6.0
        %v1359 = vmin.f32 %v1327, 6.0
        %v1360 = vmin.f32 %v1328, 6.0
        %v1361 = vmin.f32 %v1329, 6.0
        %v1362 = vmin.f32 %v1330, 6.0
        %v1363 = vmin.f32 %v1331, 6.0
        %v1364 = vmin.f32 %v1332, 6.0
        %v1365 = vmin.f32 %v1333, 6.0
        %v1366 = vmin.f32 %v1334, 6.0
        %v1367 = vmin.f32 %v1335, 6.0
        %v1368 = vmin.f32 %v1336, 6.0
        %v1369 = vmin.f32 %v1337, 6.0
        %v1370 = vmin.f32 %v1338, 6.0
        %v1371 = vmin.f32 %v1339, 6.0
        %v1372 = vmin.f32 %v1340, 6.0
        %v1373 = vmin.f32 %v1341, 6.0
        %v1374 = vmin.f32 %v1342, 6.0
        %v1375 = vmin.f32 %v1343, 6.0
        %v1376 = vmin.f32 %v1344, 6.0
        %v1377 = vmin.f32 %v1345, 6.0
        %v1378 = vmin.f32 %v1346, 6.0
        %v1379 = vmin.f32 %v1347, 6.0
        %v1380 = vmin.f32 %v1348, 6.0
        %v1381 = vmin.f32 %v1349, 6.0
        %v1382 = vmin.f32 %v1350, 6.0
        %v1383 = vmin.f32 %v1351, 6.0
        %v1384 = vmin.f32 %v1352, 6.0
        %v1385 = vmin.f32 %v1353, 6.0
        %v1386 = vmin.f32 %v1354, 6.0
        %v1387 = vmin.f32 %v1355, 6.0
        %1388 = vst.msk [vmem:[#allocation2] sm:$0xff] %vm1036, 0.0
        %1389 = vst.msk [vmem:[#allocation2 + $0x8] sm:$0xff] %vm1036, 0.0
        %1390 = vst.msk [vmem:[#allocation2 + $0x10] sm:$0xff] %vm1036, 0.0
        %1391 = vst.msk [vmem:[#allocation2 + $0x18] sm:$0xff] %vm1036, 0.0
        %1392 = vst.msk [vmem:[#allocation2 + $0x20] sm:$0xff] %vm1036, 0.0
        %1393 = vst.msk [vmem:[#allocation2 + $0x28] sm:$0xff] %vm1036, 0.0
        %1394 = vst.msk [vmem:[#allocation2 + $0x30] sm:$0xff] %vm1036, 0.0
        %1395 = vst.msk [vmem:[#allocation2 + $0x38] sm:$0xff] %vm1036, 0.0
        %1396 = vst.msk [vmem:[#allocation2 + $0x40] sm:$0xff] %vm1036, 0.0
        %1397 = vst.msk [vmem:[#allocation2 + $0x48] sm:$0xff] %vm1036, 0.0
        %1398 = vst.msk [vmem:[#allocation2 + $0x50] sm:$0xff] %vm1036, 0.0
        %1399 = vst.msk [vmem:[#allocation2 + $0x58] sm:$0xff] %vm1036, 0.0
        %1400 = vst.msk [vmem:[#allocation2 + $0x60] sm:$0xff] %vm1036, 0.0
        %1401 = vst.msk [vmem:[#allocation2 + $0x68] sm:$0xff] %vm1036, 0.0
        %1402 = vst.msk [vmem:[#allocation2 + $0x70] sm:$0xff] %vm1036, 0.0
        %1403 = vst.msk [vmem:[#allocation2 + $0x78] sm:$0xff] %vm1036, 0.0
        %1404 = vst.msk [vmem:[#allocation2 + $0x80] sm:$0xff] %vm1036, 0.0
        %1405 = vst.msk [vmem:[#allocation2 + $0x88] sm:$0xff] %vm1036, 0.0
        %1406 = vst.msk [vmem:[#allocation2 + $0x90] sm:$0xff] %vm1036, 0.0
        %1407 = vst.msk [vmem:[#allocation2 + $0x98] sm:$0xff] %vm1036, 0.0
        %1408 = vst.msk [vmem:[#allocation2 + $0xa0] sm:$0xff] %vm1036, 0.0
        %1409 = vst.msk [vmem:[#allocation2 + $0xa8] sm:$0xff] %vm1036, 0.0
        %1410 = vst.msk [vmem:[#allocation2 + $0xb0] sm:$0xff] %vm1036, 0.0
        %1411 = vst.msk [vmem:[#allocation2 + $0xb8] sm:$0xff] %vm1036, 0.0
        %1412 = vst.msk [vmem:[#allocation2 + $0xc0] sm:$0xff] %vm1036, 0.0
        %1413 = vst.msk [vmem:[#allocation2 + $0xc8] sm:$0xff] %vm1036, 0.0
        %1414 = vst.msk [vmem:[#allocation2 + $0xd0] sm:$0xff] %vm1036, 0.0
        %1415 = vst.msk [vmem:[#allocation2 + $0xd8] sm:$0xff] %vm1036, 0.0
        %1416 = vst.msk [vmem:[#allocation2 + $0xe0] sm:$0xff] %vm1036, 0.0
        %1417 = vst.msk [vmem:[#allocation2 + $0xe8] sm:$0xff] %vm1036, 0.0
        %1418 = vst.msk [vmem:[#allocation2 + $0xf0] sm:$0xff] %vm1036, 0.0
        %1419 = vst.msk [vmem:[#allocation2 + $0xf8] sm:$0xff] %vm1036, 0.0
        %1420 = vst.msk [vmem:[#allocation2 + $0x100] sm:$0xff] %vm1036, 0.0
        %1421 = vst.msk [vmem:[#allocation2 + $0x108] sm:$0xff] %vm1036, 0.0
        %1422 = vst.msk [vmem:[#allocation2 + $0x110] sm:$0xff] %vm1036, 0.0
        %1423 = vst.msk [vmem:[#allocation2 + $0x118] sm:$0xff] %vm1036, 0.0
        %1424 = vst.msk [vmem:[#allocation2 + $0x120] sm:$0xff] %vm1036, 0.0
        %1425 = vst.msk [vmem:[#allocation2 + $0x128] sm:$0xff] %vm1036, 0.0
        %1426 = vst.msk [vmem:[#allocation2 + $0x130] sm:$0xff] %vm1036, 0.0
        %1427 = vst.msk [vmem:[#allocation2 + $0x138] sm:$0xff] %vm1036, 0.0
        %1428 = vst.msk [vmem:[#allocation2 + $0x140] sm:$0xff] %vm1036, 0.0
        %1429 = vst.msk [vmem:[#allocation2 + $0x148] sm:$0xff] %vm1036, 0.0
        %1430 = vst.msk [vmem:[#allocation2 + $0x150] sm:$0xff] %vm1036, 0.0
        %1431 = vst.msk [vmem:[#allocation2 + $0x158] sm:$0xff] %vm1036, 0.0
        %1432 = vst.msk [vmem:[#allocation2 + $0x160] sm:$0xff] %vm1036, 0.0
        %1433 = vst.msk [vmem:[#allocation2 + $0x168] sm:$0xff] %vm1036, 0.0
        %1434 = vst.msk [vmem:[#allocation2 + $0x170] sm:$0xff] %vm1036, 0.0
        %1435 = vst.msk [vmem:[#allocation2 + $0x178] sm:$0xff] %vm1036, 0.0
        %1436 = vst.msk [vmem:[#allocation2 + $0x180] sm:$0xff] %vm1036, 0.0
        %1437 = vst.msk [vmem:[#allocation2 + $0x188] sm:$0xff] %vm1036, 0.0
        %1438 = vst.msk [vmem:[#allocation2 + $0x190] sm:$0xff] %vm1036, 0.0
        %1439 = vst.msk [vmem:[#allocation2 + $0x198] sm:$0xff] %vm1036, 0.0
        %1440 = vst.msk [vmem:[#allocation2 + $0x1a0] sm:$0xff] %vm1036, 0.0
        %1441 = vst.msk [vmem:[#allocation2 + $0x1a8] sm:$0xff] %vm1036, 0.0
        %1442 = vst.msk [vmem:[#allocation2 + $0x1b0] sm:$0xff] %vm1036, 0.0
        %1443 = vst.msk [vmem:[#allocation2 + $0x1b8] sm:$0xff] %vm1036, 0.0
        %1444 = vst.msk [vmem:[#allocation2 + $0x1c0] sm:$0xff] %vm1036, 0.0
        %1445 = vst.msk [vmem:[#allocation2 + $0x1c8] sm:$0xff] %vm1036, 0.0
        %1446 = vst.msk [vmem:[#allocation2 + $0x1d0] sm:$0xff] %vm1036, 0.0
        %1447 = vst.msk [vmem:[#allocation2 + $0x1d8] sm:$0xff] %vm1036, 0.0
        %1448 = vst.msk [vmem:[#allocation2 + $0x1e0] sm:$0xff] %vm1036, 0.0
        %1449 = vst.msk [vmem:[#allocation2 + $0x1e8] sm:$0xff] %vm1036, 0.0
        %1450 = vst.msk [vmem:[#allocation2 + $0x1f0] sm:$0xff] %vm1036, 0.0
        %1451 = vst.msk [vmem:[#allocation2 + $0x1f8] sm:$0xff] %vm1036, 0.0
        %1452 = vst.msk [vmem:[#allocation2 + $0x200] sm:$0xff] %vm1036, 0.0
        %1453 = vst.msk [vmem:[#allocation2 + $0x208] sm:$0xff] %vm1036, 0.0
        %1454 = vst.msk [vmem:[#allocation2 + $0x210] sm:$0xff] %vm1036, 0.0
        %1455 = vst.msk [vmem:[#allocation2 + $0x218] sm:$0xff] %vm1036, 0.0
        %1456 = vst.msk [vmem:[#allocation2 + $0x220] sm:$0xff] %vm1036, 0.0
        %1457 = vst.msk [vmem:[#allocation2 + $0x228] sm:$0xff] %vm1036, 0.0
        %1458 = vst.msk [vmem:[#allocation2 + $0x230] sm:$0xff] %vm1036, 0.0
        %1459 = vst.msk [vmem:[#allocation2 + $0x238] sm:$0xff] %vm1036, 0.0
        %s1460 = scalar_lea.vmem [#allocation2], 32
        %1461 = vst.msk [vmem:[%s1460 + $0x8] sm:$0xff] %vm1036, %v1356
        %1462 = vst.msk [vmem:[%s1460 + $0x10] sm:$0xff] %vm1036, %v1357
        %s1463 = scalar_lea.vmem [#allocation2], 64
        %1464 = vst.msk [vmem:[%s1463 + $0x8] sm:$0xff] %vm1036, %v1358
        %1465 = vst.msk [vmem:[%s1463 + $0x10] sm:$0xff] %vm1036, %v1359
        %s1466 = scalar_lea.vmem [#allocation2], 96
        %1467 = vst.msk [vmem:[%s1466 + $0x8] sm:$0xff] %vm1036, %v1360
        %1468 = vst.msk [vmem:[%s1466 + $0x10] sm:$0xff] %vm1036, %v1361
        %s1469 = scalar_lea.vmem [#allocation2], 128
        %1470 = vst.msk [vmem:[%s1469 + $0x8] sm:$0xff] %vm1036, %v1362
        %1471 = vst.msk [vmem:[%s1469 + $0x10] sm:$0xff] %vm1036, %v1363
        %s1472 = scalar_lea.vmem [#allocation2], 160
        %1473 = vst.msk [vmem:[%s1472 + $0x8] sm:$0xff] %vm1036, %v1364
        %1474 = vst.msk [vmem:[%s1472 + $0x10] sm:$0xff] %vm1036, %v1365
        %s1475 = scalar_lea.vmem [#allocation2], 192
        %1476 = vst.msk [vmem:[%s1475 + $0x8] sm:$0xff] %vm1036, %v1366
        %1477 = vst.msk [vmem:[%s1475 + $0x10] sm:$0xff] %vm1036, %v1367
        %s1478 = scalar_lea.vmem [#allocation2], 224
        %1479 = vst.msk [vmem:[%s1478 + $0x8] sm:$0xff] %vm1036, %v1368
        %1480 = vst.msk [vmem:[%s1478 + $0x10] sm:$0xff] %vm1036, %v1369
        %s1481 = scalar_lea.vmem [#allocation2], 256
        %1482 = vst.msk [vmem:[%s1481 + $0x8] sm:$0xff] %vm1036, %v1370
        %1483 = vst.msk [vmem:[%s1481 + $0x10] sm:$0xff] %vm1036, %v1371
        %s1484 = scalar_lea.vmem [#allocation2], 288
        %1485 = vst.msk [vmem:[%s1484 + $0x8] sm:$0xff] %vm1036, %v1372
        %1486 = vst.msk [vmem:[%s1484 + $0x10] sm:$0xff] %vm1036, %v1373
        %s1487 = scalar_lea.vmem [#allocation2], 320
        %1488 = vst.msk [vmem:[%s1487 + $0x8] sm:$0xff] %vm1036, %v1374
        %1489 = vst.msk [vmem:[%s1487 + $0x10] sm:$0xff] %vm1036, %v1375
        %s1490 = scalar_lea.vmem [#allocation2], 352
        %1491 = vst.msk [vmem:[%s1490 + $0x8] sm:$0xff] %vm1036, %v1376
        %1492 = vst.msk [vmem:[%s1490 + $0x10] sm:$0xff] %vm1036, %v1377
        %s1493 = scalar_lea.vmem [#allocation2], 384
        %1494 = vst.msk [vmem:[%s1493 + $0x8] sm:$0xff] %vm1036, %v1378
        %1495 = vst.msk [vmem:[%s1493 + $0x10] sm:$0xff] %vm1036, %v1379
        %s1496 = scalar_lea.vmem [#allocation2], 416
        %1497 = vst.msk [vmem:[%s1496 + $0x8] sm:$0xff] %vm1036, %v1380
        %1498 = vst.msk [vmem:[%s1496 + $0x10] sm:$0xff] %vm1036, %v1381
        %s1499 = scalar_lea.vmem [#allocation2], 448
        %1500 = vst.msk [vmem:[%s1499 + $0x8] sm:$0xff] %vm1036, %v1382
        %1501 = vst.msk [vmem:[%s1499 + $0x10] sm:$0xff] %vm1036, %v1383
        %s1502 = scalar_lea.vmem [#allocation2], 480
        %1503 = vst.msk [vmem:[%s1502 + $0x8] sm:$0xff] %vm1036, %v1384
        %1504 = vst.msk [vmem:[%s1502 + $0x10] sm:$0xff] %vm1036, %v1385
        %s1505 = scalar_lea.vmem [#allocation2], 512
        %1506 = vst.msk [vmem:[%s1505 + $0x8] sm:$0xff] %vm1036, %v1386
        %1507 = vst.msk [vmem:[%s1505 + $0x10] sm:$0xff] %vm1036, %v1387
        %v1508 = vld [vmem:[#allocation2 + $0x7] sm:$0xff]
        %v1509 = vld [vmem:[#allocation2 + $0xf] sm:$0xff]
        %v1510 = vld [vmem:[#allocation2 + $0x27] sm:$0xff]
        %v1511 = vld [vmem:[#allocation2 + $0x2f] sm:$0xff]
        %v1512 = vld [vmem:[#allocation2 + $0x47] sm:$0xff]
        %v1513 = vld [vmem:[#allocation2 + $0x4f] sm:$0xff]
        %v1514 = vld [vmem:[#allocation2 + $0x67] sm:$0xff]
        %v1515 = vld [vmem:[#allocation2 + $0x6f] sm:$0xff]
        %v1516 = vld [vmem:[#allocation2 + $0x87] sm:$0xff]
        %v1517 = vld [vmem:[#allocation2 + $0x8f] sm:$0xff]
        %v1518 = vld [vmem:[#allocation2 + $0xa7] sm:$0xff]
        %v1519 = vld [vmem:[#allocation2 + $0xaf] sm:$0xff]
        %v1520 = vld [vmem:[#allocation2 + $0xc7] sm:$0xff]
        %v1521 = vld [vmem:[#allocation2 + $0xcf] sm:$0xff]
        %v1522 = vld [vmem:[#allocation2 + $0xe7] sm:$0xff]
        %v1523 = vld [vmem:[#allocation2 + $0xef] sm:$0xff]
        %v1524 = vld [vmem:[#allocation2 + $0x107] sm:$0xff]
        %v1525 = vld [vmem:[#allocation2 + $0x10f] sm:$0xff]
        %v1526 = vld [vmem:[#allocation2 + $0x127] sm:$0xff]
        %v1527 = vld [vmem:[#allocation2 + $0x12f] sm:$0xff]
        %v1528 = vld [vmem:[#allocation2 + $0x147] sm:$0xff]
        %v1529 = vld [vmem:[#allocation2 + $0x14f] sm:$0xff]
        %v1530 = vld [vmem:[#allocation2 + $0x167] sm:$0xff]
        %v1531 = vld [vmem:[#allocation2 + $0x16f] sm:$0xff]
        %v1532 = vld [vmem:[#allocation2 + $0x187] sm:$0xff]
        %v1533 = vld [vmem:[#allocation2 + $0x18f] sm:$0xff]
        %v1534 = vld [vmem:[#allocation2 + $0x1a7] sm:$0xff]
        %v1535 = vld [vmem:[#allocation2 + $0x1af] sm:$0xff]
        %v1536 = vld [vmem:[#allocation2 + $0x1c7] sm:$0xff]
        %v1537 = vld [vmem:[#allocation2 + $0x1cf] sm:$0xff]
        %v1538 = vld [vmem:[#allocation2 + $0x1e7] sm:$0xff]
        %v1539 = vld [vmem:[#allocation2 + $0x1ef] sm:$0xff]
        %v1540 = vld [vmem:[%s7] sm:$0x1]
        %v1541 = vlaneseq
        %v1542 = vshrl.u32 %v1541, 7
        %v1543 = vsub.s32 0, %v1542
        %v1544 = vrot.slane %v1540, %v1543
        %v1545 = vmul.f32 %v1508, %v1544
        %v1546 = vmul.f32 %v1509, %v1544
        %v1547 = vmul.f32 %v1510, %v1544
        %v1548 = vmul.f32 %v1511, %v1544
        %v1549 = vmul.f32 %v1512, %v1544
        %v1550 = vmul.f32 %v1513, %v1544
        %v1551 = vmul.f32 %v1514, %v1544
        %v1552 = vmul.f32 %v1515, %v1544
        %v1553 = vmul.f32 %v1516, %v1544
        %v1554 = vmul.f32 %v1517, %v1544
        %v1555 = vmul.f32 %v1518, %v1544
        %v1556 = vmul.f32 %v1519, %v1544
        %v1557 = vmul.f32 %v1520, %v1544
        %v1558 = vmul.f32 %v1521, %v1544
        %v1559 = vmul.f32 %v1522, %v1544
        %v1560 = vmul.f32 %v1523, %v1544
        %v1561 = vmul.f32 %v1524, %v1544
        %v1562 = vmul.f32 %v1525, %v1544
        %v1563 = vmul.f32 %v1526, %v1544
        %v1564 = vmul.f32 %v1527, %v1544
        %v1565 = vmul.f32 %v1528, %v1544
        %v1566 = vmul.f32 %v1529, %v1544
        %v1567 = vmul.f32 %v1530, %v1544
        %v1568 = vmul.f32 %v1531, %v1544
        %v1569 = vmul.f32 %v1532, %v1544
        %v1570 = vmul.f32 %v1533, %v1544
        %v1571 = vmul.f32 %v1534, %v1544
        %v1572 = vmul.f32 %v1535, %v1544
        %v1573 = vmul.f32 %v1536, %v1544
        %v1574 = vmul.f32 %v1537, %v1544
        %v1575 = vmul.f32 %v1538, %v1544
        %v1576 = vmul.f32 %v1539, %v1544
        %v1577 = vadd.f32 %v1545, 0.0
        %v1578 = vadd.f32 %v1546, 0.0
        %v1579 = vadd.f32 %v1547, 0.0
        %v1580 = vadd.f32 %v1548, 0.0
        %v1581 = vadd.f32 %v1549, 0.0
        %v1582 = vadd.f32 %v1550, 0.0
        %v1583 = vadd.f32 %v1551, 0.0
        %v1584 = vadd.f32 %v1552, 0.0
        %v1585 = vadd.f32 %v1553, 0.0
        %v1586 = vadd.f32 %v1554, 0.0
        %v1587 = vadd.f32 %v1555, 0.0
        %v1588 = vadd.f32 %v1556, 0.0
        %v1589 = vadd.f32 %v1557, 0.0
        %v1590 = vadd.f32 %v1558, 0.0
        %v1591 = vadd.f32 %v1559, 0.0
        %v1592 = vadd.f32 %v1560, 0.0
        %v1593 = vadd.f32 %v1561, 0.0
        %v1594 = vadd.f32 %v1562, 0.0
        %v1595 = vadd.f32 %v1563, 0.0
        %v1596 = vadd.f32 %v1564, 0.0
        %v1597 = vadd.f32 %v1565, 0.0
        %v1598 = vadd.f32 %v1566, 0.0
        %v1599 = vadd.f32 %v1567, 0.0
        %v1600 = vadd.f32 %v1568, 0.0
        %v1601 = vadd.f32 %v1569, 0.0
        %v1602 = vadd.f32 %v1570, 0.0
        %v1603 = vadd.f32 %v1571, 0.0
        %v1604 = vadd.f32 %v1572, 0.0
        %v1605 = vadd.f32 %v1573, 0.0
        %v1606 = vadd.f32 %v1574, 0.0
        %v1607 = vadd.f32 %v1575, 0.0
        %v1608 = vadd.f32 %v1576, 0.0
        %v1609 = vld [vmem:[#allocation2 + $0x8] sm:$0xff]
        %v1610 = vld [vmem:[#allocation2 + $0x10] sm:$0xff]
        %v1611 = vld [vmem:[#allocation2 + $0x28] sm:$0xff]
        %v1612 = vld [vmem:[#allocation2 + $0x30] sm:$0xff]
        %v1613 = vld [vmem:[#allocation2 + $0x48] sm:$0xff]
        %v1614 = vld [vmem:[#allocation2 + $0x50] sm:$0xff]
        %v1615 = vld [vmem:[#allocation2 + $0x68] sm:$0xff]
        %v1616 = vld [vmem:[#allocation2 + $0x70] sm:$0xff]
        %v1617 = vld [vmem:[#allocation2 + $0x88] sm:$0xff]
        %v1618 = vld [vmem:[#allocation2 + $0x90] sm:$0xff]
        %v1619 = vld [vmem:[#allocation2 + $0xa8] sm:$0xff]
        %v1620 = vld [vmem:[#allocation2 + $0xb0] sm:$0xff]
        %v1621 = vld [vmem:[#allocation2 + $0xc8] sm:$0xff]
        %v1622 = vld [vmem:[#allocation2 + $0xd0] sm:$0xff]
        %v1623 = vld [vmem:[#allocation2 + $0xe8] sm:$0xff]
        %v1624 = vld [vmem:[#allocation2 + $0xf0] sm:$0xff]
        %v1625 = vld [vmem:[#allocation2 + $0x108] sm:$0xff]
        %v1626 = vld [vmem:[#allocation2 + $0x110] sm:$0xff]
        %v1627 = vld [vmem:[#allocation2 + $0x128] sm:$0xff]
        %v1628 = vld [vmem:[#allocation2 + $0x130] sm:$0xff]
        %v1629 = vld [vmem:[#allocation2 + $0x148] sm:$0xff]
        %v1630 = vld [vmem:[#allocation2 + $0x150] sm:$0xff]
        %v1631 = vld [vmem:[#allocation2 + $0x168] sm:$0xff]
        %v1632 = vld [vmem:[#allocation2 + $0x170] sm:$0xff]
        %v1633 = vld [vmem:[#allocation2 + $0x188] sm:$0xff]
        %v1634 = vld [vmem:[#allocation2 + $0x190] sm:$0xff]
        %v1635 = vld [vmem:[#allocation2 + $0x1a8] sm:$0xff]
        %v1636 = vld [vmem:[#allocation2 + $0x1b0] sm:$0xff]
        %v1637 = vld [vmem:[#allocation2 + $0x1c8] sm:$0xff]
        %v1638 = vld [vmem:[#allocation2 + $0x1d0] sm:$0xff]
        %v1639 = vld [vmem:[#allocation2 + $0x1e8] sm:$0xff]
        %v1640 = vld [vmem:[#allocation2 + $0x1f0] sm:$0xff]
        %v1641 = vld [vmem:[%s7 + $0x1] sm:$0x1]
        %v1642 = vlaneseq
        %v1643 = vshrl.u32 %v1642, 7
        %v1644 = vsub.s32 0, %v1643
        %v1645 = vrot.slane %v1641, %v1644
        %v1646 = vmul.f32 %v1609, %v1645
        %v1647 = vmul.f32 %v1610, %v1645
        %v1648 = vmul.f32 %v1611, %v1645
        %v1649 = vmul.f32 %v1612, %v1645
        %v1650 = vmul.f32 %v1613, %v1645
        %v1651 = vmul.f32 %v1614, %v1645
        %v1652 = vmul.f32 %v1615, %v1645
        %v1653 = vmul.f32 %v1616, %v1645
        %v1654 = vmul.f32 %v1617, %v1645
        %v1655 = vmul.f32 %v1618, %v1645
        %v1656 = vmul.f32 %v1619, %v1645
        %v1657 = vmul.f32 %v1620, %v1645
        %v1658 = vmul.f32 %v1621, %v1645
        %v1659 = vmul.f32 %v1622, %v1645
        %v1660 = vmul.f32 %v1623, %v1645
        %v1661 = vmul.f32 %v1624, %v1645
        %v1662 = vmul.f32 %v1625, %v1645
        %v1663 = vmul.f32 %v1626, %v1645
        %v1664 = vmul.f32 %v1627, %v1645
        %v1665 = vmul.f32 %v1628, %v1645
        %v1666 = vmul.f32 %v1629, %v1645
        %v1667 = vmul.f32 %v1630, %v1645
        %v1668 = vmul.f32 %v1631, %v1645
        %v1669 = vmul.f32 %v1632, %v1645
        %v1670 = vmul.f32 %v1633, %v1645
        %v1671 = vmul.f32 %v1634, %v1645
        %v1672 = vmul.f32 %v1635, %v1645
        %v1673 = vmul.f32 %v1636, %v1645
        %v1674 = vmul.f32 %v1637, %v1645
        %v1675 = vmul.f32 %v1638, %v1645
        %v1676 = vmul.f32 %v1639, %v1645
        %v1677 = vmul.f32 %v1640, %v1645
        %v1678 = vadd.f32 %v1577, %v1646
        %v1679 = vadd.f32 %v1578, %v1647
        %v1680 = vadd.f32 %v1579, %v1648
        %v1681 = vadd.f32 %v1580, %v1649
        %v1682 = vadd.f32 %v1581, %v1650
        %v1683 = vadd.f32 %v1582, %v1651
        %v1684 = vadd.f32 %v1583, %v1652
        %v1685 = vadd.f32 %v1584, %v1653
        %v1686 = vadd.f32 %v1585, %v1654
        %v1687 = vadd.f32 %v1586, %v1655
        %v1688 = vadd.f32 %v1587, %v1656
        %v1689 = vadd.f32 %v1588, %v1657
        %v1690 = vadd.f32 %v1589, %v1658
        %v1691 = vadd.f32 %v1590, %v1659
        %v1692 = vadd.f32 %v1591, %v1660
        %v1693 = vadd.f32 %v1592, %v1661
        %v1694 = vadd.f32 %v1593, %v1662
        %v1695 = vadd.f32 %v1594, %v1663
        %v1696 = vadd.f32 %v1595, %v1664
        %v1697 = vadd.f32 %v1596, %v1665
        %v1698 = vadd.f32 %v1597, %v1666
        %v1699 = vadd.f32 %v1598, %v1667
        %v1700 = vadd.f32 %v1599, %v1668
        %v1701 = vadd.f32 %v1600, %v1669
        %v1702 = vadd.f32 %v1601, %v1670
        %v1703 = vadd.f32 %v1602, %v1671
        %v1704 = vadd.f32 %v1603, %v1672
        %v1705 = vadd.f32 %v1604, %v1673
        %v1706 = vadd.f32 %v1605, %v1674
        %v1707 = vadd.f32 %v1606, %v1675
        %v1708 = vadd.f32 %v1607, %v1676
        %v1709 = vadd.f32 %v1608, %v1677
        %v1710 = vld [vmem:[#allocation2 + $0x9] sm:$0xff]
        %v1711 = vld [vmem:[#allocation2 + $0x11] sm:$0xff]
        %v1712 = vld [vmem:[#allocation2 + $0x29] sm:$0xff]
        %v1713 = vld [vmem:[#allocation2 + $0x31] sm:$0xff]
        %v1714 = vld [vmem:[#allocation2 + $0x49] sm:$0xff]
        %v1715 = vld [vmem:[#allocation2 + $0x51] sm:$0xff]
        %v1716 = vld [vmem:[#allocation2 + $0x69] sm:$0xff]
        %v1717 = vld [vmem:[#allocation2 + $0x71] sm:$0xff]
        %v1718 = vld [vmem:[#allocation2 + $0x89] sm:$0xff]
        %v1719 = vld [vmem:[#allocation2 + $0x91] sm:$0xff]
        %v1720 = vld [vmem:[#allocation2 + $0xa9] sm:$0xff]
        %v1721 = vld [vmem:[#allocation2 + $0xb1] sm:$0xff]
        %v1722 = vld [vmem:[#allocation2 + $0xc9] sm:$0xff]
        %v1723 = vld [vmem:[#allocation2 + $0xd1] sm:$0xff]
        %v1724 = vld [vmem:[#allocation2 + $0xe9] sm:$0xff]
        %v1725 = vld [vmem:[#allocation2 + $0xf1] sm:$0xff]
        %v1726 = vld [vmem:[#allocation2 + $0x109] sm:$0xff]
        %v1727 = vld [vmem:[#allocation2 + $0x111] sm:$0xff]
        %v1728 = vld [vmem:[#allocation2 + $0x129] sm:$0xff]
        %v1729 = vld [vmem:[#allocation2 + $0x131] sm:$0xff]
        %v1730 = vld [vmem:[#allocation2 + $0x149] sm:$0xff]
        %v1731 = vld [vmem:[#allocation2 + $0x151] sm:$0xff]
        %v1732 = vld [vmem:[#allocation2 + $0x169] sm:$0xff]
        %v1733 = vld [vmem:[#allocation2 + $0x171] sm:$0xff]
        %v1734 = vld [vmem:[#allocation2 + $0x189] sm:$0xff]
        %v1735 = vld [vmem:[#allocation2 + $0x191] sm:$0xff]
        %v1736 = vld [vmem:[#allocation2 + $0x1a9] sm:$0xff]
        %v1737 = vld [vmem:[#allocation2 + $0x1b1] sm:$0xff]
        %v1738 = vld [vmem:[#allocation2 + $0x1c9] sm:$0xff]
        %v1739 = vld [vmem:[#allocation2 + $0x1d1] sm:$0xff]
        %v1740 = vld [vmem:[#allocation2 + $0x1e9] sm:$0xff]
        %v1741 = vld [vmem:[#allocation2 + $0x1f1] sm:$0xff]
        %v1742 = vld [vmem:[%s7 + $0x2] sm:$0x1]
        %v1743 = vlaneseq
        %v1744 = vshrl.u32 %v1743, 7
        %v1745 = vsub.s32 0, %v1744
        %v1746 = vrot.slane %v1742, %v1745
        %v1747 = vmul.f32 %v1710, %v1746
        %v1748 = vmul.f32 %v1711, %v1746
        %v1749 = vmul.f32 %v1712, %v1746
        %v1750 = vmul.f32 %v1713, %v1746
        %v1751 = vmul.f32 %v1714, %v1746
        %v1752 = vmul.f32 %v1715, %v1746
        %v1753 = vmul.f32 %v1716, %v1746
        %v1754 = vmul.f32 %v1717, %v1746
        %v1755 = vmul.f32 %v1718, %v1746
        %v1756 = vmul.f32 %v1719, %v1746
        %v1757 = vmul.f32 %v1720, %v1746
        %v1758 = vmul.f32 %v1721, %v1746
        %v1759 = vmul.f32 %v1722, %v1746
        %v1760 = vmul.f32 %v1723, %v1746
        %v1761 = vmul.f32 %v1724, %v1746
        %v1762 = vmul.f32 %v1725, %v1746
        %v1763 = vmul.f32 %v1726, %v1746
        %v1764 = vmul.f32 %v1727, %v1746
        %v1765 = vmul.f32 %v1728, %v1746
        %v1766 = vmul.f32 %v1729, %v1746
        %v1767 = vmul.f32 %v1730, %v1746
        %v1768 = vmul.f32 %v1731, %v1746
        %v1769 = vmul.f32 %v1732, %v1746
        %v1770 = vmul.f32 %v1733, %v1746
        %v1771 = vmul.f32 %v1734, %v1746
        %v1772 = vmul.f32 %v1735, %v1746
        %v1773 = vmul.f32 %v1736, %v1746
        %v1774 = vmul.f32 %v1737, %v1746
        %v1775 = vmul.f32 %v1738, %v1746
        %v1776 = vmul.f32 %v1739, %v1746
        %v1777 = vmul.f32 %v1740, %v1746
        %v1778 = vmul.f32 %v1741, %v1746
        %v1779 = vadd.f32 %v1678, %v1747
        %v1780 = vadd.f32 %v1679, %v1748
        %v1781 = vadd.f32 %v1680, %v1749
        %v1782 = vadd.f32 %v1681, %v1750
        %v1783 = vadd.f32 %v1682, %v1751
        %v1784 = vadd.f32 %v1683, %v1752
        %v1785 = vadd.f32 %v1684, %v1753
        %v1786 = vadd.f32 %v1685, %v1754
        %v1787 = vadd.f32 %v1686, %v1755
        %v1788 = vadd.f32 %v1687, %v1756
        %v1789 = vadd.f32 %v1688, %v1757
        %v1790 = vadd.f32 %v1689, %v1758
        %v1791 = vadd.f32 %v1690, %v1759
        %v1792 = vadd.f32 %v1691, %v1760
        %v1793 = vadd.f32 %v1692, %v1761
        %v1794 = vadd.f32 %v1693, %v1762
        %v1795 = vadd.f32 %v1694, %v1763
        %v1796 = vadd.f32 %v1695, %v1764
        %v1797 = vadd.f32 %v1696, %v1765
        %v1798 = vadd.f32 %v1697, %v1766
        %v1799 = vadd.f32 %v1698, %v1767
        %v1800 = vadd.f32 %v1699, %v1768
        %v1801 = vadd.f32 %v1700, %v1769
        %v1802 = vadd.f32 %v1701, %v1770
        %v1803 = vadd.f32 %v1702, %v1771
        %v1804 = vadd.f32 %v1703, %v1772
        %v1805 = vadd.f32 %v1704, %v1773
        %v1806 = vadd.f32 %v1705, %v1774
        %v1807 = vadd.f32 %v1706, %v1775
        %v1808 = vadd.f32 %v1707, %v1776
        %v1809 = vadd.f32 %v1708, %v1777
        %v1810 = vadd.f32 %v1709, %v1778
        %v1811 = vld [vmem:[%s1460 + $0x7] sm:$0xff]
        %v1812 = vld [vmem:[%s1460 + $0xf] sm:$0xff]
        %v1813 = vld [vmem:[%s1460 + $0x27] sm:$0xff]
        %v1814 = vld [vmem:[%s1460 + $0x2f] sm:$0xff]
        %v1815 = vld [vmem:[%s1460 + $0x47] sm:$0xff]
        %v1816 = vld [vmem:[%s1460 + $0x4f] sm:$0xff]
        %v1817 = vld [vmem:[%s1460 + $0x67] sm:$0xff]
        %v1818 = vld [vmem:[%s1460 + $0x6f] sm:$0xff]
        %v1819 = vld [vmem:[%s1460 + $0x87] sm:$0xff]
        %v1820 = vld [vmem:[%s1460 + $0x8f] sm:$0xff]
        %v1821 = vld [vmem:[%s1460 + $0xa7] sm:$0xff]
        %v1822 = vld [vmem:[%s1460 + $0xaf] sm:$0xff]
        %v1823 = vld [vmem:[%s1460 + $0xc7] sm:$0xff]
        %v1824 = vld [vmem:[%s1460 + $0xcf] sm:$0xff]
        %v1825 = vld [vmem:[%s1460 + $0xe7] sm:$0xff]
        %v1826 = vld [vmem:[%s1460 + $0xef] sm:$0xff]
        %v1827 = vld [vmem:[%s1460 + $0x107] sm:$0xff]
        %v1828 = vld [vmem:[%s1460 + $0x10f] sm:$0xff]
        %v1829 = vld [vmem:[%s1460 + $0x127] sm:$0xff]
        %v1830 = vld [vmem:[%s1460 + $0x12f] sm:$0xff]
        %v1831 = vld [vmem:[%s1460 + $0x147] sm:$0xff]
        %v1832 = vld [vmem:[%s1460 + $0x14f] sm:$0xff]
        %v1833 = vld [vmem:[%s1460 + $0x167] sm:$0xff]
        %v1834 = vld [vmem:[%s1460 + $0x16f] sm:$0xff]
        %v1835 = vld [vmem:[%s1460 + $0x187] sm:$0xff]
        %v1836 = vld [vmem:[%s1460 + $0x18f] sm:$0xff]
        %v1837 = vld [vmem:[%s1460 + $0x1a7] sm:$0xff]
        %v1838 = vld [vmem:[%s1460 + $0x1af] sm:$0xff]
        %v1839 = vld [vmem:[%s1460 + $0x1c7] sm:$0xff]
        %v1840 = vld [vmem:[%s1460 + $0x1cf] sm:$0xff]
        %v1841 = vld [vmem:[%s1460 + $0x1e7] sm:$0xff]
        %v1842 = vld [vmem:[%s1460 + $0x1ef] sm:$0xff]
        %v1843 = vld [vmem:[%s7 + $0x3] sm:$0x1]
        %v1844 = vlaneseq
        %v1845 = vshrl.u32 %v1844, 7
        %v1846 = vsub.s32 0, %v1845
        %v1847 = vrot.slane %v1843, %v1846
        %v1848 = vmul.f32 %v1811, %v1847
        %v1849 = vmul.f32 %v1812, %v1847
        %v1850 = vmul.f32 %v1813, %v1847
        %v1851 = vmul.f32 %v1814, %v1847
        %v1852 = vmul.f32 %v1815, %v1847
        %v1853 = vmul.f32 %v1816, %v1847
        %v1854 = vmul.f32 %v1817, %v1847
        %v1855 = vmul.f32 %v1818, %v1847
        %v1856 = vmul.f32 %v1819, %v1847
        %v1857 = vmul.f32 %v1820, %v1847
        %v1858 = vmul.f32 %v1821, %v1847
        %v1859 = vmul.f32 %v1822, %v1847
        %v1860 = vmul.f32 %v1823, %v1847
        %v1861 = vmul.f32 %v1824, %v1847
        %v1862 = vmul.f32 %v1825, %v1847
        %v1863 = vmul.f32 %v1826, %v1847
        %v1864 = vmul.f32 %v1827, %v1847
        %v1865 = vmul.f32 %v1828, %v1847
        %v1866 = vmul.f32 %v1829, %v1847
        %v1867 = vmul.f32 %v1830, %v1847
        %v1868 = vmul.f32 %v1831, %v1847
        %v1869 = vmul.f32 %v1832, %v1847
        %v1870 = vmul.f32 %v1833, %v1847
        %v1871 = vmul.f32 %v1834, %v1847
        %v1872 = vmul.f32 %v1835, %v1847
        %v1873 = vmul.f32 %v1836, %v1847
        %v1874 = vmul.f32 %v1837, %v1847
        %v1875 = vmul.f32 %v1838, %v1847
        %v1876 = vmul.f32 %v1839, %v1847
        %v1877 = vmul.f32 %v1840, %v1847
        %v1878 = vmul.f32 %v1841, %v1847
        %v1879 = vmul.f32 %v1842, %v1847
        %v1880 = vadd.f32 %v1779, %v1848
        %v1881 = vadd.f32 %v1780, %v1849
        %v1882 = vadd.f32 %v1781, %v1850
        %v1883 = vadd.f32 %v1782, %v1851
        %v1884 = vadd.f32 %v1783, %v1852
        %v1885 = vadd.f32 %v1784, %v1853
        %v1886 = vadd.f32 %v1785, %v1854
        %v1887 = vadd.f32 %v1786, %v1855
        %v1888 = vadd.f32 %v1787, %v1856
        %v1889 = vadd.f32 %v1788, %v1857
        %v1890 = vadd.f32 %v1789, %v1858
        %v1891 = vadd.f32 %v1790, %v1859
        %v1892 = vadd.f32 %v1791, %v1860
        %v1893 = vadd.f32 %v1792, %v1861
        %v1894 = vadd.f32 %v1793, %v1862
        %v1895 = vadd.f32 %v1794, %v1863
        %v1896 = vadd.f32 %v1795, %v1864
        %v1897 = vadd.f32 %v1796, %v1865
        %v1898 = vadd.f32 %v1797, %v1866
        %v1899 = vadd.f32 %v1798, %v1867
        %v1900 = vadd.f32 %v1799, %v1868
        %v1901 = vadd.f32 %v1800, %v1869
        %v1902 = vadd.f32 %v1801, %v1870
        %v1903 = vadd.f32 %v1802, %v1871
        %v1904 = vadd.f32 %v1803, %v1872
        %v1905 = vadd.f32 %v1804, %v1873
        %v1906 = vadd.f32 %v1805, %v1874
        %v1907 = vadd.f32 %v1806, %v1875
        %v1908 = vadd.f32 %v1807, %v1876
        %v1909 = vadd.f32 %v1808, %v1877
        %v1910 = vadd.f32 %v1809, %v1878
        %v1911 = vadd.f32 %v1810, %v1879
        %v1912 = vld [vmem:[%s1460 + $0x8] sm:$0xff]
        %v1913 = vld [vmem:[%s1460 + $0x10] sm:$0xff]
        %v1914 = vld [vmem:[%s1460 + $0x28] sm:$0xff]
        %v1915 = vld [vmem:[%s1460 + $0x30] sm:$0xff]
        %v1916 = vld [vmem:[%s1460 + $0x48] sm:$0xff]
        %v1917 = vld [vmem:[%s1460 + $0x50] sm:$0xff]
        %v1918 = vld [vmem:[%s1460 + $0x68] sm:$0xff]
        %v1919 = vld [vmem:[%s1460 + $0x70] sm:$0xff]
        %v1920 = vld [vmem:[%s1460 + $0x88] sm:$0xff]
        %v1921 = vld [vmem:[%s1460 + $0x90] sm:$0xff]
        %v1922 = vld [vmem:[%s1460 + $0xa8] sm:$0xff]
        %v1923 = vld [vmem:[%s1460 + $0xb0] sm:$0xff]
        %v1924 = vld [vmem:[%s1460 + $0xc8] sm:$0xff]
        %v1925 = vld [vmem:[%s1460 + $0xd0] sm:$0xff]
        %v1926 = vld [vmem:[%s1460 + $0xe8] sm:$0xff]
        %v1927 = vld [vmem:[%s1460 + $0xf0] sm:$0xff]
        %v1928 = vld [vmem:[%s1460 + $0x108] sm:$0xff]
        %v1929 = vld [vmem:[%s1460 + $0x110] sm:$0xff]
        %v1930 = vld [vmem:[%s1460 + $0x128] sm:$0xff]
        %v1931 = vld [vmem:[%s1460 + $0x130] sm:$0xff]
        %v1932 = vld [vmem:[%s1460 + $0x148] sm:$0xff]
        %v1933 = vld [vmem:[%s1460 + $0x150] sm:$0xff]
        %v1934 = vld [vmem:[%s1460 + $0x168] sm:$0xff]
        %v1935 = vld [vmem:[%s1460 + $0x170] sm:$0xff]
        %v1936 = vld [vmem:[%s1460 + $0x188] sm:$0xff]
        %v1937 = vld [vmem:[%s1460 + $0x190] sm:$0xff]
        %v1938 = vld [vmem:[%s1460 + $0x1a8] sm:$0xff]
        %v1939 = vld [vmem:[%s1460 + $0x1b0] sm:$0xff]
        %v1940 = vld [vmem:[%s1460 + $0x1c8] sm:$0xff]
        %v1941 = vld [vmem:[%s1460 + $0x1d0] sm:$0xff]
        %v1942 = vld [vmem:[%s1460 + $0x1e8] sm:$0xff]
        %v1943 = vld [vmem:[%s1460 + $0x1f0] sm:$0xff]
        %v1944 = vld [vmem:[%s7 + $0x4] sm:$0x1]
        %v1945 = vlaneseq
        %v1946 = vshrl.u32 %v1945, 7
        %v1947 = vsub.s32 0, %v1946
        %v1948 = vrot.slane %v1944, %v1947
        %v1949 = vmul.f32 %v1912, %v1948
        %v1950 = vmul.f32 %v1913, %v1948
        %v1951 = vmul.f32 %v1914, %v1948
        %v1952 = vmul.f32 %v1915, %v1948
        %v1953 = vmul.f32 %v1916, %v1948
        %v1954 = vmul.f32 %v1917, %v1948
        %v1955 = vmul.f32 %v1918, %v1948
        %v1956 = vmul.f32 %v1919, %v1948
        %v1957 = vmul.f32 %v1920, %v1948
        %v1958 = vmul.f32 %v1921, %v1948
        %v1959 = vmul.f32 %v1922, %v1948
        %v1960 = vmul.f32 %v1923, %v1948
        %v1961 = vmul.f32 %v1924, %v1948
        %v1962 = vmul.f32 %v1925, %v1948
        %v1963 = vmul.f32 %v1926, %v1948
        %v1964 = vmul.f32 %v1927, %v1948
        %v1965 = vmul.f32 %v1928, %v1948
        %v1966 = vmul.f32 %v1929, %v1948
        %v1967 = vmul.f32 %v1930, %v1948
        %v1968 = vmul.f32 %v1931, %v1948
        %v1969 = vmul.f32 %v1932, %v1948
        %v1970 = vmul.f32 %v1933, %v1948
        %v1971 = vmul.f32 %v1934, %v1948
        %v1972 = vmul.f32 %v1935, %v1948
        %v1973 = vmul.f32 %v1936, %v1948
        %v1974 = vmul.f32 %v1937, %v1948
        %v1975 = vmul.f32 %v1938, %v1948
        %v1976 = vmul.f32 %v1939, %v1948
        %v1977 = vmul.f32 %v1940, %v1948
        %v1978 = vmul.f32 %v1941, %v1948
        %v1979 = vmul.f32 %v1942, %v1948
        %v1980 = vmul.f32 %v1943, %v1948
        %v1981 = vadd.f32 %v1880, %v1949
        %v1982 = vadd.f32 %v1881, %v1950
        %v1983 = vadd.f32 %v1882, %v1951
        %v1984 = vadd.f32 %v1883, %v1952
        %v1985 = vadd.f32 %v1884, %v1953
        %v1986 = vadd.f32 %v1885, %v1954
        %v1987 = vadd.f32 %v1886, %v1955
        %v1988 = vadd.f32 %v1887, %v1956
        %v1989 = vadd.f32 %v1888, %v1957
        %v1990 = vadd.f32 %v1889, %v1958
        %v1991 = vadd.f32 %v1890, %v1959
        %v1992 = vadd.f32 %v1891, %v1960
        %v1993 = vadd.f32 %v1892, %v1961
        %v1994 = vadd.f32 %v1893, %v1962
        %v1995 = vadd.f32 %v1894, %v1963
        %v1996 = vadd.f32 %v1895, %v1964
        %v1997 = vadd.f32 %v1896, %v1965
        %v1998 = vadd.f32 %v1897, %v1966
        %v1999 = vadd.f32 %v1898, %v1967
        %v2000 = vadd.f32 %v1899, %v1968
        %v2001 = vadd.f32 %v1900, %v1969
        %v2002 = vadd.f32 %v1901, %v1970
        %v2003 = vadd.f32 %v1902, %v1971
        %v2004 = vadd.f32 %v1903, %v1972
        %v2005 = vadd.f32 %v1904, %v1973
        %v2006 = vadd.f32 %v1905, %v1974
        %v2007 = vadd.f32 %v1906, %v1975
        %v2008 = vadd.f32 %v1907, %v1976
        %v2009 = vadd.f32 %v1908, %v1977
        %v2010 = vadd.f32 %v1909, %v1978
        %v2011 = vadd.f32 %v1910, %v1979
        %v2012 = vadd.f32 %v1911, %v1980
        %v2013 = vld [vmem:[%s1460 + $0x9] sm:$0xff]
        %v2014 = vld [vmem:[%s1460 + $0x11] sm:$0xff]
        %v2015 = vld [vmem:[%s1460 + $0x29] sm:$0xff]
        %v2016 = vld [vmem:[%s1460 + $0x31] sm:$0xff]
        %v2017 = vld [vmem:[%s1460 + $0x49] sm:$0xff]
        %v2018 = vld [vmem:[%s1460 + $0x51] sm:$0xff]
        %v2019 = vld [vmem:[%s1460 + $0x69] sm:$0xff]
        %v2020 = vld [vmem:[%s1460 + $0x71] sm:$0xff]
        %v2021 = vld [vmem:[%s1460 + $0x89] sm:$0xff]
        %v2022 = vld [vmem:[%s1460 + $0x91] sm:$0xff]
        %v2023 = vld [vmem:[%s1460 + $0xa9] sm:$0xff]
        %v2024 = vld [vmem:[%s1460 + $0xb1] sm:$0xff]
        %v2025 = vld [vmem:[%s1460 + $0xc9] sm:$0xff]
        %v2026 = vld [vmem:[%s1460 + $0xd1] sm:$0xff]
        %v2027 = vld [vmem:[%s1460 + $0xe9] sm:$0xff]
        %v2028 = vld [vmem:[%s1460 + $0xf1] sm:$0xff]
        %v2029 = vld [vmem:[%s1460 + $0x109] sm:$0xff]
        %v2030 = vld [vmem:[%s1460 + $0x111] sm:$0xff]
        %v2031 = vld [vmem:[%s1460 + $0x129] sm:$0xff]
        %v2032 = vld [vmem:[%s1460 + $0x131] sm:$0xff]
        %v2033 = vld [vmem:[%s1460 + $0x149] sm:$0xff]
        %v2034 = vld [vmem:[%s1460 + $0x151] sm:$0xff]
        %v2035 = vld [vmem:[%s1460 + $0x169] sm:$0xff]
        %v2036 = vld [vmem:[%s1460 + $0x171] sm:$0xff]
        %v2037 = vld [vmem:[%s1460 + $0x189] sm:$0xff]
        %v2038 = vld [vmem:[%s1460 + $0x191] sm:$0xff]
        %v2039 = vld [vmem:[%s1460 + $0x1a9] sm:$0xff]
        %v2040 = vld [vmem:[%s1460 + $0x1b1] sm:$0xff]
        %v2041 = vld [vmem:[%s1460 + $0x1c9] sm:$0xff]
        %v2042 = vld [vmem:[%s1460 + $0x1d1] sm:$0xff]
        %v2043 = vld [vmem:[%s1460 + $0x1e9] sm:$0xff]
        %v2044 = vld [vmem:[%s1460 + $0x1f1] sm:$0xff]
        %v2045 = vld [vmem:[%s7 + $0x5] sm:$0x1]
        %v2046 = vlaneseq
        %v2047 = vshrl.u32 %v2046, 7
        %v2048 = vsub.s32 0, %v2047
        %v2049 = vrot.slane %v2045, %v2048
        %v2050 = vmul.f32 %v2013, %v2049
        %v2051 = vmul.f32 %v2014, %v2049
        %v2052 = vmul.f32 %v2015, %v2049
        %v2053 = vmul.f32 %v2016, %v2049
        %v2054 = vmul.f32 %v2017, %v2049
        %v2055 = vmul.f32 %v2018, %v2049
        %v2056 = vmul.f32 %v2019, %v2049
        %v2057 = vmul.f32 %v2020, %v2049
        %v2058 = vmul.f32 %v2021, %v2049
        %v2059 = vmul.f32 %v2022, %v2049
        %v2060 = vmul.f32 %v2023, %v2049
        %v2061 = vmul.f32 %v2024, %v2049
        %v2062 = vmul.f32 %v2025, %v2049
        %v2063 = vmul.f32 %v2026, %v2049
        %v2064 = vmul.f32 %v2027, %v2049
        %v2065 = vmul.f32 %v2028, %v2049
        %v2066 = vmul.f32 %v2029, %v2049
        %v2067 = vmul.f32 %v2030, %v2049
        %v2068 = vmul.f32 %v2031, %v2049
        %v2069 = vmul.f32 %v2032, %v2049
        %v2070 = vmul.f32 %v2033, %v2049
        %v2071 = vmul.f32 %v2034, %v2049
        %v2072 = vmul.f32 %v2035, %v2049
        %v2073 = vmul.f32 %v2036, %v2049
        %v2074 = vmul.f32 %v2037, %v2049
        %v2075 = vmul.f32 %v2038, %v2049
        %v2076 = vmul.f32 %v2039, %v2049
        %v2077 = vmul.f32 %v2040, %v2049
        %v2078 = vmul.f32 %v2041, %v2049
        %v2079 = vmul.f32 %v2042, %v2049
        %v2080 = vmul.f32 %v2043, %v2049
        %v2081 = vmul.f32 %v2044, %v2049
        %v2082 = vadd.f32 %v1981, %v2050
        %v2083 = vadd.f32 %v1982, %v2051
        %v2084 = vadd.f32 %v1983, %v2052
        %v2085 = vadd.f32 %v1984, %v2053
        %v2086 = vadd.f32 %v1985, %v2054
        %v2087 = vadd.f32 %v1986, %v2055
        %v2088 = vadd.f32 %v1987, %v2056
        %v2089 = vadd.f32 %v1988, %v2057
        %v2090 = vadd.f32 %v1989, %v2058
        %v2091 = vadd.f32 %v1990, %v2059
        %v2092 = vadd.f32 %v1991, %v2060
        %v2093 = vadd.f32 %v1992, %v2061
        %v2094 = vadd.f32 %v1993, %v2062
        %v2095 = vadd.f32 %v1994, %v2063
        %v2096 = vadd.f32 %v1995, %v2064
        %v2097 = vadd.f32 %v1996, %v2065
        %v2098 = vadd.f32 %v1997, %v2066
        %v2099 = vadd.f32 %v1998, %v2067
        %v2100 = vadd.f32 %v1999, %v2068
        %v2101 = vadd.f32 %v2000, %v2069
        %v2102 = vadd.f32 %v2001, %v2070
        %v2103 = vadd.f32 %v2002, %v2071
        %v2104 = vadd.f32 %v2003, %v2072
        %v2105 = vadd.f32 %v2004, %v2073
        %v2106 = vadd.f32 %v2005, %v2074
        %v2107 = vadd.f32 %v2006, %v2075
        %v2108 = vadd.f32 %v2007, %v2076
        %v2109 = vadd.f32 %v2008, %v2077
        %v2110 = vadd.f32 %v2009, %v2078
        %v2111 = vadd.f32 %v2010, %v2079
        %v2112 = vadd.f32 %v2011, %v2080
        %v2113 = vadd.f32 %v2012, %v2081
        %v2114 = vld [vmem:[%s1463 + $0x7] sm:$0xff]
        %v2115 = vld [vmem:[%s1463 + $0xf] sm:$0xff]
        %v2116 = vld [vmem:[%s1463 + $0x27] sm:$0xff]
        %v2117 = vld [vmem:[%s1463 + $0x2f] sm:$0xff]
        %v2118 = vld [vmem:[%s1463 + $0x47] sm:$0xff]
        %v2119 = vld [vmem:[%s1463 + $0x4f] sm:$0xff]
        %v2120 = vld [vmem:[%s1463 + $0x67] sm:$0xff]
        %v2121 = vld [vmem:[%s1463 + $0x6f] sm:$0xff]
        %v2122 = vld [vmem:[%s1463 + $0x87] sm:$0xff]
        %v2123 = vld [vmem:[%s1463 + $0x8f] sm:$0xff]
        %v2124 = vld [vmem:[%s1463 + $0xa7] sm:$0xff]
        %v2125 = vld [vmem:[%s1463 + $0xaf] sm:$0xff]
        %v2126 = vld [vmem:[%s1463 + $0xc7] sm:$0xff]
        %v2127 = vld [vmem:[%s1463 + $0xcf] sm:$0xff]
        %v2128 = vld [vmem:[%s1463 + $0xe7] sm:$0xff]
        %v2129 = vld [vmem:[%s1463 + $0xef] sm:$0xff]
        %v2130 = vld [vmem:[%s1463 + $0x107] sm:$0xff]
        %v2131 = vld [vmem:[%s1463 + $0x10f] sm:$0xff]
        %v2132 = vld [vmem:[%s1463 + $0x127] sm:$0xff]
        %v2133 = vld [vmem:[%s1463 + $0x12f] sm:$0xff]
        %v2134 = vld [vmem:[%s1463 + $0x147] sm:$0xff]
        %v2135 = vld [vmem:[%s1463 + $0x14f] sm:$0xff]
        %v2136 = vld [vmem:[%s1463 + $0x167] sm:$0xff]
        %v2137 = vld [vmem:[%s1463 + $0x16f] sm:$0xff]
        %v2138 = vld [vmem:[%s1463 + $0x187] sm:$0xff]
        %v2139 = vld [vmem:[%s1463 + $0x18f] sm:$0xff]
        %v2140 = vld [vmem:[%s1463 + $0x1a7] sm:$0xff]
        %v2141 = vld [vmem:[%s1463 + $0x1af] sm:$0xff]
        %v2142 = vld [vmem:[%s1463 + $0x1c7] sm:$0xff]
        %v2143 = vld [vmem:[%s1463 + $0x1cf] sm:$0xff]
        %v2144 = vld [vmem:[%s1463 + $0x1e7] sm:$0xff]
        %v2145 = vld [vmem:[%s1463 + $0x1ef] sm:$0xff]
        %v2146 = vld [vmem:[%s7 + $0x6] sm:$0x1]
        %v2147 = vlaneseq
        %v2148 = vshrl.u32 %v2147, 7
        %v2149 = vsub.s32 0, %v2148
        %v2150 = vrot.slane %v2146, %v2149
        %v2151 = vmul.f32 %v2114, %v2150
        %v2152 = vmul.f32 %v2115, %v2150
        %v2153 = vmul.f32 %v2116, %v2150
        %v2154 = vmul.f32 %v2117, %v2150
        %v2155 = vmul.f32 %v2118, %v2150
        %v2156 = vmul.f32 %v2119, %v2150
        %v2157 = vmul.f32 %v2120, %v2150
        %v2158 = vmul.f32 %v2121, %v2150
        %v2159 = vmul.f32 %v2122, %v2150
        %v2160 = vmul.f32 %v2123, %v2150
        %v2161 = vmul.f32 %v2124, %v2150
        %v2162 = vmul.f32 %v2125, %v2150
        %v2163 = vmul.f32 %v2126, %v2150
        %v2164 = vmul.f32 %v2127, %v2150
        %v2165 = vmul.f32 %v2128, %v2150
        %v2166 = vmul.f32 %v2129, %v2150
        %v2167 = vmul.f32 %v2130, %v2150
        %v2168 = vmul.f32 %v2131, %v2150
        %v2169 = vmul.f32 %v2132, %v2150
        %v2170 = vmul.f32 %v2133, %v2150
        %v2171 = vmul.f32 %v2134, %v2150
        %v2172 = vmul.f32 %v2135, %v2150
        %v2173 = vmul.f32 %v2136, %v2150
        %v2174 = vmul.f32 %v2137, %v2150
        %v2175 = vmul.f32 %v2138, %v2150
        %v2176 = vmul.f32 %v2139, %v2150
        %v2177 = vmul.f32 %v2140, %v2150
        %v2178 = vmul.f32 %v2141, %v2150
        %v2179 = vmul.f32 %v2142, %v2150
        %v2180 = vmul.f32 %v2143, %v2150
        %v2181 = vmul.f32 %v2144, %v2150
        %v2182 = vmul.f32 %v2145, %v2150
        %v2183 = vadd.f32 %v2082, %v2151
        %v2184 = vadd.f32 %v2083, %v2152
        %v2185 = vadd.f32 %v2084, %v2153
        %v2186 = vadd.f32 %v2085, %v2154
        %v2187 = vadd.f32 %v2086, %v2155
        %v2188 = vadd.f32 %v2087, %v2156
        %v2189 = vadd.f32 %v2088, %v2157
        %v2190 = vadd.f32 %v2089, %v2158
        %v2191 = vadd.f32 %v2090, %v2159
        %v2192 = vadd.f32 %v2091, %v2160
        %v2193 = vadd.f32 %v2092, %v2161
        %v2194 = vadd.f32 %v2093, %v2162
        %v2195 = vadd.f32 %v2094, %v2163
        %v2196 = vadd.f32 %v2095, %v2164
        %v2197 = vadd.f32 %v2096, %v2165
        %v2198 = vadd.f32 %v2097, %v2166
        %v2199 = vadd.f32 %v2098, %v2167
        %v2200 = vadd.f32 %v2099, %v2168
        %v2201 = vadd.f32 %v2100, %v2169
        %v2202 = vadd.f32 %v2101, %v2170
        %v2203 = vadd.f32 %v2102, %v2171
        %v2204 = vadd.f32 %v2103, %v2172
        %v2205 = vadd.f32 %v2104, %v2173
        %v2206 = vadd.f32 %v2105, %v2174
        %v2207 = vadd.f32 %v2106, %v2175
        %v2208 = vadd.f32 %v2107, %v2176
        %v2209 = vadd.f32 %v2108, %v2177
        %v2210 = vadd.f32 %v2109, %v2178
        %v2211 = vadd.f32 %v2110, %v2179
        %v2212 = vadd.f32 %v2111, %v2180
        %v2213 = vadd.f32 %v2112, %v2181
        %v2214 = vadd.f32 %v2113, %v2182
        %v2215 = vld [vmem:[%s1463 + $0x8] sm:$0xff]
        %v2216 = vld [vmem:[%s1463 + $0x10] sm:$0xff]
        %v2217 = vld [vmem:[%s1463 + $0x28] sm:$0xff]
        %v2218 = vld [vmem:[%s1463 + $0x30] sm:$0xff]
        %v2219 = vld [vmem:[%s1463 + $0x48] sm:$0xff]
        %v2220 = vld [vmem:[%s1463 + $0x50] sm:$0xff]
        %v2221 = vld [vmem:[%s1463 + $0x68] sm:$0xff]
        %v2222 = vld [vmem:[%s1463 + $0x70] sm:$0xff]
        %v2223 = vld [vmem:[%s1463 + $0x88] sm:$0xff]
        %v2224 = vld [vmem:[%s1463 + $0x90] sm:$0xff]
        %v2225 = vld [vmem:[%s1463 + $0xa8] sm:$0xff]
        %v2226 = vld [vmem:[%s1463 + $0xb0] sm:$0xff]
        %v2227 = vld [vmem:[%s1463 + $0xc8] sm:$0xff]
        %v2228 = vld [vmem:[%s1463 + $0xd0] sm:$0xff]
        %v2229 = vld [vmem:[%s1463 + $0xe8] sm:$0xff]
        %v2230 = vld [vmem:[%s1463 + $0xf0] sm:$0xff]
        %v2231 = vld [vmem:[%s1463 + $0x108] sm:$0xff]
        %v2232 = vld [vmem:[%s1463 + $0x110] sm:$0xff]
        %v2233 = vld [vmem:[%s1463 + $0x128] sm:$0xff]
        %v2234 = vld [vmem:[%s1463 + $0x130] sm:$0xff]
        %v2235 = vld [vmem:[%s1463 + $0x148] sm:$0xff]
        %v2236 = vld [vmem:[%s1463 + $0x150] sm:$0xff]
        %v2237 = vld [vmem:[%s1463 + $0x168] sm:$0xff]
        %v2238 = vld [vmem:[%s1463 + $0x170] sm:$0xff]
        %v2239 = vld [vmem:[%s1463 + $0x188] sm:$0xff]
        %v2240 = vld [vmem:[%s1463 + $0x190] sm:$0xff]
        %v2241 = vld [vmem:[%s1463 + $0x1a8] sm:$0xff]
        %v2242 = vld [vmem:[%s1463 + $0x1b0] sm:$0xff]
        %v2243 = vld [vmem:[%s1463 + $0x1c8] sm:$0xff]
        %v2244 = vld [vmem:[%s1463 + $0x1d0] sm:$0xff]
        %v2245 = vld [vmem:[%s1463 + $0x1e8] sm:$0xff]
        %v2246 = vld [vmem:[%s1463 + $0x1f0] sm:$0xff]
        %v2247 = vld [vmem:[%s7 + $0x7] sm:$0x1]
        %v2248 = vlaneseq
        %v2249 = vshrl.u32 %v2248, 7
        %v2250 = vsub.s32 0, %v2249
        %v2251 = vrot.slane %v2247, %v2250
        %v2252 = vmul.f32 %v2215, %v2251
        %v2253 = vmul.f32 %v2216, %v2251
        %v2254 = vmul.f32 %v2217, %v2251
        %v2255 = vmul.f32 %v2218, %v2251
        %v2256 = vmul.f32 %v2219, %v2251
        %v2257 = vmul.f32 %v2220, %v2251
        %v2258 = vmul.f32 %v2221, %v2251
        %v2259 = vmul.f32 %v2222, %v2251
        %v2260 = vmul.f32 %v2223, %v2251
        %v2261 = vmul.f32 %v2224, %v2251
        %v2262 = vmul.f32 %v2225, %v2251
        %v2263 = vmul.f32 %v2226, %v2251
        %v2264 = vmul.f32 %v2227, %v2251
        %v2265 = vmul.f32 %v2228, %v2251
        %v2266 = vmul.f32 %v2229, %v2251
        %v2267 = vmul.f32 %v2230, %v2251
        %v2268 = vmul.f32 %v2231, %v2251
        %v2269 = vmul.f32 %v2232, %v2251
        %v2270 = vmul.f32 %v2233, %v2251
        %v2271 = vmul.f32 %v2234, %v2251
        %v2272 = vmul.f32 %v2235, %v2251
        %v2273 = vmul.f32 %v2236, %v2251
        %v2274 = vmul.f32 %v2237, %v2251
        %v2275 = vmul.f32 %v2238, %v2251
        %v2276 = vmul.f32 %v2239, %v2251
        %v2277 = vmul.f32 %v2240, %v2251
        %v2278 = vmul.f32 %v2241, %v2251
        %v2279 = vmul.f32 %v2242, %v2251
        %v2280 = vmul.f32 %v2243, %v2251
        %v2281 = vmul.f32 %v2244, %v2251
        %v2282 = vmul.f32 %v2245, %v2251
        %v2283 = vmul.f32 %v2246, %v2251
        %v2284 = vadd.f32 %v2183, %v2252
        %v2285 = vadd.f32 %v2184, %v2253
        %v2286 = vadd.f32 %v2185, %v2254
        %v2287 = vadd.f32 %v2186, %v2255
        %v2288 = vadd.f32 %v2187, %v2256
        %v2289 = vadd.f32 %v2188, %v2257
        %v2290 = vadd.f32 %v2189, %v2258
        %v2291 = vadd.f32 %v2190, %v2259
        %v2292 = vadd.f32 %v2191, %v2260
        %v2293 = vadd.f32 %v2192, %v2261
        %v2294 = vadd.f32 %v2193, %v2262
        %v2295 = vadd.f32 %v2194, %v2263
        %v2296 = vadd.f32 %v2195, %v2264
        %v2297 = vadd.f32 %v2196, %v2265
        %v2298 = vadd.f32 %v2197, %v2266
        %v2299 = vadd.f32 %v2198, %v2267
        %v2300 = vadd.f32 %v2199, %v2268
        %v2301 = vadd.f32 %v2200, %v2269
        %v2302 = vadd.f32 %v2201, %v2270
        %v2303 = vadd.f32 %v2202, %v2271
        %v2304 = vadd.f32 %v2203, %v2272
        %v2305 = vadd.f32 %v2204, %v2273
        %v2306 = vadd.f32 %v2205, %v2274
        %v2307 = vadd.f32 %v2206, %v2275
        %v2308 = vadd.f32 %v2207, %v2276
        %v2309 = vadd.f32 %v2208, %v2277
        %v2310 = vadd.f32 %v2209, %v2278
        %v2311 = vadd.f32 %v2210, %v2279
        %v2312 = vadd.f32 %v2211, %v2280
        %v2313 = vadd.f32 %v2212, %v2281
        %v2314 = vadd.f32 %v2213, %v2282
        %v2315 = vadd.f32 %v2214, %v2283
        %v2316 = vld [vmem:[%s1463 + $0x9] sm:$0xff]
        %v2317 = vld [vmem:[%s1463 + $0x11] sm:$0xff]
        %v2318 = vld [vmem:[%s1463 + $0x29] sm:$0xff]
        %v2319 = vld [vmem:[%s1463 + $0x31] sm:$0xff]
        %v2320 = vld [vmem:[%s1463 + $0x49] sm:$0xff]
        %v2321 = vld [vmem:[%s1463 + $0x51] sm:$0xff]
        %v2322 = vld [vmem:[%s1463 + $0x69] sm:$0xff]
        %v2323 = vld [vmem:[%s1463 + $0x71] sm:$0xff]
        %v2324 = vld [vmem:[%s1463 + $0x89] sm:$0xff]
        %v2325 = vld [vmem:[%s1463 + $0x91] sm:$0xff]
        %v2326 = vld [vmem:[%s1463 + $0xa9] sm:$0xff]
        %v2327 = vld [vmem:[%s1463 + $0xb1] sm:$0xff]
        %v2328 = vld [vmem:[%s1463 + $0xc9] sm:$0xff]
        %v2329 = vld [vmem:[%s1463 + $0xd1] sm:$0xff]
        %v2330 = vld [vmem:[%s1463 + $0xe9] sm:$0xff]
        %v2331 = vld [vmem:[%s1463 + $0xf1] sm:$0xff]
        %v2332 = vld [vmem:[%s1463 + $0x109] sm:$0xff]
        %v2333 = vld [vmem:[%s1463 + $0x111] sm:$0xff]
        %v2334 = vld [vmem:[%s1463 + $0x129] sm:$0xff]
        %v2335 = vld [vmem:[%s1463 + $0x131] sm:$0xff]
        %v2336 = vld [vmem:[%s1463 + $0x149] sm:$0xff]
        %v2337 = vld [vmem:[%s1463 + $0x151] sm:$0xff]
        %v2338 = vld [vmem:[%s1463 + $0x169] sm:$0xff]
        %v2339 = vld [vmem:[%s1463 + $0x171] sm:$0xff]
        %v2340 = vld [vmem:[%s1463 + $0x189] sm:$0xff]
        %v2341 = vld [vmem:[%s1463 + $0x191] sm:$0xff]
        %v2342 = vld [vmem:[%s1463 + $0x1a9] sm:$0xff]
        %v2343 = vld [vmem:[%s1463 + $0x1b1] sm:$0xff]
        %v2344 = vld [vmem:[%s1463 + $0x1c9] sm:$0xff]
        %v2345 = vld [vmem:[%s1463 + $0x1d1] sm:$0xff]
        %v2346 = vld [vmem:[%s1463 + $0x1e9] sm:$0xff]
        %v2347 = vld [vmem:[%s1463 + $0x1f1] sm:$0xff]
        %v2348 = vld [vmem:[%s7 + $0x8] sm:$0x1]
        %v2349 = vlaneseq
        %v2350 = vshrl.u32 %v2349, 7
        %v2351 = vsub.s32 0, %v2350
        %v2352 = vrot.slane %v2348, %v2351
        %v2353 = vmul.f32 %v2316, %v2352
        %v2354 = vmul.f32 %v2317, %v2352
        %v2355 = vmul.f32 %v2318, %v2352
        %v2356 = vmul.f32 %v2319, %v2352
        %v2357 = vmul.f32 %v2320, %v2352
        %v2358 = vmul.f32 %v2321, %v2352
        %v2359 = vmul.f32 %v2322, %v2352
        %v2360 = vmul.f32 %v2323, %v2352
        %v2361 = vmul.f32 %v2324, %v2352
        %v2362 = vmul.f32 %v2325, %v2352
        %v2363 = vmul.f32 %v2326, %v2352
        %v2364 = vmul.f32 %v2327, %v2352
        %v2365 = vmul.f32 %v2328, %v2352
        %v2366 = vmul.f32 %v2329, %v2352
        %v2367 = vmul.f32 %v2330, %v2352
        %v2368 = vmul.f32 %v2331, %v2352
        %v2369 = vmul.f32 %v2332, %v2352
        %v2370 = vmul.f32 %v2333, %v2352
        %v2371 = vmul.f32 %v2334, %v2352
        %v2372 = vmul.f32 %v2335, %v2352
        %v2373 = vmul.f32 %v2336, %v2352
        %v2374 = vmul.f32 %v2337, %v2352
        %v2375 = vmul.f32 %v2338, %v2352
        %v2376 = vmul.f32 %v2339, %v2352
        %v2377 = vmul.f32 %v2340, %v2352
        %v2378 = vmul.f32 %v2341, %v2352
        %v2379 = vmul.f32 %v2342, %v2352
        %v2380 = vmul.f32 %v2343, %v2352
        %v2381 = vmul.f32 %v2344, %v2352
        %v2382 = vmul.f32 %v2345, %v2352
        %v2383 = vmul.f32 %v2346, %v2352
        %v2384 = vmul.f32 %v2347, %v2352
        %v2385 = vadd.f32 %v2284, %v2353
        %v2386 = vadd.f32 %v2285, %v2354
        %v2387 = vadd.f32 %v2286, %v2355
        %v2388 = vadd.f32 %v2287, %v2356
        %v2389 = vadd.f32 %v2288, %v2357
        %v2390 = vadd.f32 %v2289, %v2358
        %v2391 = vadd.f32 %v2290, %v2359
        %v2392 = vadd.f32 %v2291, %v2360
        %v2393 = vadd.f32 %v2292, %v2361
        %v2394 = vadd.f32 %v2293, %v2362
        %v2395 = vadd.f32 %v2294, %v2363
        %v2396 = vadd.f32 %v2295, %v2364
        %v2397 = vadd.f32 %v2296, %v2365
        %v2398 = vadd.f32 %v2297, %v2366
        %v2399 = vadd.f32 %v2298, %v2367
        %v2400 = vadd.f32 %v2299, %v2368
        %v2401 = vadd.f32 %v2300, %v2369
        %v2402 = vadd.f32 %v2301, %v2370
        %v2403 = vadd.f32 %v2302, %v2371
        %v2404 = vadd.f32 %v2303, %v2372
        %v2405 = vadd.f32 %v2304, %v2373
        %v2406 = vadd.f32 %v2305, %v2374
        %v2407 = vadd.f32 %v2306, %v2375
        %v2408 = vadd.f32 %v2307, %v2376
        %v2409 = vadd.f32 %v2308, %v2377
        %v2410 = vadd.f32 %v2309, %v2378
        %v2411 = vadd.f32 %v2310, %v2379
        %v2412 = vadd.f32 %v2311, %v2380
        %v2413 = vadd.f32 %v2312, %v2381
        %v2414 = vadd.f32 %v2313, %v2382
        %v2415 = vadd.f32 %v2314, %v2383
        %v2416 = vadd.f32 %v2315, %v2384
        %v2417 = vld [vmem:[%s8] sm:$0x1]
        %v2419 = vlaneseq
        %v2420 = vshrl.u32 %v2419, 7
        %v2421 = vsub.s32 0, %v2420
        %v2422 = vrot.slane %v2417, %v2421
        %v2424 = vmul.f32 %v2385, %v2422
        %v2425 = vmul.f32 %v2386, %v2422
        %v2426 = vmul.f32 %v2387, %v2422
        %v2427 = vmul.f32 %v2388, %v2422
        %v2428 = vmul.f32 %v2389, %v2422
        %v2429 = vmul.f32 %v2390, %v2422
        %v2430 = vmul.f32 %v2391, %v2422
        %v2431 = vmul.f32 %v2392, %v2422
        %v2432 = vmul.f32 %v2393, %v2422
        %v2433 = vmul.f32 %v2394, %v2422
        %v2434 = vmul.f32 %v2395, %v2422
        %v2435 = vmul.f32 %v2396, %v2422
        %v2436 = vmul.f32 %v2397, %v2422
        %v2437 = vmul.f32 %v2398, %v2422
        %v2438 = vmul.f32 %v2399, %v2422
        %v2439 = vmul.f32 %v2400, %v2422
        %v2440 = vmul.f32 %v2401, %v2422
        %v2441 = vmul.f32 %v2402, %v2422
        %v2442 = vmul.f32 %v2403, %v2422
        %v2443 = vmul.f32 %v2404, %v2422
        %v2444 = vmul.f32 %v2405, %v2422
        %v2445 = vmul.f32 %v2406, %v2422
        %v2446 = vmul.f32 %v2407, %v2422
        %v2447 = vmul.f32 %v2408, %v2422
        %v2448 = vmul.f32 %v2409, %v2422
        %v2449 = vmul.f32 %v2410, %v2422
        %v2450 = vmul.f32 %v2411, %v2422
        %v2451 = vmul.f32 %v2412, %v2422
        %v2452 = vmul.f32 %v2413, %v2422
        %v2453 = vmul.f32 %v2414, %v2422
        %v2454 = vmul.f32 %v2415, %v2422
        %v2455 = vmul.f32 %v2416, %v2422
        %v2456 = vld [vmem:[%s9] sm:$0x1]
        %v2458 = vlaneseq
        %v2459 = vshrl.u32 %v2458, 7
        %v2460 = vsub.s32 0, %v2459
        %v2461 = vrot.slane %v2456, %v2460
        %v2463 = vadd.f32 %v2424, %v2461
        %v2464 = vadd.f32 %v2425, %v2461
        %v2465 = vadd.f32 %v2426, %v2461
        %v2466 = vadd.f32 %v2427, %v2461
        %v2467 = vadd.f32 %v2428, %v2461
        %v2468 = vadd.f32 %v2429, %v2461
        %v2469 = vadd.f32 %v2430, %v2461
        %v2470 = vadd.f32 %v2431, %v2461
        %v2471 = vadd.f32 %v2432, %v2461
        %v2472 = vadd.f32 %v2433, %v2461
        %v2473 = vadd.f32 %v2434, %v2461
        %v2474 = vadd.f32 %v2435, %v2461
        %v2475 = vadd.f32 %v2436, %v2461
        %v2476 = vadd.f32 %v2437, %v2461
        %v2477 = vadd.f32 %v2438, %v2461
        %v2478 = vadd.f32 %v2439, %v2461
        %v2479 = vadd.f32 %v2440, %v2461
        %v2480 = vadd.f32 %v2441, %v2461
        %v2481 = vadd.f32 %v2442, %v2461
        %v2482 = vadd.f32 %v2443, %v2461
        %v2483 = vadd.f32 %v2444, %v2461
        %v2484 = vadd.f32 %v2445, %v2461
        %v2485 = vadd.f32 %v2446, %v2461
        %v2486 = vadd.f32 %v2447, %v2461
        %v2487 = vadd.f32 %v2448, %v2461
        %v2488 = vadd.f32 %v2449, %v2461
        %v2489 = vadd.f32 %v2450, %v2461
        %v2490 = vadd.f32 %v2451, %v2461
        %v2491 = vadd.f32 %v2452, %v2461
        %v2492 = vadd.f32 %v2453, %v2461
        %v2493 = vadd.f32 %v2454, %v2461
        %v2494 = vadd.f32 %v2455, %v2461
        %v2495 = vmax.f32 %v2463, 0.0
        %v2496 = vmax.f32 %v2464, 0.0
        %v2497 = vmax.f32 %v2465, 0.0
        %v2498 = vmax.f32 %v2466, 0.0
        %v2499 = vmax.f32 %v2467, 0.0
        %v2500 = vmax.f32 %v2468, 0.0
        %v2501 = vmax.f32 %v2469, 0.0
        %v2502 = vmax.f32 %v2470, 0.0
        %v2503 = vmax.f32 %v2471, 0.0
        %v2504 = vmax.f32 %v2472, 0.0
        %v2505 = vmax.f32 %v2473, 0.0
        %v2506 = vmax.f32 %v2474, 0.0
        %v2507 = vmax.f32 %v2475, 0.0
        %v2508 = vmax.f32 %v2476, 0.0
        %v2509 = vmax.f32 %v2477, 0.0
        %v2510 = vmax.f32 %v2478, 0.0
        %v2511 = vmax.f32 %v2479, 0.0
        %v2512 = vmax.f32 %v2480, 0.0
        %v2513 = vmax.f32 %v2481, 0.0
        %v2514 = vmax.f32 %v2482, 0.0
        %v2515 = vmax.f32 %v2483, 0.0
        %v2516 = vmax.f32 %v2484, 0.0
        %v2517 = vmax.f32 %v2485, 0.0
        %v2518 = vmax.f32 %v2486, 0.0
        %v2519 = vmax.f32 %v2487, 0.0
        %v2520 = vmax.f32 %v2488, 0.0
        %v2521 = vmax.f32 %v2489, 0.0
        %v2522 = vmax.f32 %v2490, 0.0
        %v2523 = vmax.f32 %v2491, 0.0
        %v2524 = vmax.f32 %v2492, 0.0
        %v2525 = vmax.f32 %v2493, 0.0
        %v2526 = vmax.f32 %v2494, 0.0
        %v2527 = vmin.f32 %v2495, 6.0
        %v2528 = vmin.f32 %v2496, 6.0
        %v2529 = vmin.f32 %v2497, 6.0
        %v2530 = vmin.f32 %v2498, 6.0
        %v2531 = vmin.f32 %v2499, 6.0
        %v2532 = vmin.f32 %v2500, 6.0
        %v2533 = vmin.f32 %v2501, 6.0
        %v2534 = vmin.f32 %v2502, 6.0
        %v2535 = vmin.f32 %v2503, 6.0
        %v2536 = vmin.f32 %v2504, 6.0
        %v2537 = vmin.f32 %v2505, 6.0
        %v2538 = vmin.f32 %v2506, 6.0
        %v2539 = vmin.f32 %v2507, 6.0
        %v2540 = vmin.f32 %v2508, 6.0
        %v2541 = vmin.f32 %v2509, 6.0
        %v2542 = vmin.f32 %v2510, 6.0
        %v2543 = vmin.f32 %v2511, 6.0
        %v2544 = vmin.f32 %v2512, 6.0
        %v2545 = vmin.f32 %v2513, 6.0
        %v2546 = vmin.f32 %v2514, 6.0
        %v2547 = vmin.f32 %v2515, 6.0
        %v2548 = vmin.f32 %v2516, 6.0
        %v2549 = vmin.f32 %v2517, 6.0
        %v2550 = vmin.f32 %v2518, 6.0
        %v2551 = vmin.f32 %v2519, 6.0
        %v2552 = vmin.f32 %v2520, 6.0
        %v2553 = vmin.f32 %v2521, 6.0
        %v2554 = vmin.f32 %v2522, 6.0
        %v2555 = vmin.f32 %v2523, 6.0
        %v2556 = vmin.f32 %v2524, 6.0
        %v2557 = vmin.f32 %v2525, 6.0
        %v2558 = vmin.f32 %v2526, 6.0
        %2559 = vst.msk [vmem:[#allocation3] sm:$0xff] %vm1036, %v2527
        %2560 = vst.msk [vmem:[#allocation3 + $0x8] sm:$0xff] %vm1036, %v2528
        %2561 = vst.msk [vmem:[#allocation3 + $0x10] sm:$0xff] %vm1036, %v2529
        %2562 = vst.msk [vmem:[#allocation3 + $0x18] sm:$0xff] %vm1036, %v2530
        %2563 = vst.msk [vmem:[#allocation3 + $0x20] sm:$0xff] %vm1036, %v2531
        %2564 = vst.msk [vmem:[#allocation3 + $0x28] sm:$0xff] %vm1036, %v2532
        %2565 = vst.msk [vmem:[#allocation3 + $0x30] sm:$0xff] %vm1036, %v2533
        %2566 = vst.msk [vmem:[#allocation3 + $0x38] sm:$0xff] %vm1036, %v2534
        %2567 = vst.msk [vmem:[#allocation3 + $0x40] sm:$0xff] %vm1036, %v2535
        %2568 = vst.msk [vmem:[#allocation3 + $0x48] sm:$0xff] %vm1036, %v2536
        %2569 = vst.msk [vmem:[#allocation3 + $0x50] sm:$0xff] %vm1036, %v2537
        %2570 = vst.msk [vmem:[#allocation3 + $0x58] sm:$0xff] %vm1036, %v2538
        %2571 = vst.msk [vmem:[#allocation3 + $0x60] sm:$0xff] %vm1036, %v2539
        %2572 = vst.msk [vmem:[#allocation3 + $0x68] sm:$0xff] %vm1036, %v2540
        %2573 = vst.msk [vmem:[#allocation3 + $0x70] sm:$0xff] %vm1036, %v2541
        %2574 = vst.msk [vmem:[#allocation3 + $0x78] sm:$0xff] %vm1036, %v2542
        %2575 = vst.msk [vmem:[#allocation3 + $0x80] sm:$0xff] %vm1036, %v2543
        %2576 = vst.msk [vmem:[#allocation3 + $0x88] sm:$0xff] %vm1036, %v2544
        %2577 = vst.msk [vmem:[#allocation3 + $0x90] sm:$0xff] %vm1036, %v2545
        %2578 = vst.msk [vmem:[#allocation3 + $0x98] sm:$0xff] %vm1036, %v2546
        %2579 = vst.msk [vmem:[#allocation3 + $0xa0] sm:$0xff] %vm1036, %v2547
        %2580 = vst.msk [vmem:[#allocation3 + $0xa8] sm:$0xff] %vm1036, %v2548
        %2581 = vst.msk [vmem:[#allocation3 + $0xb0] sm:$0xff] %vm1036, %v2549
        %2582 = vst.msk [vmem:[#allocation3 + $0xb8] sm:$0xff] %vm1036, %v2550
        %2583 = vst.msk [vmem:[#allocation3 + $0xc0] sm:$0xff] %vm1036, %v2551
        %2584 = vst.msk [vmem:[#allocation3 + $0xc8] sm:$0xff] %vm1036, %v2552
        %2585 = vst.msk [vmem:[#allocation3 + $0xd0] sm:$0xff] %vm1036, %v2553
        %2586 = vst.msk [vmem:[#allocation3 + $0xd8] sm:$0xff] %vm1036, %v2554
        %2587 = vst.msk [vmem:[#allocation3 + $0xe0] sm:$0xff] %vm1036, %v2555
        %2588 = vst.msk [vmem:[#allocation3 + $0xe8] sm:$0xff] %vm1036, %v2556
        %2589 = vst.msk [vmem:[#allocation3 + $0xf0] sm:$0xff] %vm1036, %v2557
        %2590 = vst.msk [vmem:[#allocation3 + $0xf8] sm:$0xff] %vm1036, %v2558
        %v2591 = vld [vmem:[#allocation3] sm:$0xff]
        %v2592 = vld [vmem:[#allocation3 + $0x8] sm:$0xff]
        %v2593 = vld [vmem:[#allocation3 + $0x10] sm:$0xff]
        %v2594 = vld [vmem:[#allocation3 + $0x18] sm:$0xff]
        %v2595 = vld [vmem:[#allocation3 + $0x20] sm:$0xff]
        %v2596 = vld [vmem:[#allocation3 + $0x28] sm:$0xff]
        %v2597 = vld [vmem:[#allocation3 + $0x30] sm:$0xff]
        %v2598 = vld [vmem:[#allocation3 + $0x38] sm:$0xff]
        %v2599 = vld [vmem:[#allocation3 + $0x40] sm:$0xff]
        %v2600 = vld [vmem:[#allocation3 + $0x48] sm:$0xff]
        %v2601 = vld [vmem:[#allocation3 + $0x50] sm:$0xff]
        %v2602 = vld [vmem:[#allocation3 + $0x58] sm:$0xff]
        %v2603 = vld [vmem:[#allocation3 + $0x60] sm:$0xff]
        %v2604 = vld [vmem:[#allocation3 + $0x68] sm:$0xff]
        %v2605 = vld [vmem:[#allocation3 + $0x70] sm:$0xff]
        %v2606 = vld [vmem:[#allocation3 + $0x78] sm:$0xff]
        %v2607 = vld [vmem:[#allocation3 + $0x80] sm:$0xff]
        %v2608 = vld [vmem:[#allocation3 + $0x88] sm:$0xff]
        %v2609 = vld [vmem:[#allocation3 + $0x90] sm:$0xff]
        %v2610 = vld [vmem:[#allocation3 + $0x98] sm:$0xff]
        %v2611 = vld [vmem:[#allocation3 + $0xa0] sm:$0xff]
        %v2612 = vld [vmem:[#allocation3 + $0xa8] sm:$0xff]
        %v2613 = vld [vmem:[#allocation3 + $0xb0] sm:$0xff]
        %v2614 = vld [vmem:[#allocation3 + $0xb8] sm:$0xff]
        %v2615 = vld [vmem:[#allocation3 + $0xc0] sm:$0xff]
        %v2616 = vld [vmem:[#allocation3 + $0xc8] sm:$0xff]
        %v2617 = vld [vmem:[#allocation3 + $0xd0] sm:$0xff]
        %v2618 = vld [vmem:[#allocation3 + $0xd8] sm:$0xff]
        %v2619 = vld [vmem:[#allocation3 + $0xe0] sm:$0xff]
        %v2620 = vld [vmem:[#allocation3 + $0xe8] sm:$0xff]
        %v2621 = vld [vmem:[#allocation3 + $0xf0] sm:$0xff]
        %v2622 = vld [vmem:[#allocation3 + $0xf8] sm:$0xff]
        %v2623 = vpack.c.bf16 %v2592, %v2591
        %v2624 = vpack.c.bf16 %v2594, %v2593
        %v2625 = vpack.c.bf16 %v2596, %v2595
        %v2626 = vpack.c.bf16 %v2598, %v2597
        %v2627 = vpack.c.bf16 %v2600, %v2599
        %v2628 = vpack.c.bf16 %v2602, %v2601
        %v2629 = vpack.c.bf16 %v2604, %v2603
        %v2630 = vpack.c.bf16 %v2606, %v2605
        %v2631 = vpack.c.bf16 %v2608, %v2607
        %v2632 = vpack.c.bf16 %v2610, %v2609
        %v2633 = vpack.c.bf16 %v2612, %v2611
        %v2634 = vpack.c.bf16 %v2614, %v2613
        %v2635 = vpack.c.bf16 %v2616, %v2615
        %v2636 = vpack.c.bf16 %v2618, %v2617
        %v2637 = vpack.c.bf16 %v2620, %v2619
        %v2638 = vpack.c.bf16 %v2622, %v2621
        %v2639 = vld [vmem:[%s10] sm:$0xf]
        %v2640 = vld [vmem:[%s10 + $0x4] sm:$0xf]
        %v2641 = vld [vmem:[%s10 + $0x8] sm:$0xf]
        %v2642 = vld [vmem:[%s10 + $0xc] sm:$0xf]
        %v2647 = vunpack.c.l.b16 %v2639
        %v2648 = vunpack.c.l.b16 %v2640
        %v2649 = vunpack.c.l.b16 %v2641
        %v2650 = vunpack.c.l.b16 %v2642
        %v2651 = vpack.c.b16 %v2648, %v2647
        %v2652 = vpack.c.b16 %v2650, %v2649
        %v2656 = vsel %vm1036, %v2623, 0
        %v2659 = vsel %vm1036, %v2624, 0
        %v2662 = vsel %vm1036, %v2625, 0
        %v2665 = vsel %vm1036, %v2626, 0
        %v2668 = vsel %vm1036, %v2627, 0
        %v2671 = vsel %vm1036, %v2628, 0
        %v2674 = vsel %vm1036, %v2629, 0
        %v2677 = vsel %vm1036, %v2630, 0
        %v2680 = vsel %vm1036, %v2631, 0
        %v2683 = vsel %vm1036, %v2632, 0
        %v2686 = vsel %vm1036, %v2633, 0
        %v2689 = vsel %vm1036, %v2634, 0
        %v2692 = vsel %vm1036, %v2635, 0
        %v2695 = vsel %vm1036, %v2636, 0
        %v2698 = vsel %vm1036, %v2637, 0
        %v2701 = vsel %vm1036, %v2638, 0
        %2703 = vmatprep.subr.bf16.mxu0 0
        %2704 = vmatpush1.bf16.msra.mxu0 %v2651
        %2705 = vmatprep.subr.bf16.mxu0 0
        %2706 = vmatpush1.bf16.msra.mxu0 %v2652
        %2707 = vmatprep.subr.bf16.mxu0 0
        %2708 = vmatpush1.bf16.msra.mxu0 0
        %2709 = vmatprep.subr.bf16.mxu0 0
        %2710 = vmatpush1.bf16.msra.mxu0 0
        %2711 = vmatprep.subr.bf16.mxu0 0
        %2712 = vmatpush1.bf16.msra.mxu0 0
        %2713 = vmatprep.subr.bf16.mxu0 0
        %2714 = vmatpush1.bf16.msra.mxu0 0
        %2715 = vmatprep.subr.bf16.mxu0 0
        %2716 = vmatpush1.bf16.msra.mxu0 0
        %2717 = vmatprep.subr.bf16.mxu0 0
        %2718 = vmatpush1.bf16.msra.mxu0 0
        %2719 = vmatprep.subr.bf16.mxu0 0
        %2720 = vmatpush1.bf16.msra.mxu0 0
        %2721 = vmatprep.subr.bf16.mxu0 0
        %2722 = vmatpush1.bf16.msra.mxu0 0
        %2723 = vmatprep.subr.bf16.mxu0 0
        %2724 = vmatpush1.bf16.msra.mxu0 0
        %2725 = vmatprep.subr.bf16.mxu0 0
        %2726 = vmatpush1.bf16.msra.mxu0 0
        %2727 = vmatprep.subr.bf16.mxu0 0
        %2728 = vmatpush1.bf16.msra.mxu0 0
        %2729 = vmatprep.subr.bf16.mxu0 0
        %2730 = vmatpush1.bf16.msra.mxu0 0
        %2731 = vmatprep.subr.bf16.mxu0 0
        %2732 = vmatpush1.bf16.msra.mxu0 0
        %2733 = vmatprep.subr.bf16.mxu0 0
        %2734 = vmatpush1.bf16.msra.mxu0 0
        %2735 = vmatprep.mubr.bf16.mxu0 0
        %2736 = vmatmul.mubr.bf16.gmra.mrb[0].mxu0 %v2656
        %v2737 = vpop.f32.mrb[0].mxu0
        %v2738 = vadd.f32 0.0, %v2737
        %v2739 = vpop.f32.mrb[0].mxu0
        %v2740 = vpop.f32.mrb[0].mxu0
        %v2741 = vadd.f32 0.0, %v2740
        %v2742 = vpop.f32.mrb[0].mxu0
        %2743 = vmatprep.mubr.bf16.mxu0 0
        %2744 = vmatmul.mubr.bf16.gmra.mrb[0].mxu0 %v2659
        %v2745 = vpop.f32.mrb[0].mxu0
        %v2746 = vadd.f32 0.0, %v2745
        %v2747 = vpop.f32.mrb[0].mxu0
        %v2748 = vpop.f32.mrb[0].mxu0
        %v2749 = vadd.f32 0.0, %v2748
        %v2750 = vpop.f32.mrb[0].mxu0
        %2751 = vmatprep.mubr.bf16.mxu0 0
        %2752 = vmatmul.mubr.bf16.gmra.mrb[0].mxu0 %v2662
        %v2753 = vpop.f32.mrb[0].mxu0
        %v2754 = vadd.f32 0.0, %v2753
        %v2755 = vpop.f32.mrb[0].mxu0
        %v2756 = vpop.f32.mrb[0].mxu0
        %v2757 = vadd.f32 0.0, %v2756
        %v2758 = vpop.f32.mrb[0].mxu0
        %2759 = vmatprep.mubr.bf16.mxu0 0
        %2760 = vmatmul.mubr.bf16.gmra.mrb[0].mxu0 %v2665
        %v2761 = vpop.f32.mrb[0].mxu0
        %v2762 = vadd.f32 0.0, %v2761
        %v2763 = vpop.f32.mrb[0].mxu0
        %v2764 = vpop.f32.mrb[0].mxu0
        %v2765 = vadd.f32 0.0, %v2764
        %v2766 = vpop.f32.mrb[0].mxu0
        %2767 = vmatprep.mubr.bf16.mxu0 0
        %2768 = vmatmul.mubr.bf16.gmra.mrb[0].mxu0 %v2668
        %v2769 = vpop.f32.mrb[0].mxu0
        %v2770 = vadd.f32 0.0, %v2769
        %v2771 = vpop.f32.mrb[0].mxu0
        %v2772 = vpop.f32.mrb[0].mxu0
        %v2773 = vadd.f32 0.0, %v2772
        %v2774 = vpop.f32.mrb[0].mxu0
        %2775 = vmatprep.mubr.bf16.mxu0 0
        %2776 = vmatmul.mubr.bf16.gmra.mrb[0].mxu0 %v2671
        %v2777 = vpop.f32.mrb[0].mxu0
        %v2778 = vadd.f32 0.0, %v2777
        %v2779 = vpop.f32.mrb[0].mxu0
        %v2780 = vpop.f32.mrb[0].mxu0
        %v2781 = vadd.f32 0.0, %v2780
        %v2782 = vpop.f32.mrb[0].mxu0
        %2783 = vmatprep.mubr.bf16.mxu0 0
        %2784 = vmatmul.mubr.bf16.gmra.mrb[0].mxu0 %v2674
        %v2785 = vpop.f32.mrb[0].mxu0
        %v2786 = vadd.f32 0.0, %v2785
        %v2787 = vpop.f32.mrb[0].mxu0
        %v2788 = vpop.f32.mrb[0].mxu0
        %v2789 = vadd.f32 0.0, %v2788
        %v2790 = vpop.f32.mrb[0].mxu0
        %2791 = vmatprep.mubr.bf16.mxu0 0
        %2792 = vmatmul.mubr.bf16.gmra.mrb[0].mxu0 %v2677
        %v2793 = vpop.f32.mrb[0].mxu0
        %v2794 = vadd.f32 0.0, %v2793
        %v2795 = vpop.f32.mrb[0].mxu0
        %v2796 = vpop.f32.mrb[0].mxu0
        %v2797 = vadd.f32 0.0, %v2796
        %v2798 = vpop.f32.mrb[0].mxu0
        %2799 = vmatprep.mubr.bf16.mxu0 0
        %2800 = vmatmul.mubr.bf16.gmra.mrb[0].mxu0 %v2680
        %v2801 = vpop.f32.mrb[0].mxu0
        %v2802 = vadd.f32 0.0, %v2801
        %v2803 = vpop.f32.mrb[0].mxu0
        %v2804 = vpop.f32.mrb[0].mxu0
        %v2805 = vadd.f32 0.0, %v2804
        %v2806 = vpop.f32.mrb[0].mxu0
        %2807 = vmatprep.mubr.bf16.mxu0 0
        %2808 = vmatmul.mubr.bf16.gmra.mrb[0].mxu0 %v2683
        %v2809 = vpop.f32.mrb[0].mxu0
        %v2810 = vadd.f32 0.0, %v2809
        %v2811 = vpop.f32.mrb[0].mxu0
        %v2812 = vpop.f32.mrb[0].mxu0
        %v2813 = vadd.f32 0.0, %v2812
        %v2814 = vpop.f32.mrb[0].mxu0
        %2815 = vmatprep.mubr.bf16.mxu0 0
        %2816 = vmatmul.mubr.bf16.gmra.mrb[0].mxu0 %v2686
        %v2817 = vpop.f32.mrb[0].mxu0
        %v2818 = vadd.f32 0.0, %v2817
        %v2819 = vpop.f32.mrb[0].mxu0
        %v2820 = vpop.f32.mrb[0].mxu0
        %v2821 = vadd.f32 0.0, %v2820
        %v2822 = vpop.f32.mrb[0].mxu0
        %2823 = vmatprep.mubr.bf16.mxu0 0
        %2824 = vmatmul.mubr.bf16.gmra.mrb[0].mxu0 %v2689
        %v2825 = vpop.f32.mrb[0].mxu0
        %v2826 = vadd.f32 0.0, %v2825
        %v2827 = vpop.f32.mrb[0].mxu0
        %v2828 = vpop.f32.mrb[0].mxu0
        %v2829 = vadd.f32 0.0, %v2828
        %v2830 = vpop.f32.mrb[0].mxu0
        %2831 = vmatprep.mubr.bf16.mxu0 0
        %2832 = vmatmul.mubr.bf16.gmra.mrb[0].mxu0 %v2692
        %v2833 = vpop.f32.mrb[0].mxu0
        %v2834 = vadd.f32 0.0, %v2833
        %v2835 = vpop.f32.mrb[0].mxu0
        %v2836 = vpop.f32.mrb[0].mxu0
        %v2837 = vadd.f32 0.0, %v2836
        %v2838 = vpop.f32.mrb[0].mxu0
        %2839 = vmatprep.mubr.bf16.mxu0 0
        %2840 = vmatmul.mubr.bf16.gmra.mrb[0].mxu0 %v2695
        %v2841 = vpop.f32.mrb[0].mxu0
        %v2842 = vadd.f32 0.0, %v2841
        %v2843 = vpop.f32.mrb[0].mxu0
        %v2844 = vpop.f32.mrb[0].mxu0
        %v2845 = vadd.f32 0.0, %v2844
        %v2846 = vpop.f32.mrb[0].mxu0
        %2847 = vmatprep.mubr.bf16.mxu0 0
        %2848 = vmatmul.mubr.bf16.gmra.mrb[0].mxu0 %v2698
        %v2849 = vpop.f32.mrb[0].mxu0
        %v2850 = vadd.f32 0.0, %v2849
        %v2851 = vpop.f32.mrb[0].mxu0
        %v2852 = vpop.f32.mrb[0].mxu0
        %v2853 = vadd.f32 0.0, %v2852
        %v2854 = vpop.f32.mrb[0].mxu0
        %2855 = vmatprep.mubr.bf16.mxu0 0
        %2856 = vmatmul.mubr.bf16.gmra.mrb[0].mxu0 %v2701
        %v2857 = vpop.f32.mrb[0].mxu0
        %v2858 = vadd.f32 0.0, %v2857
        %v2859 = vpop.f32.mrb[0].mxu0
        %v2860 = vpop.f32.mrb[0].mxu0
        %v2861 = vadd.f32 0.0, %v2860
        %v2862 = vpop.f32.mrb[0].mxu0
        %2863 = vdwg.mxu0
        %v2864 = vld [vmem:[%s11] sm:$0x1]
        %v2866 = vlaneseq
        %v2867 = vshrl.u32 %v2866, 7
        %v2868 = vsub.s32 0, %v2867
        %v2869 = vrot.slane %v2864, %v2868
        %v2871 = vmul.f32 %v2738, %v2869
        %v2872 = vmul.f32 %v2741, %v2869
        %v2873 = vmul.f32 %v2746, %v2869
        %v2874 = vmul.f32 %v2749, %v2869
        %v2875 = vmul.f32 %v2754, %v2869
        %v2876 = vmul.f32 %v2757, %v2869
        %v2877 = vmul.f32 %v2762, %v2869
        %v2878 = vmul.f32 %v2765, %v2869
        %v2879 = vmul.f32 %v2770, %v2869
        %v2880 = vmul.f32 %v2773, %v2869
        %v2881 = vmul.f32 %v2778, %v2869
        %v2882 = vmul.f32 %v2781, %v2869
        %v2883 = vmul.f32 %v2786, %v2869
        %v2884 = vmul.f32 %v2789, %v2869
        %v2885 = vmul.f32 %v2794, %v2869
        %v2886 = vmul.f32 %v2797, %v2869
        %v2887 = vmul.f32 %v2802, %v2869
        %v2888 = vmul.f32 %v2805, %v2869
        %v2889 = vmul.f32 %v2810, %v2869
        %v2890 = vmul.f32 %v2813, %v2869
        %v2891 = vmul.f32 %v2818, %v2869
        %v2892 = vmul.f32 %v2821, %v2869
        %v2893 = vmul.f32 %v2826, %v2869
        %v2894 = vmul.f32 %v2829, %v2869
        %v2895 = vmul.f32 %v2834, %v2869
        %v2896 = vmul.f32 %v2837, %v2869
        %v2897 = vmul.f32 %v2842, %v2869
        %v2898 = vmul.f32 %v2845, %v2869
        %v2899 = vmul.f32 %v2850, %v2869
        %v2900 = vmul.f32 %v2853, %v2869
        %v2901 = vmul.f32 %v2858, %v2869
        %v2902 = vmul.f32 %v2861, %v2869
        %v2903 = vld [vmem:[%s12] sm:$0x1]
        %v2905 = vlaneseq
        %v2906 = vshrl.u32 %v2905, 7
        %v2907 = vsub.s32 0, %v2906
        %v2908 = vrot.slane %v2903, %v2907
        %v2910 = vadd.f32 %v2871, %v2908
        %v2911 = vadd.f32 %v2872, %v2908
        %v2912 = vadd.f32 %v2873, %v2908
        %v2913 = vadd.f32 %v2874, %v2908
        %v2914 = vadd.f32 %v2875, %v2908
        %v2915 = vadd.f32 %v2876, %v2908
        %v2916 = vadd.f32 %v2877, %v2908
        %v2917 = vadd.f32 %v2878, %v2908
        %v2918 = vadd.f32 %v2879, %v2908
        %v2919 = vadd.f32 %v2880, %v2908
        %v2920 = vadd.f32 %v2881, %v2908
        %v2921 = vadd.f32 %v2882, %v2908
        %v2922 = vadd.f32 %v2883, %v2908
        %v2923 = vadd.f32 %v2884, %v2908
        %v2924 = vadd.f32 %v2885, %v2908
        %v2925 = vadd.f32 %v2886, %v2908
        %v2926 = vadd.f32 %v2887, %v2908
        %v2927 = vadd.f32 %v2888, %v2908
        %v2928 = vadd.f32 %v2889, %v2908
        %v2929 = vadd.f32 %v2890, %v2908
        %v2930 = vadd.f32 %v2891, %v2908
        %v2931 = vadd.f32 %v2892, %v2908
        %v2932 = vadd.f32 %v2893, %v2908
        %v2933 = vadd.f32 %v2894, %v2908
        %v2934 = vadd.f32 %v2895, %v2908
        %v2935 = vadd.f32 %v2896, %v2908
        %v2936 = vadd.f32 %v2897, %v2908
        %v2937 = vadd.f32 %v2898, %v2908
        %v2938 = vadd.f32 %v2899, %v2908
        %v2939 = vadd.f32 %v2900, %v2908
        %v2940 = vadd.f32 %v2901, %v2908
        %v2941 = vadd.f32 %v2902, %v2908
        %v2942 = vld [vmem:[%s13] sm:$0xf]
        %v2943 = vld [vmem:[%s13 + $0x4] sm:$0xf]
        %v2944 = vld [vmem:[%s13 + $0x8] sm:$0xf]
        %v2945 = vld [vmem:[%s13 + $0xc] sm:$0xf]
        %v2950 = vunpack.c.l.b16 %v2942
        %v2951 = vunpack.c.l.b16 %v2943
        %v2952 = vunpack.c.l.b16 %v2944
        %v2953 = vunpack.c.l.b16 %v2945
        %v2954 = vpack.c.b16 %v2951, %v2950
        %v2955 = vpack.c.b16 %v2953, %v2952
        %2958 = vmatprep.subr.bf16.mxu0 0
        %2959 = vmatpush1.bf16.msra.mxu0 %v2954
        %2960 = vmatprep.subr.bf16.mxu0 0
        %2961 = vmatpush1.bf16.msra.mxu0 %v2955
        %2962 = vmatprep.subr.bf16.mxu0 0
        %2963 = vmatpush1.bf16.msra.mxu0 0
        %2964 = vmatprep.subr.bf16.mxu0 0
        %2965 = vmatpush1.bf16.msra.mxu0 0
        %2966 = vmatprep.subr.bf16.mxu0 0
        %2967 = vmatpush1.bf16.msra.mxu0 0
        %2968 = vmatprep.subr.bf16.mxu0 0
        %2969 = vmatpush1.bf16.msra.mxu0 0
        %2970 = vmatprep.subr.bf16.mxu0 0
        %2971 = vmatpush1.bf16.msra.mxu0 0
        %2972 = vmatprep.subr.bf16.mxu0 0
        %2973 = vmatpush1.bf16.msra.mxu0 0
        %2974 = vmatprep.subr.bf16.mxu0 0
        %2975 = vmatpush1.bf16.msra.mxu0 0
        %2976 = vmatprep.subr.bf16.mxu0 0
        %2977 = vmatpush1.bf16.msra.mxu0 0
        %2978 = vmatprep.subr.bf16.mxu0 0
        %2979 = vmatpush1.bf16.msra.mxu0 0
        %2980 = vmatprep.subr.bf16.mxu0 0
        %2981 = vmatpush1.bf16.msra.mxu0 0
        %2982 = vmatprep.subr.bf16.mxu0 0
        %2983 = vmatpush1.bf16.msra.mxu0 0
        %2984 = vmatprep.subr.bf16.mxu0 0
        %2985 = vmatpush1.bf16.msra.mxu0 0
        %2986 = vmatprep.subr.bf16.mxu0 0
        %2987 = vmatpush1.bf16.msra.mxu0 0
        %2988 = vmatprep.subr.bf16.mxu0 0
        %2989 = vmatpush1.bf16.msra.mxu0 0
        %2990 = vmatprep.mubr.bf16.mxu0 0
        %2991 = vmatmul.mubr.bf16.gmra.mrb[0].mxu0 %v1038
        %v2992 = vpop.f32.mrb[0].mxu0
        %v2993 = vadd.f32 0.0, %v2992
        %v2994 = vpop.f32.mrb[0].mxu0
        %v2995 = vpop.f32.mrb[0].mxu0
        %v2996 = vadd.f32 0.0, %v2995
        %v2997 = vpop.f32.mrb[0].mxu0
        %2998 = vmatprep.mubr.bf16.mxu0 0
        %2999 = vmatmul.mubr.bf16.gmra.mrb[0].mxu0 %v1041
        %v3000 = vpop.f32.mrb[0].mxu0
        %v3001 = vadd.f32 0.0, %v3000
        %v3002 = vpop.f32.mrb[0].mxu0
        %v3003 = vpop.f32.mrb[0].mxu0
        %v3004 = vadd.f32 0.0, %v3003
        %v3005 = vpop.f32.mrb[0].mxu0
        %3006 = vmatprep.mubr.bf16.mxu0 0
        %3007 = vmatmul.mubr.bf16.gmra.mrb[0].mxu0 %v1044
        %v3008 = vpop.f32.mrb[0].mxu0
        %v3009 = vadd.f32 0.0, %v3008
        %v3010 = vpop.f32.mrb[0].mxu0
        %v3011 = vpop.f32.mrb[0].mxu0
        %v3012 = vadd.f32 0.0, %v3011
        %v3013 = vpop.f32.mrb[0].mxu0
        %3014 = vmatprep.mubr.bf16.mxu0 0
        %3015 = vmatmul.mubr.bf16.gmra.mrb[0].mxu0 %v1047
        %v3016 = vpop.f32.mrb[0].mxu0
        %v3017 = vadd.f32 0.0, %v3016
        %v3018 = vpop.f32.mrb[0].mxu0
        %v3019 = vpop.f32.mrb[0].mxu0
        %v3020 = vadd.f32 0.0, %v3019
        %v3021 = vpop.f32.mrb[0].mxu0
        %3022 = vmatprep.mubr.bf16.mxu0 0
        %3023 = vmatmul.mubr.bf16.gmra.mrb[0].mxu0 %v1050
        %v3024 = vpop.f32.mrb[0].mxu0
        %v3025 = vadd.f32 0.0, %v3024
        %v3026 = vpop.f32.mrb[0].mxu0
        %v3027 = vpop.f32.mrb[0].mxu0
        %v3028 = vadd.f32 0.0, %v3027
        %v3029 = vpop.f32.mrb[0].mxu0
        %3030 = vmatprep.mubr.bf16.mxu0 0
        %3031 = vmatmul.mubr.bf16.gmra.mrb[0].mxu0 %v1053
        %v3032 = vpop.f32.mrb[0].mxu0
        %v3033 = vadd.f32 0.0, %v3032
        %v3034 = vpop.f32.mrb[0].mxu0
        %v3035 = vpop.f32.mrb[0].mxu0
        %v3036 = vadd.f32 0.0, %v3035
        %v3037 = vpop.f32.mrb[0].mxu0
        %3038 = vmatprep.mubr.bf16.mxu0 0
        %3039 = vmatmul.mubr.bf16.gmra.mrb[0].mxu0 %v1056
        %v3040 = vpop.f32.mrb[0].mxu0
        %v3041 = vadd.f32 0.0, %v3040
        %v3042 = vpop.f32.mrb[0].mxu0
        %v3043 = vpop.f32.mrb[0].mxu0
        %v3044 = vadd.f32 0.0, %v3043
        %v3045 = vpop.f32.mrb[0].mxu0
        %3046 = vmatprep.mubr.bf16.mxu0 0
        %3047 = vmatmul.mubr.bf16.gmra.mrb[0].mxu0 %v1059
        %v3048 = vpop.f32.mrb[0].mxu0
        %v3049 = vadd.f32 0.0, %v3048
        %v3050 = vpop.f32.mrb[0].mxu0
        %v3051 = vpop.f32.mrb[0].mxu0
        %v3052 = vadd.f32 0.0, %v3051
        %v3053 = vpop.f32.mrb[0].mxu0
        %3054 = vmatprep.mubr.bf16.mxu0 0
        %3055 = vmatmul.mubr.bf16.gmra.mrb[0].mxu0 %v1062
        %v3056 = vpop.f32.mrb[0].mxu0
        %v3057 = vadd.f32 0.0, %v3056
        %v3058 = vpop.f32.mrb[0].mxu0
        %v3059 = vpop.f32.mrb[0].mxu0
        %v3060 = vadd.f32 0.0, %v3059
        %v3061 = vpop.f32.mrb[0].mxu0
        %3062 = vmatprep.mubr.bf16.mxu0 0
        %3063 = vmatmul.mubr.bf16.gmra.mrb[0].mxu0 %v1065
        %v3064 = vpop.f32.mrb[0].mxu0
        %v3065 = vadd.f32 0.0, %v3064
        %v3066 = vpop.f32.mrb[0].mxu0
        %v3067 = vpop.f32.mrb[0].mxu0
        %v3068 = vadd.f32 0.0, %v3067
        %v3069 = vpop.f32.mrb[0].mxu0
        %3070 = vmatprep.mubr.bf16.mxu0 0
        %3071 = vmatmul.mubr.bf16.gmra.mrb[0].mxu0 %v1068
        %v3072 = vpop.f32.mrb[0].mxu0
        %v3073 = vadd.f32 0.0, %v3072
        %v3074 = vpop.f32.mrb[0].mxu0
        %v3075 = vpop.f32.mrb[0].mxu0
        %v3076 = vadd.f32 0.0, %v3075
        %v3077 = vpop.f32.mrb[0].mxu0
        %3078 = vmatprep.mubr.bf16.mxu0 0
        %3079 = vmatmul.mubr.bf16.gmra.mrb[0].mxu0 %v1071
        %v3080 = vpop.f32.mrb[0].mxu0
        %v3081 = vadd.f32 0.0, %v3080
        %v3082 = vpop.f32.mrb[0].mxu0
        %v3083 = vpop.f32.mrb[0].mxu0
        %v3084 = vadd.f32 0.0, %v3083
        %v3085 = vpop.f32.mrb[0].mxu0
        %3086 = vmatprep.mubr.bf16.mxu0 0
        %3087 = vmatmul.mubr.bf16.gmra.mrb[0].mxu0 %v1074
        %v3088 = vpop.f32.mrb[0].mxu0
        %v3089 = vadd.f32 0.0, %v3088
        %v3090 = vpop.f32.mrb[0].mxu0
        %v3091 = vpop.f32.mrb[0].mxu0
        %v3092 = vadd.f32 0.0, %v3091
        %v3093 = vpop.f32.mrb[0].mxu0
        %3094 = vmatprep.mubr.bf16.mxu0 0
        %3095 = vmatmul.mubr.bf16.gmra.mrb[0].mxu0 %v1077
        %v3096 = vpop.f32.mrb[0].mxu0
        %v3097 = vadd.f32 0.0, %v3096
        %v3098 = vpop.f32.mrb[0].mxu0
        %v3099 = vpop.f32.mrb[0].mxu0
        %v3100 = vadd.f32 0.0, %v3099
        %v3101 = vpop.f32.mrb[0].mxu0
        %3102 = vmatprep.mubr.bf16.mxu0 0
        %3103 = vmatmul.mubr.bf16.gmra.mrb[0].mxu0 %v1080
        %v3104 = vpop.f32.mrb[0].mxu0
        %v3105 = vadd.f32 0.0, %v3104
        %v3106 = vpop.f32.mrb[0].mxu0
        %v3107 = vpop.f32.mrb[0].mxu0
        %v3108 = vadd.f32 0.0, %v3107
        %v3109 = vpop.f32.mrb[0].mxu0
        %3110 = vmatprep.mubr.bf16.mxu0 0
        %3111 = vmatmul.mubr.bf16.gmra.mrb[0].mxu0 %v1083
        %v3112 = vpop.f32.mrb[0].mxu0
        %v3113 = vadd.f32 0.0, %v3112
        %v3114 = vpop.f32.mrb[0].mxu0
        %v3115 = vpop.f32.mrb[0].mxu0
        %v3116 = vadd.f32 0.0, %v3115
        %v3117 = vpop.f32.mrb[0].mxu0
        %3118 = vdwg.mxu0
        %v3119 = vld [vmem:[%s14] sm:$0x1]
        %v3121 = vlaneseq
        %v3122 = vshrl.u32 %v3121, 7
        %v3123 = vsub.s32 0, %v3122
        %v3124 = vrot.slane %v3119, %v3123
        %v3126 = vmul.f32 %v2993, %v3124
        %v3127 = vmul.f32 %v2996, %v3124
        %v3128 = vmul.f32 %v3001, %v3124
        %v3129 = vmul.f32 %v3004, %v3124
        %v3130 = vmul.f32 %v3009, %v3124
        %v3131 = vmul.f32 %v3012, %v3124
        %v3132 = vmul.f32 %v3017, %v3124
        %v3133 = vmul.f32 %v3020, %v3124
        %v3134 = vmul.f32 %v3025, %v3124
        %v3135 = vmul.f32 %v3028, %v3124
        %v3136 = vmul.f32 %v3033, %v3124
        %v3137 = vmul.f32 %v3036, %v3124
        %v3138 = vmul.f32 %v3041, %v3124
        %v3139 = vmul.f32 %v3044, %v3124
        %v3140 = vmul.f32 %v3049, %v3124
        %v3141 = vmul.f32 %v3052, %v3124
        %v3142 = vmul.f32 %v3057, %v3124
        %v3143 = vmul.f32 %v3060, %v3124
        %v3144 = vmul.f32 %v3065, %v3124
        %v3145 = vmul.f32 %v3068, %v3124
        %v3146 = vmul.f32 %v3073, %v3124
        %v3147 = vmul.f32 %v3076, %v3124
        %v3148 = vmul.f32 %v3081, %v3124
        %v3149 = vmul.f32 %v3084, %v3124
        %v3150 = vmul.f32 %v3089, %v3124
        %v3151 = vmul.f32 %v3092, %v3124
        %v3152 = vmul.f32 %v3097, %v3124
        %v3153 = vmul.f32 %v3100, %v3124
        %v3154 = vmul.f32 %v3105, %v3124
        %v3155 = vmul.f32 %v3108, %v3124
        %v3156 = vmul.f32 %v3113, %v3124
        %v3157 = vmul.f32 %v3116, %v3124
        %v3158 = vld [vmem:[%s15] sm:$0x1]
        %v3160 = vlaneseq
        %v3161 = vshrl.u32 %v3160, 7
        %v3162 = vsub.s32 0, %v3161
        %v3163 = vrot.slane %v3158, %v3162
        %v3165 = vadd.f32 %v3126, %v3163
        %v3166 = vadd.f32 %v3127, %v3163
        %v3167 = vadd.f32 %v3128, %v3163
        %v3168 = vadd.f32 %v3129, %v3163
        %v3169 = vadd.f32 %v3130, %v3163
        %v3170 = vadd.f32 %v3131, %v3163
        %v3171 = vadd.f32 %v3132, %v3163
        %v3172 = vadd.f32 %v3133, %v3163
        %v3173 = vadd.f32 %v3134, %v3163
        %v3174 = vadd.f32 %v3135, %v3163
        %v3175 = vadd.f32 %v3136, %v3163
        %v3176 = vadd.f32 %v3137, %v3163
        %v3177 = vadd.f32 %v3138, %v3163
        %v3178 = vadd.f32 %v3139, %v3163
        %v3179 = vadd.f32 %v3140, %v3163
        %v3180 = vadd.f32 %v3141, %v3163
        %v3181 = vadd.f32 %v3142, %v3163
        %v3182 = vadd.f32 %v3143, %v3163
        %v3183 = vadd.f32 %v3144, %v3163
        %v3184 = vadd.f32 %v3145, %v3163
        %v3185 = vadd.f32 %v3146, %v3163
        %v3186 = vadd.f32 %v3147, %v3163
        %v3187 = vadd.f32 %v3148, %v3163
        %v3188 = vadd.f32 %v3149, %v3163
        %v3189 = vadd.f32 %v3150, %v3163
        %v3190 = vadd.f32 %v3151, %v3163
        %v3191 = vadd.f32 %v3152, %v3163
        %v3192 = vadd.f32 %v3153, %v3163
        %v3193 = vadd.f32 %v3154, %v3163
        %v3194 = vadd.f32 %v3155, %v3163
        %v3195 = vadd.f32 %v3156, %v3163
        %v3196 = vadd.f32 %v3157, %v3163
        %v3197 = vadd.f32 %v2910, %v3165
        %v3198 = vadd.f32 %v2911, %v3166
        %v3199 = vadd.f32 %v2912, %v3167
        %v3200 = vadd.f32 %v2913, %v3168
        %v3201 = vadd.f32 %v2914, %v3169
        %v3202 = vadd.f32 %v2915, %v3170
        %v3203 = vadd.f32 %v2916, %v3171
        %v3204 = vadd.f32 %v2917, %v3172
        %v3205 = vadd.f32 %v2918, %v3173
        %v3206 = vadd.f32 %v2919, %v3174
        %v3207 = vadd.f32 %v2920, %v3175
        %v3208 = vadd.f32 %v2921, %v3176
        %v3209 = vadd.f32 %v2922, %v3177
        %v3210 = vadd.f32 %v2923, %v3178
        %v3211 = vadd.f32 %v2924, %v3179
        %v3212 = vadd.f32 %v2925, %v3180
        %v3213 = vadd.f32 %v2926, %v3181
        %v3214 = vadd.f32 %v2927, %v3182
        %v3215 = vadd.f32 %v2928, %v3183
        %v3216 = vadd.f32 %v2929, %v3184
        %v3217 = vadd.f32 %v2930, %v3185
        %v3218 = vadd.f32 %v2931, %v3186
        %v3219 = vadd.f32 %v2932, %v3187
        %v3220 = vadd.f32 %v2933, %v3188
        %v3221 = vadd.f32 %v2934, %v3189
        %v3222 = vadd.f32 %v2935, %v3190
        %v3223 = vadd.f32 %v2936, %v3191
        %v3224 = vadd.f32 %v2937, %v3192
        %v3225 = vadd.f32 %v2938, %v3193
        %v3226 = vadd.f32 %v2939, %v3194
        %v3227 = vadd.f32 %v2940, %v3195
        %v3228 = vadd.f32 %v2941, %v3196
        %v3229 = vpack.c.bf16 %v3198, %v3197
        %v3230 = vpack.c.bf16 %v3200, %v3199
        %v3231 = vpack.c.bf16 %v3202, %v3201
        %v3232 = vpack.c.bf16 %v3204, %v3203
        %v3233 = vpack.c.bf16 %v3206, %v3205
        %v3234 = vpack.c.bf16 %v3208, %v3207
        %v3235 = vpack.c.bf16 %v3210, %v3209
        %v3236 = vpack.c.bf16 %v3212, %v3211
        %v3237 = vpack.c.bf16 %v3214, %v3213
        %v3238 = vpack.c.bf16 %v3216, %v3215
        %v3239 = vpack.c.bf16 %v3218, %v3217
        %v3240 = vpack.c.bf16 %v3220, %v3219
        %v3241 = vpack.c.bf16 %v3222, %v3221
        %v3242 = vpack.c.bf16 %v3224, %v3223
        %v3243 = vpack.c.bf16 %v3226, %v3225
        %v3244 = vpack.c.bf16 %v3228, %v3227
        %v3261 = vunpack.c.l.b16 %v3229
        %v3262 = vunpack.c.h.b16 %v3229
        %v3263 = vunpack.c.l.b16 %v3230
        %v3264 = vunpack.c.h.b16 %v3230
        %v3265 = vunpack.c.l.b16 %v3231
        %v3266 = vunpack.c.h.b16 %v3231
        %v3267 = vunpack.c.l.b16 %v3232
        %v3268 = vunpack.c.h.b16 %v3232
        %v3269 = vunpack.c.l.b16 %v3233
        %v3270 = vunpack.c.h.b16 %v3233
        %v3271 = vunpack.c.l.b16 %v3234
        %v3272 = vunpack.c.h.b16 %v3234
        %v3273 = vunpack.c.l.b16 %v3235
        %v3274 = vunpack.c.h.b16 %v3235
        %v3275 = vunpack.c.l.b16 %v3236
        %v3276 = vunpack.c.h.b16 %v3236
        %v3277 = vunpack.c.l.b16 %v3237
        %v3278 = vunpack.c.h.b16 %v3237
        %v3279 = vunpack.c.l.b16 %v3238
        %v3280 = vunpack.c.h.b16 %v3238
        %v3281 = vunpack.c.l.b16 %v3239
        %v3282 = vunpack.c.h.b16 %v3239
        %v3283 = vunpack.c.l.b16 %v3240
        %v3284 = vunpack.c.h.b16 %v3240
        %v3285 = vunpack.c.l.b16 %v3241
        %v3286 = vunpack.c.h.b16 %v3241
        %v3287 = vunpack.c.l.b16 %v3242
        %v3288 = vunpack.c.h.b16 %v3242
        %v3289 = vunpack.c.l.b16 %v3243
        %v3290 = vunpack.c.h.b16 %v3243
        %v3291 = vunpack.c.l.b16 %v3244
        %v3292 = vunpack.c.h.b16 %v3244
        %v3293 = vpack.c.b16 %v3261, %v3261
        %v3294 = vpack.c.b16 %v3262, %v3262
        %v3295 = vpack.c.b16 %v3263, %v3263
        %v3296 = vpack.c.b16 %v3264, %v3264
        %v3297 = vpack.c.b16 %v3265, %v3265
        %v3298 = vpack.c.b16 %v3266, %v3266
        %v3299 = vpack.c.b16 %v3267, %v3267
        %v3300 = vpack.c.b16 %v3268, %v3268
        %v3301 = vpack.c.b16 %v3269, %v3269
        %v3302 = vpack.c.b16 %v3270, %v3270
        %v3303 = vpack.c.b16 %v3271, %v3271
        %v3304 = vpack.c.b16 %v3272, %v3272
        %v3305 = vpack.c.b16 %v3273, %v3273
        %v3306 = vpack.c.b16 %v3274, %v3274
        %v3307 = vpack.c.b16 %v3275, %v3275
        %v3308 = vpack.c.b16 %v3276, %v3276
        %v3309 = vpack.c.b16 %v3277, %v3277
        %v3310 = vpack.c.b16 %v3278, %v3278
        %v3311 = vpack.c.b16 %v3279, %v3279
        %v3312 = vpack.c.b16 %v3280, %v3280
        %v3313 = vpack.c.b16 %v3281, %v3281
        %v3314 = vpack.c.b16 %v3282, %v3282
        %v3315 = vpack.c.b16 %v3283, %v3283
        %v3316 = vpack.c.b16 %v3284, %v3284
        %v3317 = vpack.c.b16 %v3285, %v3285
        %v3318 = vpack.c.b16 %v3286, %v3286
        %v3319 = vpack.c.b16 %v3287, %v3287
        %v3320 = vpack.c.b16 %v3288, %v3288
        %v3321 = vpack.c.b16 %v3289, %v3289
        %v3322 = vpack.c.b16 %v3290, %v3290
        %v3323 = vpack.c.b16 %v3291, %v3291
        %v3324 = vpack.c.b16 %v3292, %v3292
        %3357 = vst [vmem:[%s539] sm:$0xf] %v3293
        %3358 = vst [vmem:[%s539 + $0x4] sm:$0xf] %v3294
        %3359 = vst [vmem:[%s539 + $0x8] sm:$0xf] %v3295
        %3360 = vst [vmem:[%s539 + $0xc] sm:$0xf] %v3296
        %3361 = vst [vmem:[%s539 + $0x10] sm:$0xf] %v3297
        %3362 = vst [vmem:[%s539 + $0x14] sm:$0xf] %v3298
        %3363 = vst [vmem:[%s539 + $0x18] sm:$0xf] %v3299
        %3364 = vst [vmem:[%s539 + $0x1c] sm:$0xf] %v3300
        %3365 = vst [vmem:[%s539 + $0x20] sm:$0xf] %v3301
        %3366 = vst [vmem:[%s539 + $0x24] sm:$0xf] %v3302
        %3367 = vst [vmem:[%s539 + $0x28] sm:$0xf] %v3303
        %3368 = vst [vmem:[%s539 + $0x2c] sm:$0xf] %v3304
        %3369 = vst [vmem:[%s539 + $0x30] sm:$0xf] %v3305
        %3370 = vst [vmem:[%s539 + $0x34] sm:$0xf] %v3306
        %3371 = vst [vmem:[%s539 + $0x38] sm:$0xf] %v3307
        %3372 = vst [vmem:[%s539 + $0x3c] sm:$0xf] %v3308
        %3373 = vst [vmem:[%s539 + $0x40] sm:$0xf] %v3309
        %3374 = vst [vmem:[%s539 + $0x44] sm:$0xf] %v3310
        %3375 = vst [vmem:[%s539 + $0x48] sm:$0xf] %v3311
        %3376 = vst [vmem:[%s539 + $0x4c] sm:$0xf] %v3312
        %3377 = vst [vmem:[%s539 + $0x50] sm:$0xf] %v3313
        %3378 = vst [vmem:[%s539 + $0x54] sm:$0xf] %v3314
        %3379 = vst [vmem:[%s539 + $0x58] sm:$0xf] %v3315
        %3380 = vst [vmem:[%s539 + $0x5c] sm:$0xf] %v3316
        %3381 = vst [vmem:[%s539 + $0x60] sm:$0xf] %v3317
        %3382 = vst [vmem:[%s539 + $0x64] sm:$0xf] %v3318
        %3383 = vst [vmem:[%s539 + $0x68] sm:$0xf] %v3319
        %3384 = vst [vmem:[%s539 + $0x6c] sm:$0xf] %v3320
        %3385 = vst [vmem:[%s539 + $0x70] sm:$0xf] %v3321
        %3386 = vst [vmem:[%s539 + $0x74] sm:$0xf] %v3322
        %3387 = vst [vmem:[%s539 + $0x78] sm:$0xf] %v3323
        %3388 = vst [vmem:[%s539 + $0x7c] sm:$0xf] %v3324
        %s3389 = sand.u32 %s382, 1
        %s3390 = scalar_lea.sflag [#allocation6], %s3389
        %s3391 = sand.u32 %s382, 1
        %s3392 = smul.addr %s3391, 128
        %s3393 = scalar_lea.vmem [#allocation7], %s3392
        // Predicated region
        $region89: #{tpu_custom_call.1} parent=83 // pred_check
          %p3394 = pneg %p392
        $region90: #{tpu_custom_call.1} parent=83 // pred_check_branch
          %3396 = sbr.rel (%p3394) target = $region92
        $region91: #{tpu_custom_call.1} parent=83 // pred_region
          %s3398 = ssub.s32 2048, 2048
          %3399 = vsyncadd %s3390, %s3398
          %s3400 = smul.addr %s33, 32
          %s3401 = smul.addr %s3400, 64
          %s3402 = scalar_lea.hbm %s16, %s3401
          %s3403 = sshll.u32 %s3393, 4
          %s3404 = int_to_ptr.vmem [resolvable:$true] %s3403
          %3409 = dma.vmem_to_hbm [thread:$0]  %s3404, 2048, %s3402, %s3390, 64, 64, 4
        $region92: #{tpu_custom_call.1} parent=83 // pred_fallthru
          _
      $region84: #{tpu_custom_call.1} parent=5 // pred_fallthru
        _
      %p3410 = scmp.le.s32.totalorder 2, %s28
      // Predicated region
      $region93: #{tpu_custom_call.1} parent=5 // pred_check
        %p3411 = pneg %p3410
      $region94: #{tpu_custom_call.1} parent=5 // pred_check_branch
        %3413 = sbr.rel (%p3411) target = $region96
      $region95: #{tpu_custom_call.1} parent=5 // pred_region
        %s3414 = ssub.s32 %s28, 2
        // Predicated region
        $region97: #{tpu_custom_call.1} parent=95 // pred_check
          %p3415 = pneg %p398
        $region98: #{tpu_custom_call.1} parent=95 // pred_check_branch
          %3417 = sbr.rel (%p3415) target = $region100
        $region99: #{tpu_custom_call.1} parent=95 // pred_region
          %s3418 = sand.u32 %s383, 1
          %s3419 = scalar_lea.sflag [#allocation6], %s3418
          %s3420 = sand.u32 %s383, 1
          %s3421 = smul.addr %s3420, 128
          %s3422 = scalar_lea.vmem [#allocation7], %s3421
          %3423 = dma.done %s3419, 2048
        $region100: #{tpu_custom_call.1} parent=95 // pred_fallthru
          _
      $region96: #{tpu_custom_call.1} parent=5 // pred_fallthru
        _
    $region6: #{tpu_custom_call.1} parent=1 // loop_footer
      %s32 = sadd.s32 1, %s28
    $region7: #{tpu_custom_call.1} parent=1 // loop_footer_branch
      %27 = sbr.rel target = $region3
    $region8: #{tpu_custom_call.1} parent=1 // loop_exit
      _
    %3424 = vsyncpa [#allocation5], 1
    %s3425 = scalar_lea.sflag [#allocation5], 1
    %3426 = vsyncpa %s3425, 1
    %3427 = vsyncpa [#allocation6], 1
    %s3428 = scalar_lea.sflag [#allocation6], 1
    %3429 = vsyncpa %s3428, 1

</llo_original>
